<compile_context>
chip_gen: v5e
topology: v5e:2x2
jax: 0.10.0
libtpu: 0.0.40
codegen_flags: <defaults>
</compile_context>

<pallas_src>
import functools
import math

import jax
import jax.numpy as jnp
from jax.experimental import pallas as pl
from jax.experimental.pallas import tpu as pltpu

BERT_N_HEADS = 4
_EPS_BN = 1e-5
_EPS_LN = 1e-5

# dot_general dimension numbers: contract both last dims (a @ b.T), no batch.
_NT = (((1,), (1,)), ((), ()))


# ----------------------------- in-kernel math ------------------------------
def _erf(x):
    # Abramowitz & Stegun 7.1.26 (|err| < 1.5e-7) -- exp/mul/add only.
    p = 0.3275911
    a1, a2, a3, a4, a5 = (0.254829592, -0.284496736, 1.421413741,
                          -1.453152027, 1.061405429)
    sgn = jnp.where(x >= 0.0, 1.0, -1.0)
    ax = jnp.abs(x)
    t = 1.0 / (1.0 + p * ax)
    poly = ((((a5 * t + a4) * t + a3) * t + a2) * t + a1) * t
    return sgn * (1.0 - poly * jnp.exp(-ax * ax))


def _gelu(x):
    return x * 0.5 * (1.0 + _erf(x * (1.0 / math.sqrt(2.0))))


def _linear(x, p):
    # Weights stored pre-transposed (in, out): plain x @ w, no in-kernel .T.
    y = jnp.dot(x, p["w"], preferred_element_type=jnp.float32)
    return y + p["b"] if "b" in p else y


def _batchnorm(x, p):
    # Batch statistics over axis 0 (training-mode behaviour of a fresh module).
    mean = jnp.mean(x, axis=0, keepdims=True)
    var = jnp.mean((x - mean) ** 2, axis=0, keepdims=True)
    return (x - mean) * jax.lax.rsqrt(var + _EPS_BN) * p["g"] + p["b"]


def _layernorm(x, p):
    mean = jnp.mean(x, axis=-1, keepdims=True)
    var = jnp.mean((x - mean) ** 2, axis=-1, keepdims=True)
    return (x - mean) * jax.lax.rsqrt(var + _EPS_LN) * p["g"] + p["b"]


def _mha(x, p, sel_ref, n_heads):
    """Fused multi-head attention + (quirky) concat + fc projection."""
    n, hid = x.shape
    d_k = hid // n_heads
    kk = hid // n
    scale = 1.0 / math.sqrt(d_k)

    q = jnp.dot(x, p["wq"], preferred_element_type=jnp.float32)
    k = jnp.dot(x, p["wk"], preferred_element_type=jnp.float32)
    v = jnp.dot(x, p["wv"], preferred_element_type=jnp.float32)

    heads = []
    for hh in range(n_heads):                      # tiny static unroll (H=4)
        sl = slice(hh * d_k, (hh + 1) * d_k)
        s = jax.lax.dot_general(q[:, sl], k[:, sl], _NT,
                                preferred_element_type=jnp.float32) * scale
        s = s - jnp.max(s, axis=-1, keepdims=True)
        e = jnp.exp(s)
        pr = e * pl.reciprocal(jnp.sum(e, axis=-1, keepdims=True), approx=True)
        heads.append(jnp.dot(pr, v[:, sl], preferred_element_type=jnp.float32))

    # The PyTorch reference applies `scores.transpose(1, 2).reshape(-1, H*d_v)`
    # before the fc projection.  With Ostd = [head_0 | ... | head_{H-1}] of
    # shape (n, hid), that scrambled concat C satisfies
    #     C[r, c] = Ostd[c % n, r*kk + c // n]      (valid since hid % n == 0)
    # and therefore
    #     fc(C) = sum_i (Ostd @ S_i).T @ WfcT[i*n:(i+1)*n, :]
    # with host-precomputed S_i[c, r] = [c == r*kk + i].  This reproduces the
    # reference math exactly with no in-kernel reshape; the only transposes
    # are of tiny (n, n) matrices.
    wfc = p["wfc"]                                  # (hid, hid) == Wfc.T
    out = None
    for i in range(kk):
        g = None
        for hh in range(n_heads):
            s_blk = sel_ref[i, hh * d_k:(hh + 1) * d_k, :]            # (d_k, n)
            t = jnp.dot(heads[hh], s_blk, preferred_element_type=jnp.float32)
            g = t if g is None else g + t                             # (n, n)
        contrib = jnp.dot(g.T, wfc[i * n:(i + 1) * n, :],
                          preferred_element_type=jnp.float32)         # (n, hid)
        out = contrib if out is None else out + contrib
    return out


# ------------------------- fused forward (1 kernel) -------------------------
@jax.jit
def ae1_forward(x, params):
    n_heads = BERT_N_HEADS
    n, vec = x.shape
    hid = params["l1"]["w"].shape[1]
    dim = params["l2"]["w"].shape[1]
    assert hid % n_heads == 0
    # In-kernel folding of the reference's transpose(1,2).reshape head concat
    # into the fc matmul needs hid % batch == 0 (holds for the sizes used
    # here); other batch sizes would need the concat done between two kernels.
    assert hid % n == 0, "fused head-concat folding requires hid % batch == 0"
    kk = hid // n

    # Host-built 0/1 selection matrices: S[i, c, r] = [c == r*kk + i].
    c_idx = jnp.arange(hid, dtype=jnp.int32).reshape(1, hid, 1)
    r_idx = jnp.arange(n, dtype=jnp.int32).reshape(1, 1, n)
    i_idx = jnp.arange(kk, dtype=jnp.int32).reshape(kk, 1, 1)
    selmats = (c_idx == (r_idx * kk + i_idx)).astype(jnp.float32)  # (kk, hid, n)

    leaves, treedef = jax.tree_util.tree_flatten(params)
    n_leaves = len(leaves)

    def kernel(*refs):
        x_ref, sel_ref = refs[0], refs[1]
        param_refs = refs[2:2 + n_leaves]
        enc_out_ref, ae_out_ref = refs[2 + n_leaves], refs[3 + n_leaves]
        # Re-assemble the params pytree with loaded VMEM values as leaves.
        p = jax.tree_util.tree_unflatten(treedef, [pr[...] for pr in param_refs])

        h = _batchnorm(_gelu(_linear(x_ref[...], p["l1"])), p["bn1"])
        # TODO(synk): drop_out_rating is undefined in the reference source;
        # Dropout is applied as identity (inference semantics).
        for enc in p["enc"]:                       # 2 layers, static unroll
            attn = _mha(h, enc, sel_ref, n_heads)
            h = _layernorm(attn + h, enc["ln1"])
            ff = _linear(h, enc["l1"])
            h = _layernorm(ff + h, enc["ln2"])
        x_enc = _linear(h, p["l2"])
        h3 = _batchnorm(_gelu(_linear(x_enc, p["l3"])), p["bn3"])
        x_ae = _linear(h3, p["l4"])
        enc_out_ref[...] = x_enc
        ae_out_ref[...] = x_ae

    return pl.pallas_call(
        kernel,
        out_shape=(jax.ShapeDtypeStruct((n, dim), jnp.float32),
                   jax.ShapeDtypeStruct((n, vec), jnp.float32)),
        compiler_params=pltpu.CompilerParams(
            vmem_limit_bytes=32 * 1024 * 1024),
    )(x, selmats, *leaves)


# ---------------------------- parameter init --------------------------------
def _linear_params(key, in_f, out_f, bias=True):
    # PyTorch Linear init (U(-1/sqrt(in), 1/sqrt(in))), stored pre-transposed
    # as (in_features, out_features) so kernels compute x @ w directly.
    kw, kb = jax.random.split(key)
    bound = 1.0 / math.sqrt(in_f)
    w = jax.random.uniform(kw, (in_f, out_f), jnp.float32, -bound, bound)
    if not bias:
        return {"w": w}
    b = jax.random.uniform(kb, (1, out_f), jnp.float32, -bound, bound)
    return {"w": w, "b": b}


def init_ae1_params(key, vector_size, dim, n_heads=BERT_N_HEADS):
    hid = (vector_size + dim) // 2
    assert hid % n_heads == 0, "hidden dim must divide n_heads"
    keys = jax.random.split(key, 6)
    ones = lambda: {"g": jnp.ones((1, hid), jnp.float32),
                    "b": jnp.zeros((1, hid), jnp.float32)}
    params = {
        "l1": _linear_params(keys[0], vector_size, hid),
        "bn1": ones(),
        "l2": _linear_params(keys[1], hid, dim),
        "l3": _linear_params(keys[2], dim, hid),
        "bn3": ones(),
        "l4": _linear_params(keys[3], hid, vector_size),
        "enc": [],
    }
    for i in range(2):
        ek = jax.random.split(keys[4 + i], 5)
        params["enc"].append({
            "wq": _linear_params(ek[0], hid, hid, bias=False)["w"],
            "wk": _linear_params(ek[1], hid, hid, bias=False)["w"],
            "wv": _linear_params(ek[2], hid, hid, bias=False)["w"],
            "wfc": _linear_params(ek[3], hid, hid, bias=False)["w"],
            "ln1": ones(),
            "l1": _linear_params(ek[4], hid, hid),
            "ln2": ones(),
        })
    return params


# ---------------------------------- main -------------------------------------
if __name__ == "__main__":
    vector_size, dim, batch = 64, 32, 8     # hid = 48, d_k = 12, hid % batch == 0
    key = jax.random.PRNGKey(0)
    kx, kp = jax.random.split(key)
    x = jax.random.normal(kx, (batch, vector_size), jnp.float32)
    params = init_ae1_params(kp, vector_size, dim)

    x_enc, x_ae = ae1_forward(x, params)
    jax.block_until_ready((x_enc, x_ae))
    assert x_enc.shape == (batch, dim)
    assert x_ae.shape == (batch, vector_size)
    assert bool(jnp.all(jnp.isfinite(x_enc))) and bool(jnp.all(jnp.isfinite(x_ae)))
    print("KERNEL_OK")
</pallas_src>

<mosaic_0001>
module attributes {stable_mosaic.version = 11 : i64} {
  func.func @kernel(%arg0: memref<8x64xf32, #tpu.memory_space<vmem>>, %arg1: memref<6x48x8xf32, #tpu.memory_space<vmem>>, %arg2: memref<1x48xf32, #tpu.memory_space<vmem>>, %arg3: memref<1x48xf32, #tpu.memory_space<vmem>>, %arg4: memref<1x48xf32, #tpu.memory_space<vmem>>, %arg5: memref<1x48xf32, #tpu.memory_space<vmem>>, %arg6: memref<1x48xf32, #tpu.memory_space<vmem>>, %arg7: memref<48x48xf32, #tpu.memory_space<vmem>>, %arg8: memref<1x48xf32, #tpu.memory_space<vmem>>, %arg9: memref<1x48xf32, #tpu.memory_space<vmem>>, %arg10: memref<1x48xf32, #tpu.memory_space<vmem>>, %arg11: memref<1x48xf32, #tpu.memory_space<vmem>>, %arg12: memref<48x48xf32, #tpu.memory_space<vmem>>, %arg13: memref<48x48xf32, #tpu.memory_space<vmem>>, %arg14: memref<48x48xf32, #tpu.memory_space<vmem>>, %arg15: memref<48x48xf32, #tpu.memory_space<vmem>>, %arg16: memref<1x48xf32, #tpu.memory_space<vmem>>, %arg17: memref<48x48xf32, #tpu.memory_space<vmem>>, %arg18: memref<1x48xf32, #tpu.memory_space<vmem>>, %arg19: memref<1x48xf32, #tpu.memory_space<vmem>>, %arg20: memref<1x48xf32, #tpu.memory_space<vmem>>, %arg21: memref<1x48xf32, #tpu.memory_space<vmem>>, %arg22: memref<48x48xf32, #tpu.memory_space<vmem>>, %arg23: memref<48x48xf32, #tpu.memory_space<vmem>>, %arg24: memref<48x48xf32, #tpu.memory_space<vmem>>, %arg25: memref<48x48xf32, #tpu.memory_space<vmem>>, %arg26: memref<1x48xf32, #tpu.memory_space<vmem>>, %arg27: memref<64x48xf32, #tpu.memory_space<vmem>>, %arg28: memref<1x32xf32, #tpu.memory_space<vmem>>, %arg29: memref<48x32xf32, #tpu.memory_space<vmem>>, %arg30: memref<1x48xf32, #tpu.memory_space<vmem>>, %arg31: memref<32x48xf32, #tpu.memory_space<vmem>>, %arg32: memref<1x64xf32, #tpu.memory_space<vmem>>, %arg33: memref<48x64xf32, #tpu.memory_space<vmem>>, %arg34: memref<8x32xf32, #tpu.memory_space<vmem>>, %arg35: memref<8x64xf32, #tpu.memory_space<vmem>>) attributes {dimension_semantics = [], scalar_prefetch = 0 : i64, scratch_operands = 0 : i64, tpu.core_type = #tpu.core_type<tc>} {
    %c0 = arith.constant 0 : index
    %c0_0 = arith.constant 0 : index
    %0 = vector.load %arg2[%c0, %c0_0] : memref<1x48xf32, #tpu.memory_space<vmem>>, vector<1x48xf32>
    %c0_1 = arith.constant 0 : index
    %c0_2 = arith.constant 0 : index
    %1 = vector.load %arg3[%c0_1, %c0_2] : memref<1x48xf32, #tpu.memory_space<vmem>>, vector<1x48xf32>
    %c0_3 = arith.constant 0 : index
    %c0_4 = arith.constant 0 : index
    %2 = vector.load %arg4[%c0_3, %c0_4] : memref<1x48xf32, #tpu.memory_space<vmem>>, vector<1x48xf32>
    %c0_5 = arith.constant 0 : index
    %c0_6 = arith.constant 0 : index
    %3 = vector.load %arg5[%c0_5, %c0_6] : memref<1x48xf32, #tpu.memory_space<vmem>>, vector<1x48xf32>
    %c0_7 = arith.constant 0 : index
    %c0_8 = arith.constant 0 : index
    %4 = vector.load %arg6[%c0_7, %c0_8] : memref<1x48xf32, #tpu.memory_space<vmem>>, vector<1x48xf32>
    %c0_9 = arith.constant 0 : index
    %c0_10 = arith.constant 0 : index
    %5 = vector.load %arg7[%c0_9, %c0_10] : memref<48x48xf32, #tpu.memory_space<vmem>>, vector<48x48xf32>
    %c0_11 = arith.constant 0 : index
    %c0_12 = arith.constant 0 : index
    %6 = vector.load %arg8[%c0_11, %c0_12] : memref<1x48xf32, #tpu.memory_space<vmem>>, vector<1x48xf32>
    %c0_13 = arith.constant 0 : index
    %c0_14 = arith.constant 0 : index
    %7 = vector.load %arg9[%c0_13, %c0_14] : memref<1x48xf32, #tpu.memory_space<vmem>>, vector<1x48xf32>
    %c0_15 = arith.constant 0 : index
    %c0_16 = arith.constant 0 : index
    %8 = vector.load %arg10[%c0_15, %c0_16] : memref<1x48xf32, #tpu.memory_space<vmem>>, vector<1x48xf32>
    %c0_17 = arith.constant 0 : index
    %c0_18 = arith.constant 0 : index
    %9 = vector.load %arg11[%c0_17, %c0_18] : memref<1x48xf32, #tpu.memory_space<vmem>>, vector<1x48xf32>
    %c0_19 = arith.constant 0 : index
    %c0_20 = arith.constant 0 : index
    %10 = vector.load %arg12[%c0_19, %c0_20] : memref<48x48xf32, #tpu.memory_space<vmem>>, vector<48x48xf32>
    %c0_21 = arith.constant 0 : index
    %c0_22 = arith.constant 0 : index
    %11 = vector.load %arg13[%c0_21, %c0_22] : memref<48x48xf32, #tpu.memory_space<vmem>>, vector<48x48xf32>
    %c0_23 = arith.constant 0 : index
    %c0_24 = arith.constant 0 : index
    %12 = vector.load %arg14[%c0_23, %c0_24] : memref<48x48xf32, #tpu.memory_space<vmem>>, vector<48x48xf32>
    %c0_25 = arith.constant 0 : index
    %c0_26 = arith.constant 0 : index
    %13 = vector.load %arg15[%c0_25, %c0_26] : memref<48x48xf32, #tpu.memory_space<vmem>>, vector<48x48xf32>
    %c0_27 = arith.constant 0 : index
    %c0_28 = arith.constant 0 : index
    %14 = vector.load %arg16[%c0_27, %c0_28] : memref<1x48xf32, #tpu.memory_space<vmem>>, vector<1x48xf32>
    %c0_29 = arith.constant 0 : index
    %c0_30 = arith.constant 0 : index
    %15 = vector.load %arg17[%c0_29, %c0_30] : memref<48x48xf32, #tpu.memory_space<vmem>>, vector<48x48xf32>
    %c0_31 = arith.constant 0 : index
    %c0_32 = arith.constant 0 : index
    %16 = vector.load %arg18[%c0_31, %c0_32] : memref<1x48xf32, #tpu.memory_space<vmem>>, vector<1x48xf32>
    %c0_33 = arith.constant 0 : index
    %c0_34 = arith.constant 0 : index
    %17 = vector.load %arg19[%c0_33, %c0_34] : memref<1x48xf32, #tpu.memory_space<vmem>>, vector<1x48xf32>
    %c0_35 = arith.constant 0 : index
    %c0_36 = arith.constant 0 : index
    %18 = vector.load %arg20[%c0_35, %c0_36] : memref<1x48xf32, #tpu.memory_space<vmem>>, vector<1x48xf32>
    %c0_37 = arith.constant 0 : index
    %c0_38 = arith.constant 0 : index
    %19 = vector.load %arg21[%c0_37, %c0_38] : memref<1x48xf32, #tpu.memory_space<vmem>>, vector<1x48xf32>
    %c0_39 = arith.constant 0 : index
    %c0_40 = arith.constant 0 : index
    %20 = vector.load %arg22[%c0_39, %c0_40] : memref<48x48xf32, #tpu.memory_space<vmem>>, vector<48x48xf32>
    %c0_41 = arith.constant 0 : index
    %c0_42 = arith.constant 0 : index
    %21 = vector.load %arg23[%c0_41, %c0_42] : memref<48x48xf32, #tpu.memory_space<vmem>>, vector<48x48xf32>
    %c0_43 = arith.constant 0 : index
    %c0_44 = arith.constant 0 : index
    %22 = vector.load %arg24[%c0_43, %c0_44] : memref<48x48xf32, #tpu.memory_space<vmem>>, vector<48x48xf32>
    %c0_45 = arith.constant 0 : index
    %c0_46 = arith.constant 0 : index
    %23 = vector.load %arg25[%c0_45, %c0_46] : memref<48x48xf32, #tpu.memory_space<vmem>>, vector<48x48xf32>
    %c0_47 = arith.constant 0 : index
    %c0_48 = arith.constant 0 : index
    %24 = vector.load %arg26[%c0_47, %c0_48] : memref<1x48xf32, #tpu.memory_space<vmem>>, vector<1x48xf32>
    %c0_49 = arith.constant 0 : index
    %c0_50 = arith.constant 0 : index
    %25 = vector.load %arg27[%c0_49, %c0_50] : memref<64x48xf32, #tpu.memory_space<vmem>>, vector<64x48xf32>
    %c0_51 = arith.constant 0 : index
    %c0_52 = arith.constant 0 : index
    %26 = vector.load %arg28[%c0_51, %c0_52] : memref<1x32xf32, #tpu.memory_space<vmem>>, vector<1x32xf32>
    %c0_53 = arith.constant 0 : index
    %c0_54 = arith.constant 0 : index
    %27 = vector.load %arg29[%c0_53, %c0_54] : memref<48x32xf32, #tpu.memory_space<vmem>>, vector<48x32xf32>
    %c0_55 = arith.constant 0 : index
    %c0_56 = arith.constant 0 : index
    %28 = vector.load %arg30[%c0_55, %c0_56] : memref<1x48xf32, #tpu.memory_space<vmem>>, vector<1x48xf32>
    %c0_57 = arith.constant 0 : index
    %c0_58 = arith.constant 0 : index
    %29 = vector.load %arg31[%c0_57, %c0_58] : memref<32x48xf32, #tpu.memory_space<vmem>>, vector<32x48xf32>
    %c0_59 = arith.constant 0 : index
    %c0_60 = arith.constant 0 : index
    %30 = vector.load %arg32[%c0_59, %c0_60] : memref<1x64xf32, #tpu.memory_space<vmem>>, vector<1x64xf32>
    %c0_61 = arith.constant 0 : index
    %c0_62 = arith.constant 0 : index
    %31 = vector.load %arg33[%c0_61, %c0_62] : memref<48x64xf32, #tpu.memory_space<vmem>>, vector<48x64xf32>
    %c0_63 = arith.constant 0 : index
    %c0_64 = arith.constant 0 : index
    %32 = vector.load %arg0[%c0_63, %c0_64] : memref<8x64xf32, #tpu.memory_space<vmem>>, vector<8x64xf32>
    %cst = arith.constant dense<0.000000e+00> : vector<8x48xf32>
    %33 = tpu.matmul %32, %25, %cst {dimension_numbers = #tpu.dot_dimension_numbers<[1], [0], [0], [1], [0, 0, 1, 1], [], []>} : vector<8x64xf32>, vector<64x48xf32>, vector<8x48xf32> -> vector<8x48xf32>
    %34 = vector.broadcast %24 : vector<1x48xf32> to vector<8x48xf32>
    %35 = arith.addf %33, %34 : vector<8x48xf32>
    %cst_65 = arith.constant 5.000000e-01 : f32
    %36 = vector.broadcast %cst_65 : f32 to vector<8x48xf32>
    %37 = arith.mulf %35, %36 : vector<8x48xf32>
    %cst_66 = arith.constant 0.707106769 : f32
    %38 = vector.broadcast %cst_66 : f32 to vector<8x48xf32>
    %39 = arith.mulf %35, %38 : vector<8x48xf32>
    %cst_67 = arith.constant 0.000000e+00 : f32
    %40 = vector.broadcast %cst_67 : f32 to vector<8x48xf32>
    %41 = arith.cmpf oge, %39, %40 : vector<8x48xf32>
    %cst_68 = arith.constant 1.000000e+00 : f32
    %cst_69 = arith.constant -1.000000e+00 : f32
    %42 = vector.broadcast %cst_68 : f32 to vector<8x48xf32>
    %43 = vector.broadcast %cst_69 : f32 to vector<8x48xf32>
    %44 = arith.select %41, %42, %43 : vector<8x48xi1>, vector<8x48xf32>
    %45 = math.absf %39 : vector<8x48xf32>
    %cst_70 = arith.constant 0.327591091 : f32
    %46 = vector.broadcast %cst_70 : f32 to vector<8x48xf32>
    %47 = arith.mulf %46, %45 : vector<8x48xf32>
    %cst_71 = arith.constant 1.000000e+00 : f32
    %48 = vector.broadcast %cst_71 : f32 to vector<8x48xf32>
    %49 = arith.addf %48, %47 : vector<8x48xf32>
    %cst_72 = arith.constant 1.000000e+00 : f32
    %50 = vector.broadcast %cst_72 : f32 to vector<8x48xf32>
    %51 = arith.divf %50, %49 : vector<8x48xf32>
    %cst_73 = arith.constant 1.06140542 : f32
    %52 = vector.broadcast %cst_73 : f32 to vector<8x48xf32>
    %53 = arith.mulf %52, %51 : vector<8x48xf32>
    %cst_74 = arith.constant -1.45315206 : f32
    %54 = vector.broadcast %cst_74 : f32 to vector<8x48xf32>
    %55 = arith.addf %53, %54 : vector<8x48xf32>
    %56 = arith.mulf %55, %51 : vector<8x48xf32>
    %cst_75 = arith.constant 1.42141378 : f32
    %57 = vector.broadcast %cst_75 : f32 to vector<8x48xf32>
    %58 = arith.addf %56, %57 : vector<8x48xf32>
    %59 = arith.mulf %58, %51 : vector<8x48xf32>
    %cst_76 = arith.constant -0.284496725 : f32
    %60 = vector.broadcast %cst_76 : f32 to vector<8x48xf32>
    %61 = arith.addf %59, %60 : vector<8x48xf32>
    %62 = arith.mulf %61, %51 : vector<8x48xf32>
    %cst_77 = arith.constant 0.254829586 : f32
    %63 = vector.broadcast %cst_77 : f32 to vector<8x48xf32>
    %64 = arith.addf %62, %63 : vector<8x48xf32>
    %65 = arith.mulf %64, %51 : vector<8x48xf32>
    %cst_78 = arith.constant 0.000000e+00 : f32
    %66 = vector.broadcast %cst_78 : f32 to vector<8x48xf32>
    %67 = arith.subf %66, %45 : vector<8x48xf32>
    %68 = arith.mulf %67, %45 : vector<8x48xf32>
    %69 = math.exp %68 : vector<8x48xf32>
    %70 = arith.mulf %65, %69 : vector<8x48xf32>
    %cst_79 = arith.constant 1.000000e+00 : f32
    %71 = vector.broadcast %cst_79 : f32 to vector<8x48xf32>
    %72 = arith.subf %71, %70 : vector<8x48xf32>
    %73 = arith.mulf %44, %72 : vector<8x48xf32>
    %cst_80 = arith.constant 1.000000e+00 : f32
    %74 = vector.broadcast %cst_80 : f32 to vector<8x48xf32>
    %75 = arith.addf %74, %73 : vector<8x48xf32>
    %76 = arith.mulf %37, %75 : vector<8x48xf32>
    %cst_81 = arith.constant dense<0.000000e+00> : vector<48xf32>
    %77 = vector.multi_reduction <add>, %76, %cst_81 [0] : vector<8x48xf32> to vector<48xf32>
    %78 = vector.shape_cast %77 : vector<48xf32> to vector<1x48xf32>
    %cst_82 = arith.constant 8.000000e+00 : f32
    %79 = vector.broadcast %cst_82 : f32 to vector<1x48xf32>
    %80 = arith.divf %78, %79 : vector<1x48xf32>
    %81 = vector.broadcast %80 : vector<1x48xf32> to vector<8x48xf32>
    %82 = arith.subf %76, %81 : vector<8x48xf32>
    %83 = arith.mulf %82, %82 : vector<8x48xf32>
    %cst_83 = arith.constant dense<0.000000e+00> : vector<48xf32>
    %84 = vector.multi_reduction <add>, %83, %cst_83 [0] : vector<8x48xf32> to vector<48xf32>
    %85 = vector.shape_cast %84 : vector<48xf32> to vector<1x48xf32>
    %cst_84 = arith.constant 8.000000e+00 : f32
    %86 = vector.broadcast %cst_84 : f32 to vector<1x48xf32>
    %87 = arith.divf %85, %86 : vector<1x48xf32>
    %88 = vector.broadcast %80 : vector<1x48xf32> to vector<8x48xf32>
    %89 = arith.subf %76, %88 : vector<8x48xf32>
    %cst_85 = arith.constant 9.99999974E-6 : f32
    %90 = vector.broadcast %cst_85 : f32 to vector<1x48xf32>
    %91 = arith.addf %87, %90 : vector<1x48xf32>
    %92 = math.rsqrt %91 : vector<1x48xf32>
    %93 = vector.broadcast %92 : vector<1x48xf32> to vector<8x48xf32>
    %94 = arith.mulf %89, %93 : vector<8x48xf32>
    %95 = vector.broadcast %1 : vector<1x48xf32> to vector<8x48xf32>
    %96 = arith.mulf %94, %95 : vector<8x48xf32>
    %97 = vector.broadcast %0 : vector<1x48xf32> to vector<8x48xf32>
    %98 = arith.addf %96, %97 : vector<8x48xf32>
    %cst_86 = arith.constant dense<0.000000e+00> : vector<8x48xf32>
    %99 = tpu.matmul %98, %12, %cst_86 {dimension_numbers = #tpu.dot_dimension_numbers<[1], [0], [0], [1], [0, 0, 1, 1], [], []>} : vector<8x48xf32>, vector<48x48xf32>, vector<8x48xf32> -> vector<8x48xf32>
    %cst_87 = arith.constant dense<0.000000e+00> : vector<8x48xf32>
    %100 = tpu.matmul %98, %11, %cst_87 {dimension_numbers = #tpu.dot_dimension_numbers<[1], [0], [0], [1], [0, 0, 1, 1], [], []>} : vector<8x48xf32>, vector<48x48xf32>, vector<8x48xf32> -> vector<8x48xf32>
    %cst_88 = arith.constant dense<0.000000e+00> : vector<8x48xf32>
    %101 = tpu.matmul %98, %13, %cst_88 {dimension_numbers = #tpu.dot_dimension_numbers<[1], [0], [0], [1], [0, 0, 1, 1], [], []>} : vector<8x48xf32>, vector<48x48xf32>, vector<8x48xf32> -> vector<8x48xf32>
    %102 = vector.extract_strided_slice %99 {offsets = [0, 0], sizes = [8, 12], strides = [1, 1]} : vector<8x48xf32> to vector<8x12xf32>
    %103 = vector.extract_strided_slice %100 {offsets = [0, 0], sizes = [8, 12], strides = [1, 1]} : vector<8x48xf32> to vector<8x12xf32>
    %cst_89 = arith.constant dense<0.000000e+00> : vector<8x8xf32>
    %104 = tpu.matmul %102, %103, %cst_89 {dimension_numbers = #tpu.dot_dimension_numbers<[1], [1], [0], [0], [0, 0, 1, 0], [], []>} : vector<8x12xf32>, vector<8x12xf32>, vector<8x8xf32> -> vector<8x8xf32>
    %cst_90 = arith.constant 0.288675129 : f32
    %105 = vector.broadcast %cst_90 : f32 to vector<8x8xf32>
    %106 = arith.mulf %104, %105 : vector<8x8xf32>
    %cst_91 = arith.constant dense<0xFF800000> : vector<8xf32>
    %107 = vector.multi_reduction <maximumf>, %106, %cst_91 [1] : vector<8x8xf32> to vector<8xf32>
    %108 = vector.shape_cast %107 : vector<8xf32> to vector<8x1xf32>
    %109 = vector.broadcast %108 : vector<8x1xf32> to vector<8x8xf32>
    %110 = arith.subf %106, %109 : vector<8x8xf32>
    %111 = math.exp %110 : vector<8x8xf32>
    %cst_92 = arith.constant dense<0.000000e+00> : vector<8xf32>
    %112 = vector.multi_reduction <add>, %111, %cst_92 [1] : vector<8x8xf32> to vector<8xf32>
    %113 = vector.shape_cast %112 : vector<8xf32> to vector<8x1xf32>
    %114 = tpu.reciprocal %113 {approx = true} : vector<8x1xf32> -> vector<8x1xf32>
    %115 = vector.broadcast %114 : vector<8x1xf32> to vector<8x8xf32>
    %116 = arith.mulf %111, %115 : vector<8x8xf32>
    %117 = vector.extract_strided_slice %101 {offsets = [0, 0], sizes = [8, 12], strides = [1, 1]} : vector<8x48xf32> to vector<8x12xf32>
    %cst_93 = arith.constant dense<0.000000e+00> : vector<8x12xf32>
    %118 = tpu.matmul %116, %117, %cst_93 {dimension_numbers = #tpu.dot_dimension_numbers<[1], [0], [0], [1], [0, 0, 1, 1], [], []>} : vector<8x8xf32>, vector<8x12xf32>, vector<8x12xf32> -> vector<8x12xf32>
    %119 = vector.extract_strided_slice %99 {offsets = [0, 12], sizes = [8, 12], strides = [1, 1]} : vector<8x48xf32> to vector<8x12xf32>
    %120 = vector.extract_strided_slice %100 {offsets = [0, 12], sizes = [8, 12], strides = [1, 1]} : vector<8x48xf32> to vector<8x12xf32>
    %cst_94 = arith.constant dense<0.000000e+00> : vector<8x8xf32>
    %121 = tpu.matmul %119, %120, %cst_94 {dimension_numbers = #tpu.dot_dimension_numbers<[1], [1], [0], [0], [0, 0, 1, 0], [], []>} : vector<8x12xf32>, vector<8x12xf32>, vector<8x8xf32> -> vector<8x8xf32>
    %cst_95 = arith.constant 0.288675129 : f32
    %122 = vector.broadcast %cst_95 : f32 to vector<8x8xf32>
    %123 = arith.mulf %121, %122 : vector<8x8xf32>
    %cst_96 = arith.constant dense<0xFF800000> : vector<8xf32>
    %124 = vector.multi_reduction <maximumf>, %123, %cst_96 [1] : vector<8x8xf32> to vector<8xf32>
    %125 = vector.shape_cast %124 : vector<8xf32> to vector<8x1xf32>
    %126 = vector.broadcast %125 : vector<8x1xf32> to vector<8x8xf32>
    %127 = arith.subf %123, %126 : vector<8x8xf32>
    %128 = math.exp %127 : vector<8x8xf32>
    %cst_97 = arith.constant dense<0.000000e+00> : vector<8xf32>
    %129 = vector.multi_reduction <add>, %128, %cst_97 [1] : vector<8x8xf32> to vector<8xf32>
    %130 = vector.shape_cast %129 : vector<8xf32> to vector<8x1xf32>
    %131 = tpu.reciprocal %130 {approx = true} : vector<8x1xf32> -> vector<8x1xf32>
    %132 = vector.broadcast %131 : vector<8x1xf32> to vector<8x8xf32>
    %133 = arith.mulf %128, %132 : vector<8x8xf32>
    %134 = vector.extract_strided_slice %101 {offsets = [0, 12], sizes = [8, 12], strides = [1, 1]} : vector<8x48xf32> to vector<8x12xf32>
    %cst_98 = arith.constant dense<0.000000e+00> : vector<8x12xf32>
    %135 = tpu.matmul %133, %134, %cst_98 {dimension_numbers = #tpu.dot_dimension_numbers<[1], [0], [0], [1], [0, 0, 1, 1], [], []>} : vector<8x8xf32>, vector<8x12xf32>, vector<8x12xf32> -> vector<8x12xf32>
    %136 = vector.extract_strided_slice %99 {offsets = [0, 24], sizes = [8, 12], strides = [1, 1]} : vector<8x48xf32> to vector<8x12xf32>
    %137 = vector.extract_strided_slice %100 {offsets = [0, 24], sizes = [8, 12], strides = [1, 1]} : vector<8x48xf32> to vector<8x12xf32>
    %cst_99 = arith.constant dense<0.000000e+00> : vector<8x8xf32>
    %138 = tpu.matmul %136, %137, %cst_99 {dimension_numbers = #tpu.dot_dimension_numbers<[1], [1], [0], [0], [0, 0, 1, 0], [], []>} : vector<8x12xf32>, vector<8x12xf32>, vector<8x8xf32> -> vector<8x8xf32>
    %cst_100 = arith.constant 0.288675129 : f32
    %139 = vector.broadcast %cst_100 : f32 to vector<8x8xf32>
    %140 = arith.mulf %138, %139 : vector<8x8xf32>
    %cst_101 = arith.constant dense<0xFF800000> : vector<8xf32>
    %141 = vector.multi_reduction <maximumf>, %140, %cst_101 [1] : vector<8x8xf32> to vector<8xf32>
    %142 = vector.shape_cast %141 : vector<8xf32> to vector<8x1xf32>
    %143 = vector.broadcast %142 : vector<8x1xf32> to vector<8x8xf32>
    %144 = arith.subf %140, %143 : vector<8x8xf32>
    %145 = math.exp %144 : vector<8x8xf32>
    %cst_102 = arith.constant dense<0.000000e+00> : vector<8xf32>
    %146 = vector.multi_reduction <add>, %145, %cst_102 [1] : vector<8x8xf32> to vector<8xf32>
    %147 = vector.shape_cast %146 : vector<8xf32> to vector<8x1xf32>
    %148 = tpu.reciprocal %147 {approx = true} : vector<8x1xf32> -> vector<8x1xf32>
    %149 = vector.broadcast %148 : vector<8x1xf32> to vector<8x8xf32>
    %150 = arith.mulf %145, %149 : vector<8x8xf32>
    %151 = vector.extract_strided_slice %101 {offsets = [0, 24], sizes = [8, 12], strides = [1, 1]} : vector<8x48xf32> to vector<8x12xf32>
    %cst_103 = arith.constant dense<0.000000e+00> : vector<8x12xf32>
    %152 = tpu.matmul %150, %151, %cst_103 {dimension_numbers = #tpu.dot_dimension_numbers<[1], [0], [0], [1], [0, 0, 1, 1], [], []>} : vector<8x8xf32>, vector<8x12xf32>, vector<8x12xf32> -> vector<8x12xf32>
    %153 = vector.extract_strided_slice %99 {offsets = [0, 36], sizes = [8, 12], strides = [1, 1]} : vector<8x48xf32> to vector<8x12xf32>
    %154 = vector.extract_strided_slice %100 {offsets = [0, 36], sizes = [8, 12], strides = [1, 1]} : vector<8x48xf32> to vector<8x12xf32>
    %cst_104 = arith.constant dense<0.000000e+00> : vector<8x8xf32>
    %155 = tpu.matmul %153, %154, %cst_104 {dimension_numbers = #tpu.dot_dimension_numbers<[1], [1], [0], [0], [0, 0, 1, 0], [], []>} : vector<8x12xf32>, vector<8x12xf32>, vector<8x8xf32> -> vector<8x8xf32>
    %cst_105 = arith.constant 0.288675129 : f32
    %156 = vector.broadcast %cst_105 : f32 to vector<8x8xf32>
    %157 = arith.mulf %155, %156 : vector<8x8xf32>
    %cst_106 = arith.constant dense<0xFF800000> : vector<8xf32>
    %158 = vector.multi_reduction <maximumf>, %157, %cst_106 [1] : vector<8x8xf32> to vector<8xf32>
    %159 = vector.shape_cast %158 : vector<8xf32> to vector<8x1xf32>
    %160 = vector.broadcast %159 : vector<8x1xf32> to vector<8x8xf32>
    %161 = arith.subf %157, %160 : vector<8x8xf32>
    %162 = math.exp %161 : vector<8x8xf32>
    %cst_107 = arith.constant dense<0.000000e+00> : vector<8xf32>
    %163 = vector.multi_reduction <add>, %162, %cst_107 [1] : vector<8x8xf32> to vector<8xf32>
    %164 = vector.shape_cast %163 : vector<8xf32> to vector<8x1xf32>
    %165 = tpu.reciprocal %164 {approx = true} : vector<8x1xf32> -> vector<8x1xf32>
    %166 = vector.broadcast %165 : vector<8x1xf32> to vector<8x8xf32>
    %167 = arith.mulf %162, %166 : vector<8x8xf32>
    %168 = vector.extract_strided_slice %101 {offsets = [0, 36], sizes = [8, 12], strides = [1, 1]} : vector<8x48xf32> to vector<8x12xf32>
    %cst_108 = arith.constant dense<0.000000e+00> : vector<8x12xf32>
    %169 = tpu.matmul %167, %168, %cst_108 {dimension_numbers = #tpu.dot_dimension_numbers<[1], [0], [0], [1], [0, 0, 1, 1], [], []>} : vector<8x8xf32>, vector<8x12xf32>, vector<8x12xf32> -> vector<8x12xf32>
    %c0_109 = arith.constant 0 : index
    %c0_110 = arith.constant 0 : index
    %c0_111 = arith.constant 0 : index
    %170 = vector.load %arg1[%c0_109, %c0_110, %c0_111] : memref<6x48x8xf32, #tpu.memory_space<vmem>>, vector<1x12x8xf32>
    %171 = vector.shape_cast %170 : vector<1x12x8xf32> to vector<12x8xf32>
    %cst_112 = arith.constant dense<0.000000e+00> : vector<8x8xf32>
    %172 = tpu.matmul %118, %171, %cst_112 {dimension_numbers = #tpu.dot_dimension_numbers<[1], [0], [0], [1], [0, 0, 1, 1], [], []>} : vector<8x12xf32>, vector<12x8xf32>, vector<8x8xf32> -> vector<8x8xf32>
    %c0_113 = arith.constant 0 : index
    %c12 = arith.constant 12 : index
    %c0_114 = arith.constant 0 : index
    %173 = vector.load %arg1[%c0_113, %c12, %c0_114] : memref<6x48x8xf32, #tpu.memory_space<vmem>>, vector<1x12x8xf32>
    %174 = vector.shape_cast %173 : vector<1x12x8xf32> to vector<12x8xf32>
    %cst_115 = arith.constant dense<0.000000e+00> : vector<8x8xf32>
    %175 = tpu.matmul %135, %174, %cst_115 {dimension_numbers = #tpu.dot_dimension_numbers<[1], [0], [0], [1], [0, 0, 1, 1], [], []>} : vector<8x12xf32>, vector<12x8xf32>, vector<8x8xf32> -> vector<8x8xf32>
    %176 = arith.addf %172, %175 : vector<8x8xf32>
    %c0_116 = arith.constant 0 : index
    %c24 = arith.constant 24 : index
    %c0_117 = arith.constant 0 : index
    %177 = vector.load %arg1[%c0_116, %c24, %c0_117] : memref<6x48x8xf32, #tpu.memory_space<vmem>>, vector<1x12x8xf32>
    %178 = vector.shape_cast %177 : vector<1x12x8xf32> to vector<12x8xf32>
    %cst_118 = arith.constant dense<0.000000e+00> : vector<8x8xf32>
    %179 = tpu.matmul %152, %178, %cst_118 {dimension_numbers = #tpu.dot_dimension_numbers<[1], [0], [0], [1], [0, 0, 1, 1], [], []>} : vector<8x12xf32>, vector<12x8xf32>, vector<8x8xf32> -> vector<8x8xf32>
    %180 = arith.addf %176, %179 : vector<8x8xf32>
    %c0_119 = arith.constant 0 : index
    %c36 = arith.constant 36 : index
    %c0_120 = arith.constant 0 : index
    %181 = vector.load %arg1[%c0_119, %c36, %c0_120] : memref<6x48x8xf32, #tpu.memory_space<vmem>>, vector<1x12x8xf32>
    %182 = vector.shape_cast %181 : vector<1x12x8xf32> to vector<12x8xf32>
    %cst_121 = arith.constant dense<0.000000e+00> : vector<8x8xf32>
    %183 = tpu.matmul %169, %182, %cst_121 {dimension_numbers = #tpu.dot_dimension_numbers<[1], [0], [0], [1], [0, 0, 1, 1], [], []>} : vector<8x12xf32>, vector<12x8xf32>, vector<8x8xf32> -> vector<8x8xf32>
    %184 = arith.addf %180, %183 : vector<8x8xf32>
    %185 = tpu.transpose %184, [1, 0] : vector<8x8xf32> -> vector<8x8xf32>
    %186 = vector.extract_strided_slice %10 {offsets = [0, 0], sizes = [8, 48], strides = [1, 1]} : vector<48x48xf32> to vector<8x48xf32>
    %cst_122 = arith.constant dense<0.000000e+00> : vector<8x48xf32>
    %187 = tpu.matmul %185, %186, %cst_122 {dimension_numbers = #tpu.dot_dimension_numbers<[1], [0], [0], [1], [0, 0, 1, 1], [], []>} : vector<8x8xf32>, vector<8x48xf32>, vector<8x48xf32> -> vector<8x48xf32>
    %c1 = arith.constant 1 : index
    %c0_123 = arith.constant 0 : index
    %c0_124 = arith.constant 0 : index
    %188 = vector.load %arg1[%c1, %c0_123, %c0_124] : memref<6x48x8xf32, #tpu.memory_space<vmem>>, vector<1x12x8xf32>
    %189 = vector.shape_cast %188 : vector<1x12x8xf32> to vector<12x8xf32>
    %cst_125 = arith.constant dense<0.000000e+00> : vector<8x8xf32>
    %190 = tpu.matmul %118, %189, %cst_125 {dimension_numbers = #tpu.dot_dimension_numbers<[1], [0], [0], [1], [0, 0, 1, 1], [], []>} : vector<8x12xf32>, vector<12x8xf32>, vector<8x8xf32> -> vector<8x8xf32>
    %c1_126 = arith.constant 1 : index
    %c12_127 = arith.constant 12 : index
    %c0_128 = arith.constant 0 : index
    %191 = vector.load %arg1[%c1_126, %c12_127, %c0_128] : memref<6x48x8xf32, #tpu.memory_space<vmem>>, vector<1x12x8xf32>
    %192 = vector.shape_cast %191 : vector<1x12x8xf32> to vector<12x8xf32>
    %cst_129 = arith.constant dense<0.000000e+00> : vector<8x8xf32>
    %193 = tpu.matmul %135, %192, %cst_129 {dimension_numbers = #tpu.dot_dimension_numbers<[1], [0], [0], [1], [0, 0, 1, 1], [], []>} : vector<8x12xf32>, vector<12x8xf32>, vector<8x8xf32> -> vector<8x8xf32>
    %194 = arith.addf %190, %193 : vector<8x8xf32>
    %c1_130 = arith.constant 1 : index
    %c24_131 = arith.constant 24 : index
    %c0_132 = arith.constant 0 : index
    %195 = vector.load %arg1[%c1_130, %c24_131, %c0_132] : memref<6x48x8xf32, #tpu.memory_space<vmem>>, vector<1x12x8xf32>
    %196 = vector.shape_cast %195 : vector<1x12x8xf32> to vector<12x8xf32>
    %cst_133 = arith.constant dense<0.000000e+00> : vector<8x8xf32>
    %197 = tpu.matmul %152, %196, %cst_133 {dimension_numbers = #tpu.dot_dimension_numbers<[1], [0], [0], [1], [0, 0, 1, 1], [], []>} : vector<8x12xf32>, vector<12x8xf32>, vector<8x8xf32> -> vector<8x8xf32>
    %198 = arith.addf %194, %197 : vector<8x8xf32>
    %c1_134 = arith.constant 1 : index
    %c36_135 = arith.constant 36 : index
    %c0_136 = arith.constant 0 : index
    %199 = vector.load %arg1[%c1_134, %c36_135, %c0_136] : memref<6x48x8xf32, #tpu.memory_space<vmem>>, vector<1x12x8xf32>
    %200 = vector.shape_cast %199 : vector<1x12x8xf32> to vector<12x8xf32>
    %cst_137 = arith.constant dense<0.000000e+00> : vector<8x8xf32>
    %201 = tpu.matmul %169, %200, %cst_137 {dimension_numbers = #tpu.dot_dimension_numbers<[1], [0], [0], [1], [0, 0, 1, 1], [], []>} : vector<8x12xf32>, vector<12x8xf32>, vector<8x8xf32> -> vector<8x8xf32>
    %202 = arith.addf %198, %201 : vector<8x8xf32>
    %203 = tpu.transpose %202, [1, 0] : vector<8x8xf32> -> vector<8x8xf32>
    %204 = vector.extract_strided_slice %10 {offsets = [8, 0], sizes = [8, 48], strides = [1, 1]} : vector<48x48xf32> to vector<8x48xf32>
    %cst_138 = arith.constant dense<0.000000e+00> : vector<8x48xf32>
    %205 = tpu.matmul %203, %204, %cst_138 {dimension_numbers = #tpu.dot_dimension_numbers<[1], [0], [0], [1], [0, 0, 1, 1], [], []>} : vector<8x8xf32>, vector<8x48xf32>, vector<8x48xf32> -> vector<8x48xf32>
    %206 = arith.addf %187, %205 : vector<8x48xf32>
    %c2 = arith.constant 2 : index
    %c0_139 = arith.constant 0 : index
    %c0_140 = arith.constant 0 : index
    %207 = vector.load %arg1[%c2, %c0_139, %c0_140] : memref<6x48x8xf32, #tpu.memory_space<vmem>>, vector<1x12x8xf32>
    %208 = vector.shape_cast %207 : vector<1x12x8xf32> to vector<12x8xf32>
    %cst_141 = arith.constant dense<0.000000e+00> : vector<8x8xf32>
    %209 = tpu.matmul %118, %208, %cst_141 {dimension_numbers = #tpu.dot_dimension_numbers<[1], [0], [0], [1], [0, 0, 1, 1], [], []>} : vector<8x12xf32>, vector<12x8xf32>, vector<8x8xf32> -> vector<8x8xf32>
    %c2_142 = arith.constant 2 : index
    %c12_143 = arith.constant 12 : index
    %c0_144 = arith.constant 0 : index
    %210 = vector.load %arg1[%c2_142, %c12_143, %c0_144] : memref<6x48x8xf32, #tpu.memory_space<vmem>>, vector<1x12x8xf32>
    %211 = vector.shape_cast %210 : vector<1x12x8xf32> to vector<12x8xf32>
    %cst_145 = arith.constant dense<0.000000e+00> : vector<8x8xf32>
    %212 = tpu.matmul %135, %211, %cst_145 {dimension_numbers = #tpu.dot_dimension_numbers<[1], [0], [0], [1], [0, 0, 1, 1], [], []>} : vector<8x12xf32>, vector<12x8xf32>, vector<8x8xf32> -> vector<8x8xf32>
    %213 = arith.addf %209, %212 : vector<8x8xf32>
    %c2_146 = arith.constant 2 : index
    %c24_147 = arith.constant 24 : index
    %c0_148 = arith.constant 0 : index
    %214 = vector.load %arg1[%c2_146, %c24_147, %c0_148] : memref<6x48x8xf32, #tpu.memory_space<vmem>>, vector<1x12x8xf32>
    %215 = vector.shape_cast %214 : vector<1x12x8xf32> to vector<12x8xf32>
    %cst_149 = arith.constant dense<0.000000e+00> : vector<8x8xf32>
    %216 = tpu.matmul %152, %215, %cst_149 {dimension_numbers = #tpu.dot_dimension_numbers<[1], [0], [0], [1], [0, 0, 1, 1], [], []>} : vector<8x12xf32>, vector<12x8xf32>, vector<8x8xf32> -> vector<8x8xf32>
    %217 = arith.addf %213, %216 : vector<8x8xf32>
    %c2_150 = arith.constant 2 : index
    %c36_151 = arith.constant 36 : index
    %c0_152 = arith.constant 0 : index
    %218 = vector.load %arg1[%c2_150, %c36_151, %c0_152] : memref<6x48x8xf32, #tpu.memory_space<vmem>>, vector<1x12x8xf32>
    %219 = vector.shape_cast %218 : vector<1x12x8xf32> to vector<12x8xf32>
    %cst_153 = arith.constant dense<0.000000e+00> : vector<8x8xf32>
    %220 = tpu.matmul %169, %219, %cst_153 {dimension_numbers = #tpu.dot_dimension_numbers<[1], [0], [0], [1], [0, 0, 1, 1], [], []>} : vector<8x12xf32>, vector<12x8xf32>, vector<8x8xf32> -> vector<8x8xf32>
    %221 = arith.addf %217, %220 : vector<8x8xf32>
    %222 = tpu.transpose %221, [1, 0] : vector<8x8xf32> -> vector<8x8xf32>
    %223 = vector.extract_strided_slice %10 {offsets = [16, 0], sizes = [8, 48], strides = [1, 1]} : vector<48x48xf32> to vector<8x48xf32>
    %cst_154 = arith.constant dense<0.000000e+00> : vector<8x48xf32>
    %224 = tpu.matmul %222, %223, %cst_154 {dimension_numbers = #tpu.dot_dimension_numbers<[1], [0], [0], [1], [0, 0, 1, 1], [], []>} : vector<8x8xf32>, vector<8x48xf32>, vector<8x48xf32> -> vector<8x48xf32>
    %225 = arith.addf %206, %224 : vector<8x48xf32>
    %c3 = arith.constant 3 : index
    %c0_155 = arith.constant 0 : index
    %c0_156 = arith.constant 0 : index
    %226 = vector.load %arg1[%c3, %c0_155, %c0_156] : memref<6x48x8xf32, #tpu.memory_space<vmem>>, vector<1x12x8xf32>
    %227 = vector.shape_cast %226 : vector<1x12x8xf32> to vector<12x8xf32>
    %cst_157 = arith.constant dense<0.000000e+00> : vector<8x8xf32>
    %228 = tpu.matmul %118, %227, %cst_157 {dimension_numbers = #tpu.dot_dimension_numbers<[1], [0], [0], [1], [0, 0, 1, 1], [], []>} : vector<8x12xf32>, vector<12x8xf32>, vector<8x8xf32> -> vector<8x8xf32>
    %c3_158 = arith.constant 3 : index
    %c12_159 = arith.constant 12 : index
    %c0_160 = arith.constant 0 : index
    %229 = vector.load %arg1[%c3_158, %c12_159, %c0_160] : memref<6x48x8xf32, #tpu.memory_space<vmem>>, vector<1x12x8xf32>
    %230 = vector.shape_cast %229 : vector<1x12x8xf32> to vector<12x8xf32>
    %cst_161 = arith.constant dense<0.000000e+00> : vector<8x8xf32>
    %231 = tpu.matmul %135, %230, %cst_161 {dimension_numbers = #tpu.dot_dimension_numbers<[1], [0], [0], [1], [0, 0, 1, 1], [], []>} : vector<8x12xf32>, vector<12x8xf32>, vector<8x8xf32> -> vector<8x8xf32>
    %232 = arith.addf %228, %231 : vector<8x8xf32>
    %c3_162 = arith.constant 3 : index
    %c24_163 = arith.constant 24 : index
    %c0_164 = arith.constant 0 : index
    %233 = vector.load %arg1[%c3_162, %c24_163, %c0_164] : memref<6x48x8xf32, #tpu.memory_space<vmem>>, vector<1x12x8xf32>
    %234 = vector.shape_cast %233 : vector<1x12x8xf32> to vector<12x8xf32>
    %cst_165 = arith.constant dense<0.000000e+00> : vector<8x8xf32>
    %235 = tpu.matmul %152, %234, %cst_165 {dimension_numbers = #tpu.dot_dimension_numbers<[1], [0], [0], [1], [0, 0, 1, 1], [], []>} : vector<8x12xf32>, vector<12x8xf32>, vector<8x8xf32> -> vector<8x8xf32>
    %236 = arith.addf %232, %235 : vector<8x8xf32>
    %c3_166 = arith.constant 3 : index
    %c36_167 = arith.constant 36 : index
    %c0_168 = arith.constant 0 : index
    %237 = vector.load %arg1[%c3_166, %c36_167, %c0_168] : memref<6x48x8xf32, #tpu.memory_space<vmem>>, vector<1x12x8xf32>
    %238 = vector.shape_cast %237 : vector<1x12x8xf32> to vector<12x8xf32>
    %cst_169 = arith.constant dense<0.000000e+00> : vector<8x8xf32>
    %239 = tpu.matmul %169, %238, %cst_169 {dimension_numbers = #tpu.dot_dimension_numbers<[1], [0], [0], [1], [0, 0, 1, 1], [], []>} : vector<8x12xf32>, vector<12x8xf32>, vector<8x8xf32> -> vector<8x8xf32>
    %240 = arith.addf %236, %239 : vector<8x8xf32>
    %241 = tpu.transpose %240, [1, 0] : vector<8x8xf32> -> vector<8x8xf32>
    %242 = vector.extract_strided_slice %10 {offsets = [24, 0], sizes = [8, 48], strides = [1, 1]} : vector<48x48xf32> to vector<8x48xf32>
    %cst_170 = arith.constant dense<0.000000e+00> : vector<8x48xf32>
    %243 = tpu.matmul %241, %242, %cst_170 {dimension_numbers = #tpu.dot_dimension_numbers<[1], [0], [0], [1], [0, 0, 1, 1], [], []>} : vector<8x8xf32>, vector<8x48xf32>, vector<8x48xf32> -> vector<8x48xf32>
    %244 = arith.addf %225, %243 : vector<8x48xf32>
    %c4 = arith.constant 4 : index
    %c0_171 = arith.constant 0 : index
    %c0_172 = arith.constant 0 : index
    %245 = vector.load %arg1[%c4, %c0_171, %c0_172] : memref<6x48x8xf32, #tpu.memory_space<vmem>>, vector<1x12x8xf32>
    %246 = vector.shape_cast %245 : vector<1x12x8xf32> to vector<12x8xf32>
    %cst_173 = arith.constant dense<0.000000e+00> : vector<8x8xf32>
    %247 = tpu.matmul %118, %246, %cst_173 {dimension_numbers = #tpu.dot_dimension_numbers<[1], [0], [0], [1], [0, 0, 1, 1], [], []>} : vector<8x12xf32>, vector<12x8xf32>, vector<8x8xf32> -> vector<8x8xf32>
    %c4_174 = arith.constant 4 : index
    %c12_175 = arith.constant 12 : index
    %c0_176 = arith.constant 0 : index
    %248 = vector.load %arg1[%c4_174, %c12_175, %c0_176] : memref<6x48x8xf32, #tpu.memory_space<vmem>>, vector<1x12x8xf32>
    %249 = vector.shape_cast %248 : vector<1x12x8xf32> to vector<12x8xf32>
    %cst_177 = arith.constant dense<0.000000e+00> : vector<8x8xf32>
    %250 = tpu.matmul %135, %249, %cst_177 {dimension_numbers = #tpu.dot_dimension_numbers<[1], [0], [0], [1], [0, 0, 1, 1], [], []>} : vector<8x12xf32>, vector<12x8xf32>, vector<8x8xf32> -> vector<8x8xf32>
    %251 = arith.addf %247, %250 : vector<8x8xf32>
    %c4_178 = arith.constant 4 : index
    %c24_179 = arith.constant 24 : index
    %c0_180 = arith.constant 0 : index
    %252 = vector.load %arg1[%c4_178, %c24_179, %c0_180] : memref<6x48x8xf32, #tpu.memory_space<vmem>>, vector<1x12x8xf32>
    %253 = vector.shape_cast %252 : vector<1x12x8xf32> to vector<12x8xf32>
    %cst_181 = arith.constant dense<0.000000e+00> : vector<8x8xf32>
    %254 = tpu.matmul %152, %253, %cst_181 {dimension_numbers = #tpu.dot_dimension_numbers<[1], [0], [0], [1], [0, 0, 1, 1], [], []>} : vector<8x12xf32>, vector<12x8xf32>, vector<8x8xf32> -> vector<8x8xf32>
    %255 = arith.addf %251, %254 : vector<8x8xf32>
    %c4_182 = arith.constant 4 : index
    %c36_183 = arith.constant 36 : index
    %c0_184 = arith.constant 0 : index
    %256 = vector.load %arg1[%c4_182, %c36_183, %c0_184] : memref<6x48x8xf32, #tpu.memory_space<vmem>>, vector<1x12x8xf32>
    %257 = vector.shape_cast %256 : vector<1x12x8xf32> to vector<12x8xf32>
    %cst_185 = arith.constant dense<0.000000e+00> : vector<8x8xf32>
    %258 = tpu.matmul %169, %257, %cst_185 {dimension_numbers = #tpu.dot_dimension_numbers<[1], [0], [0], [1], [0, 0, 1, 1], [], []>} : vector<8x12xf32>, vector<12x8xf32>, vector<8x8xf32> -> vector<8x8xf32>
    %259 = arith.addf %255, %258 : vector<8x8xf32>
    %260 = tpu.transpose %259, [1, 0] : vector<8x8xf32> -> vector<8x8xf32>
    %261 = vector.extract_strided_slice %10 {offsets = [32, 0], sizes = [8, 48], strides = [1, 1]} : vector<48x48xf32> to vector<8x48xf32>
    %cst_186 = arith.constant dense<0.000000e+00> : vector<8x48xf32>
    %262 = tpu.matmul %260, %261, %cst_186 {dimension_numbers = #tpu.dot_dimension_numbers<[1], [0], [0], [1], [0, 0, 1, 1], [], []>} : vector<8x8xf32>, vector<8x48xf32>, vector<8x48xf32> -> vector<8x48xf32>
    %263 = arith.addf %244, %262 : vector<8x48xf32>
    %c5 = arith.constant 5 : index
    %c0_187 = arith.constant 0 : index
    %c0_188 = arith.constant 0 : index
    %264 = vector.load %arg1[%c5, %c0_187, %c0_188] : memref<6x48x8xf32, #tpu.memory_space<vmem>>, vector<1x12x8xf32>
    %265 = vector.shape_cast %264 : vector<1x12x8xf32> to vector<12x8xf32>
    %cst_189 = arith.constant dense<0.000000e+00> : vector<8x8xf32>
    %266 = tpu.matmul %118, %265, %cst_189 {dimension_numbers = #tpu.dot_dimension_numbers<[1], [0], [0], [1], [0, 0, 1, 1], [], []>} : vector<8x12xf32>, vector<12x8xf32>, vector<8x8xf32> -> vector<8x8xf32>
    %c5_190 = arith.constant 5 : index
    %c12_191 = arith.constant 12 : index
    %c0_192 = arith.constant 0 : index
    %267 = vector.load %arg1[%c5_190, %c12_191, %c0_192] : memref<6x48x8xf32, #tpu.memory_space<vmem>>, vector<1x12x8xf32>
    %268 = vector.shape_cast %267 : vector<1x12x8xf32> to vector<12x8xf32>
    %cst_193 = arith.constant dense<0.000000e+00> : vector<8x8xf32>
    %269 = tpu.matmul %135, %268, %cst_193 {dimension_numbers = #tpu.dot_dimension_numbers<[1], [0], [0], [1], [0, 0, 1, 1], [], []>} : vector<8x12xf32>, vector<12x8xf32>, vector<8x8xf32> -> vector<8x8xf32>
    %270 = arith.addf %266, %269 : vector<8x8xf32>
    %c5_194 = arith.constant 5 : index
    %c24_195 = arith.constant 24 : index
    %c0_196 = arith.constant 0 : index
    %271 = vector.load %arg1[%c5_194, %c24_195, %c0_196] : memref<6x48x8xf32, #tpu.memory_space<vmem>>, vector<1x12x8xf32>
    %272 = vector.shape_cast %271 : vector<1x12x8xf32> to vector<12x8xf32>
    %cst_197 = arith.constant dense<0.000000e+00> : vector<8x8xf32>
    %273 = tpu.matmul %152, %272, %cst_197 {dimension_numbers = #tpu.dot_dimension_numbers<[1], [0], [0], [1], [0, 0, 1, 1], [], []>} : vector<8x12xf32>, vector<12x8xf32>, vector<8x8xf32> -> vector<8x8xf32>
    %274 = arith.addf %270, %273 : vector<8x8xf32>
    %c5_198 = arith.constant 5 : index
    %c36_199 = arith.constant 36 : index
    %c0_200 = arith.constant 0 : index
    %275 = vector.load %arg1[%c5_198, %c36_199, %c0_200] : memref<6x48x8xf32, #tpu.memory_space<vmem>>, vector<1x12x8xf32>
    %276 = vector.shape_cast %275 : vector<1x12x8xf32> to vector<12x8xf32>
    %cst_201 = arith.constant dense<0.000000e+00> : vector<8x8xf32>
    %277 = tpu.matmul %169, %276, %cst_201 {dimension_numbers = #tpu.dot_dimension_numbers<[1], [0], [0], [1], [0, 0, 1, 1], [], []>} : vector<8x12xf32>, vector<12x8xf32>, vector<8x8xf32> -> vector<8x8xf32>
    %278 = arith.addf %274, %277 : vector<8x8xf32>
    %279 = tpu.transpose %278, [1, 0] : vector<8x8xf32> -> vector<8x8xf32>
    %280 = vector.extract_strided_slice %10 {offsets = [40, 0], sizes = [8, 48], strides = [1, 1]} : vector<48x48xf32> to vector<8x48xf32>
    %cst_202 = arith.constant dense<0.000000e+00> : vector<8x48xf32>
    %281 = tpu.matmul %279, %280, %cst_202 {dimension_numbers = #tpu.dot_dimension_numbers<[1], [0], [0], [1], [0, 0, 1, 1], [], []>} : vector<8x8xf32>, vector<8x48xf32>, vector<8x48xf32> -> vector<8x48xf32>
    %282 = arith.addf %263, %281 : vector<8x48xf32>
    %283 = arith.addf %282, %98 : vector<8x48xf32>
    %cst_203 = arith.constant dense<0.000000e+00> : vector<8xf32>
    %284 = vector.multi_reduction <add>, %283, %cst_203 [1] : vector<8x48xf32> to vector<8xf32>
    %285 = vector.shape_cast %284 : vector<8xf32> to vector<8x1xf32>
    %cst_204 = arith.constant 4.800000e+01 : f32
    %286 = vector.broadcast %cst_204 : f32 to vector<8x1xf32>
    %287 = arith.divf %285, %286 : vector<8x1xf32>
    %288 = vector.broadcast %287 : vector<8x1xf32> to vector<8x48xf32>
    %289 = arith.subf %283, %288 : vector<8x48xf32>
    %290 = arith.mulf %289, %289 : vector<8x48xf32>
    %cst_205 = arith.constant dense<0.000000e+00> : vector<8xf32>
    %291 = vector.multi_reduction <add>, %290, %cst_205 [1] : vector<8x48xf32> to vector<8xf32>
    %292 = vector.shape_cast %291 : vector<8xf32> to vector<8x1xf32>
    %cst_206 = arith.constant 4.800000e+01 : f32
    %293 = vector.broadcast %cst_206 : f32 to vector<8x1xf32>
    %294 = arith.divf %292, %293 : vector<8x1xf32>
    %295 = vector.broadcast %287 : vector<8x1xf32> to vector<8x48xf32>
    %296 = arith.subf %283, %295 : vector<8x48xf32>
    %cst_207 = arith.constant 9.99999974E-6 : f32
    %297 = vector.broadcast %cst_207 : f32 to vector<8x1xf32>
    %298 = arith.addf %294, %297 : vector<8x1xf32>
    %299 = math.rsqrt %298 : vector<8x1xf32>
    %300 = vector.broadcast %299 : vector<8x1xf32> to vector<8x48xf32>
    %301 = arith.mulf %296, %300 : vector<8x48xf32>
    %302 = vector.broadcast %7 : vector<1x48xf32> to vector<8x48xf32>
    %303 = arith.mulf %301, %302 : vector<8x48xf32>
    %304 = vector.broadcast %6 : vector<1x48xf32> to vector<8x48xf32>
    %305 = arith.addf %303, %304 : vector<8x48xf32>
    %cst_208 = arith.constant dense<0.000000e+00> : vector<8x48xf32>
    %306 = tpu.matmul %305, %5, %cst_208 {dimension_numbers = #tpu.dot_dimension_numbers<[1], [0], [0], [1], [0, 0, 1, 1], [], []>} : vector<8x48xf32>, vector<48x48xf32>, vector<8x48xf32> -> vector<8x48xf32>
    %307 = vector.broadcast %4 : vector<1x48xf32> to vector<8x48xf32>
    %308 = arith.addf %306, %307 : vector<8x48xf32>
    %309 = arith.addf %308, %305 : vector<8x48xf32>
    %cst_209 = arith.constant dense<0.000000e+00> : vector<8xf32>
    %310 = vector.multi_reduction <add>, %309, %cst_209 [1] : vector<8x48xf32> to vector<8xf32>
    %311 = vector.shape_cast %310 : vector<8xf32> to vector<8x1xf32>
    %cst_210 = arith.constant 4.800000e+01 : f32
    %312 = vector.broadcast %cst_210 : f32 to vector<8x1xf32>
    %313 = arith.divf %311, %312 : vector<8x1xf32>
    %314 = vector.broadcast %313 : vector<8x1xf32> to vector<8x48xf32>
    %315 = arith.subf %309, %314 : vector<8x48xf32>
    %316 = arith.mulf %315, %315 : vector<8x48xf32>
    %cst_211 = arith.constant dense<0.000000e+00> : vector<8xf32>
    %317 = vector.multi_reduction <add>, %316, %cst_211 [1] : vector<8x48xf32> to vector<8xf32>
    %318 = vector.shape_cast %317 : vector<8xf32> to vector<8x1xf32>
    %cst_212 = arith.constant 4.800000e+01 : f32
    %319 = vector.broadcast %cst_212 : f32 to vector<8x1xf32>
    %320 = arith.divf %318, %319 : vector<8x1xf32>
    %321 = vector.broadcast %313 : vector<8x1xf32> to vector<8x48xf32>
    %322 = arith.subf %309, %321 : vector<8x48xf32>
    %cst_213 = arith.constant 9.99999974E-6 : f32
    %323 = vector.broadcast %cst_213 : f32 to vector<8x1xf32>
    %324 = arith.addf %320, %323 : vector<8x1xf32>
    %325 = math.rsqrt %324 : vector<8x1xf32>
    %326 = vector.broadcast %325 : vector<8x1xf32> to vector<8x48xf32>
    %327 = arith.mulf %322, %326 : vector<8x48xf32>
    %328 = vector.broadcast %9 : vector<1x48xf32> to vector<8x48xf32>
    %329 = arith.mulf %327, %328 : vector<8x48xf32>
    %330 = vector.broadcast %8 : vector<1x48xf32> to vector<8x48xf32>
    %331 = arith.addf %329, %330 : vector<8x48xf32>
    %cst_214 = arith.constant dense<0.000000e+00> : vector<8x48xf32>
    %332 = tpu.matmul %331, %22, %cst_214 {dimension_numbers = #tpu.dot_dimension_numbers<[1], [0], [0], [1], [0, 0, 1, 1], [], []>} : vector<8x48xf32>, vector<48x48xf32>, vector<8x48xf32> -> vector<8x48xf32>
    %cst_215 = arith.constant dense<0.000000e+00> : vector<8x48xf32>
    %333 = tpu.matmul %331, %21, %cst_215 {dimension_numbers = #tpu.dot_dimension_numbers<[1], [0], [0], [1], [0, 0, 1, 1], [], []>} : vector<8x48xf32>, vector<48x48xf32>, vector<8x48xf32> -> vector<8x48xf32>
    %cst_216 = arith.constant dense<0.000000e+00> : vector<8x48xf32>
    %334 = tpu.matmul %331, %23, %cst_216 {dimension_numbers = #tpu.dot_dimension_numbers<[1], [0], [0], [1], [0, 0, 1, 1], [], []>} : vector<8x48xf32>, vector<48x48xf32>, vector<8x48xf32> -> vector<8x48xf32>
    %335 = vector.extract_strided_slice %332 {offsets = [0, 0], sizes = [8, 12], strides = [1, 1]} : vector<8x48xf32> to vector<8x12xf32>
    %336 = vector.extract_strided_slice %333 {offsets = [0, 0], sizes = [8, 12], strides = [1, 1]} : vector<8x48xf32> to vector<8x12xf32>
    %cst_217 = arith.constant dense<0.000000e+00> : vector<8x8xf32>
    %337 = tpu.matmul %335, %336, %cst_217 {dimension_numbers = #tpu.dot_dimension_numbers<[1], [1], [0], [0], [0, 0, 1, 0], [], []>} : vector<8x12xf32>, vector<8x12xf32>, vector<8x8xf32> -> vector<8x8xf32>
    %cst_218 = arith.constant 0.288675129 : f32
    %338 = vector.broadcast %cst_218 : f32 to vector<8x8xf32>
    %339 = arith.mulf %337, %338 : vector<8x8xf32>
    %cst_219 = arith.constant dense<0xFF800000> : vector<8xf32>
    %340 = vector.multi_reduction <maximumf>, %339, %cst_219 [1] : vector<8x8xf32> to vector<8xf32>
    %341 = vector.shape_cast %340 : vector<8xf32> to vector<8x1xf32>
    %342 = vector.broadcast %341 : vector<8x1xf32> to vector<8x8xf32>
    %343 = arith.subf %339, %342 : vector<8x8xf32>
    %344 = math.exp %343 : vector<8x8xf32>
    %cst_220 = arith.constant dense<0.000000e+00> : vector<8xf32>
    %345 = vector.multi_reduction <add>, %344, %cst_220 [1] : vector<8x8xf32> to vector<8xf32>
    %346 = vector.shape_cast %345 : vector<8xf32> to vector<8x1xf32>
    %347 = tpu.reciprocal %346 {approx = true} : vector<8x1xf32> -> vector<8x1xf32>
    %348 = vector.broadcast %347 : vector<8x1xf32> to vector<8x8xf32>
    %349 = arith.mulf %344, %348 : vector<8x8xf32>
    %350 = vector.extract_strided_slice %334 {offsets = [0, 0], sizes = [8, 12], strides = [1, 1]} : vector<8x48xf32> to vector<8x12xf32>
    %cst_221 = arith.constant dense<0.000000e+00> : vector<8x12xf32>
    %351 = tpu.matmul %349, %350, %cst_221 {dimension_numbers = #tpu.dot_dimension_numbers<[1], [0], [0], [1], [0, 0, 1, 1], [], []>} : vector<8x8xf32>, vector<8x12xf32>, vector<8x12xf32> -> vector<8x12xf32>
    %352 = vector.extract_strided_slice %332 {offsets = [0, 12], sizes = [8, 12], strides = [1, 1]} : vector<8x48xf32> to vector<8x12xf32>
    %353 = vector.extract_strided_slice %333 {offsets = [0, 12], sizes = [8, 12], strides = [1, 1]} : vector<8x48xf32> to vector<8x12xf32>
    %cst_222 = arith.constant dense<0.000000e+00> : vector<8x8xf32>
    %354 = tpu.matmul %352, %353, %cst_222 {dimension_numbers = #tpu.dot_dimension_numbers<[1], [1], [0], [0], [0, 0, 1, 0], [], []>} : vector<8x12xf32>, vector<8x12xf32>, vector<8x8xf32> -> vector<8x8xf32>
    %cst_223 = arith.constant 0.288675129 : f32
    %355 = vector.broadcast %cst_223 : f32 to vector<8x8xf32>
    %356 = arith.mulf %354, %355 : vector<8x8xf32>
    %cst_224 = arith.constant dense<0xFF800000> : vector<8xf32>
    %357 = vector.multi_reduction <maximumf>, %356, %cst_224 [1] : vector<8x8xf32> to vector<8xf32>
    %358 = vector.shape_cast %357 : vector<8xf32> to vector<8x1xf32>
    %359 = vector.broadcast %358 : vector<8x1xf32> to vector<8x8xf32>
    %360 = arith.subf %356, %359 : vector<8x8xf32>
    %361 = math.exp %360 : vector<8x8xf32>
    %cst_225 = arith.constant dense<0.000000e+00> : vector<8xf32>
    %362 = vector.multi_reduction <add>, %361, %cst_225 [1] : vector<8x8xf32> to vector<8xf32>
    %363 = vector.shape_cast %362 : vector<8xf32> to vector<8x1xf32>
    %364 = tpu.reciprocal %363 {approx = true} : vector<8x1xf32> -> vector<8x1xf32>
    %365 = vector.broadcast %364 : vector<8x1xf32> to vector<8x8xf32>
    %366 = arith.mulf %361, %365 : vector<8x8xf32>
    %367 = vector.extract_strided_slice %334 {offsets = [0, 12], sizes = [8, 12], strides = [1, 1]} : vector<8x48xf32> to vector<8x12xf32>
    %cst_226 = arith.constant dense<0.000000e+00> : vector<8x12xf32>
    %368 = tpu.matmul %366, %367, %cst_226 {dimension_numbers = #tpu.dot_dimension_numbers<[1], [0], [0], [1], [0, 0, 1, 1], [], []>} : vector<8x8xf32>, vector<8x12xf32>, vector<8x12xf32> -> vector<8x12xf32>
    %369 = vector.extract_strided_slice %332 {offsets = [0, 24], sizes = [8, 12], strides = [1, 1]} : vector<8x48xf32> to vector<8x12xf32>
    %370 = vector.extract_strided_slice %333 {offsets = [0, 24], sizes = [8, 12], strides = [1, 1]} : vector<8x48xf32> to vector<8x12xf32>
    %cst_227 = arith.constant dense<0.000000e+00> : vector<8x8xf32>
    %371 = tpu.matmul %369, %370, %cst_227 {dimension_numbers = #tpu.dot_dimension_numbers<[1], [1], [0], [0], [0, 0, 1, 0], [], []>} : vector<8x12xf32>, vector<8x12xf32>, vector<8x8xf32> -> vector<8x8xf32>
    %cst_228 = arith.constant 0.288675129 : f32
    %372 = vector.broadcast %cst_228 : f32 to vector<8x8xf32>
    %373 = arith.mulf %371, %372 : vector<8x8xf32>
    %cst_229 = arith.constant dense<0xFF800000> : vector<8xf32>
    %374 = vector.multi_reduction <maximumf>, %373, %cst_229 [1] : vector<8x8xf32> to vector<8xf32>
    %375 = vector.shape_cast %374 : vector<8xf32> to vector<8x1xf32>
    %376 = vector.broadcast %375 : vector<8x1xf32> to vector<8x8xf32>
    %377 = arith.subf %373, %376 : vector<8x8xf32>
    %378 = math.exp %377 : vector<8x8xf32>
    %cst_230 = arith.constant dense<0.000000e+00> : vector<8xf32>
    %379 = vector.multi_reduction <add>, %378, %cst_230 [1] : vector<8x8xf32> to vector<8xf32>
    %380 = vector.shape_cast %379 : vector<8xf32> to vector<8x1xf32>
    %381 = tpu.reciprocal %380 {approx = true} : vector<8x1xf32> -> vector<8x1xf32>
    %382 = vector.broadcast %381 : vector<8x1xf32> to vector<8x8xf32>
    %383 = arith.mulf %378, %382 : vector<8x8xf32>
    %384 = vector.extract_strided_slice %334 {offsets = [0, 24], sizes = [8, 12], strides = [1, 1]} : vector<8x48xf32> to vector<8x12xf32>
    %cst_231 = arith.constant dense<0.000000e+00> : vector<8x12xf32>
    %385 = tpu.matmul %383, %384, %cst_231 {dimension_numbers = #tpu.dot_dimension_numbers<[1], [0], [0], [1], [0, 0, 1, 1], [], []>} : vector<8x8xf32>, vector<8x12xf32>, vector<8x12xf32> -> vector<8x12xf32>
    %386 = vector.extract_strided_slice %332 {offsets = [0, 36], sizes = [8, 12], strides = [1, 1]} : vector<8x48xf32> to vector<8x12xf32>
    %387 = vector.extract_strided_slice %333 {offsets = [0, 36], sizes = [8, 12], strides = [1, 1]} : vector<8x48xf32> to vector<8x12xf32>
    %cst_232 = arith.constant dense<0.000000e+00> : vector<8x8xf32>
    %388 = tpu.matmul %386, %387, %cst_232 {dimension_numbers = #tpu.dot_dimension_numbers<[1], [1], [0], [0], [0, 0, 1, 0], [], []>} : vector<8x12xf32>, vector<8x12xf32>, vector<8x8xf32> -> vector<8x8xf32>
    %cst_233 = arith.constant 0.288675129 : f32
    %389 = vector.broadcast %cst_233 : f32 to vector<8x8xf32>
    %390 = arith.mulf %388, %389 : vector<8x8xf32>
    %cst_234 = arith.constant dense<0xFF800000> : vector<8xf32>
    %391 = vector.multi_reduction <maximumf>, %390, %cst_234 [1] : vector<8x8xf32> to vector<8xf32>
    %392 = vector.shape_cast %391 : vector<8xf32> to vector<8x1xf32>
    %393 = vector.broadcast %392 : vector<8x1xf32> to vector<8x8xf32>
    %394 = arith.subf %390, %393 : vector<8x8xf32>
    %395 = math.exp %394 : vector<8x8xf32>
    %cst_235 = arith.constant dense<0.000000e+00> : vector<8xf32>
    %396 = vector.multi_reduction <add>, %395, %cst_235 [1] : vector<8x8xf32> to vector<8xf32>
    %397 = vector.shape_cast %396 : vector<8xf32> to vector<8x1xf32>
    %398 = tpu.reciprocal %397 {approx = true} : vector<8x1xf32> -> vector<8x1xf32>
    %399 = vector.broadcast %398 : vector<8x1xf32> to vector<8x8xf32>
    %400 = arith.mulf %395, %399 : vector<8x8xf32>
    %401 = vector.extract_strided_slice %334 {offsets = [0, 36], sizes = [8, 12], strides = [1, 1]} : vector<8x48xf32> to vector<8x12xf32>
    %cst_236 = arith.constant dense<0.000000e+00> : vector<8x12xf32>
    %402 = tpu.matmul %400, %401, %cst_236 {dimension_numbers = #tpu.dot_dimension_numbers<[1], [0], [0], [1], [0, 0, 1, 1], [], []>} : vector<8x8xf32>, vector<8x12xf32>, vector<8x12xf32> -> vector<8x12xf32>
    %c0_237 = arith.constant 0 : index
    %c0_238 = arith.constant 0 : index
    %c0_239 = arith.constant 0 : index
    %403 = vector.load %arg1[%c0_237, %c0_238, %c0_239] : memref<6x48x8xf32, #tpu.memory_space<vmem>>, vector<1x12x8xf32>
    %404 = vector.shape_cast %403 : vector<1x12x8xf32> to vector<12x8xf32>
    %cst_240 = arith.constant dense<0.000000e+00> : vector<8x8xf32>
    %405 = tpu.matmul %351, %404, %cst_240 {dimension_numbers = #tpu.dot_dimension_numbers<[1], [0], [0], [1], [0, 0, 1, 1], [], []>} : vector<8x12xf32>, vector<12x8xf32>, vector<8x8xf32> -> vector<8x8xf32>
    %c0_241 = arith.constant 0 : index
    %c12_242 = arith.constant 12 : index
    %c0_243 = arith.constant 0 : index
    %406 = vector.load %arg1[%c0_241, %c12_242, %c0_243] : memref<6x48x8xf32, #tpu.memory_space<vmem>>, vector<1x12x8xf32>
    %407 = vector.shape_cast %406 : vector<1x12x8xf32> to vector<12x8xf32>
    %cst_244 = arith.constant dense<0.000000e+00> : vector<8x8xf32>
    %408 = tpu.matmul %368, %407, %cst_244 {dimension_numbers = #tpu.dot_dimension_numbers<[1], [0], [0], [1], [0, 0, 1, 1], [], []>} : vector<8x12xf32>, vector<12x8xf32>, vector<8x8xf32> -> vector<8x8xf32>
    %409 = arith.addf %405, %408 : vector<8x8xf32>
    %c0_245 = arith.constant 0 : index
    %c24_246 = arith.constant 24 : index
    %c0_247 = arith.constant 0 : index
    %410 = vector.load %arg1[%c0_245, %c24_246, %c0_247] : memref<6x48x8xf32, #tpu.memory_space<vmem>>, vector<1x12x8xf32>
    %411 = vector.shape_cast %410 : vector<1x12x8xf32> to vector<12x8xf32>
    %cst_248 = arith.constant dense<0.000000e+00> : vector<8x8xf32>
    %412 = tpu.matmul %385, %411, %cst_248 {dimension_numbers = #tpu.dot_dimension_numbers<[1], [0], [0], [1], [0, 0, 1, 1], [], []>} : vector<8x12xf32>, vector<12x8xf32>, vector<8x8xf32> -> vector<8x8xf32>
    %413 = arith.addf %409, %412 : vector<8x8xf32>
    %c0_249 = arith.constant 0 : index
    %c36_250 = arith.constant 36 : index
    %c0_251 = arith.constant 0 : index
    %414 = vector.load %arg1[%c0_249, %c36_250, %c0_251] : memref<6x48x8xf32, #tpu.memory_space<vmem>>, vector<1x12x8xf32>
    %415 = vector.shape_cast %414 : vector<1x12x8xf32> to vector<12x8xf32>
    %cst_252 = arith.constant dense<0.000000e+00> : vector<8x8xf32>
    %416 = tpu.matmul %402, %415, %cst_252 {dimension_numbers = #tpu.dot_dimension_numbers<[1], [0], [0], [1], [0, 0, 1, 1], [], []>} : vector<8x12xf32>, vector<12x8xf32>, vector<8x8xf32> -> vector<8x8xf32>
    %417 = arith.addf %413, %416 : vector<8x8xf32>
    %418 = tpu.transpose %417, [1, 0] : vector<8x8xf32> -> vector<8x8xf32>
    %419 = vector.extract_strided_slice %20 {offsets = [0, 0], sizes = [8, 48], strides = [1, 1]} : vector<48x48xf32> to vector<8x48xf32>
    %cst_253 = arith.constant dense<0.000000e+00> : vector<8x48xf32>
    %420 = tpu.matmul %418, %419, %cst_253 {dimension_numbers = #tpu.dot_dimension_numbers<[1], [0], [0], [1], [0, 0, 1, 1], [], []>} : vector<8x8xf32>, vector<8x48xf32>, vector<8x48xf32> -> vector<8x48xf32>
    %c1_254 = arith.constant 1 : index
    %c0_255 = arith.constant 0 : index
    %c0_256 = arith.constant 0 : index
    %421 = vector.load %arg1[%c1_254, %c0_255, %c0_256] : memref<6x48x8xf32, #tpu.memory_space<vmem>>, vector<1x12x8xf32>
    %422 = vector.shape_cast %421 : vector<1x12x8xf32> to vector<12x8xf32>
    %cst_257 = arith.constant dense<0.000000e+00> : vector<8x8xf32>
    %423 = tpu.matmul %351, %422, %cst_257 {dimension_numbers = #tpu.dot_dimension_numbers<[1], [0], [0], [1], [0, 0, 1, 1], [], []>} : vector<8x12xf32>, vector<12x8xf32>, vector<8x8xf32> -> vector<8x8xf32>
    %c1_258 = arith.constant 1 : index
    %c12_259 = arith.constant 12 : index
    %c0_260 = arith.constant 0 : index
    %424 = vector.load %arg1[%c1_258, %c12_259, %c0_260] : memref<6x48x8xf32, #tpu.memory_space<vmem>>, vector<1x12x8xf32>
    %425 = vector.shape_cast %424 : vector<1x12x8xf32> to vector<12x8xf32>
    %cst_261 = arith.constant dense<0.000000e+00> : vector<8x8xf32>
    %426 = tpu.matmul %368, %425, %cst_261 {dimension_numbers = #tpu.dot_dimension_numbers<[1], [0], [0], [1], [0, 0, 1, 1], [], []>} : vector<8x12xf32>, vector<12x8xf32>, vector<8x8xf32> -> vector<8x8xf32>
    %427 = arith.addf %423, %426 : vector<8x8xf32>
    %c1_262 = arith.constant 1 : index
    %c24_263 = arith.constant 24 : index
    %c0_264 = arith.constant 0 : index
    %428 = vector.load %arg1[%c1_262, %c24_263, %c0_264] : memref<6x48x8xf32, #tpu.memory_space<vmem>>, vector<1x12x8xf32>
    %429 = vector.shape_cast %428 : vector<1x12x8xf32> to vector<12x8xf32>
    %cst_265 = arith.constant dense<0.000000e+00> : vector<8x8xf32>
    %430 = tpu.matmul %385, %429, %cst_265 {dimension_numbers = #tpu.dot_dimension_numbers<[1], [0], [0], [1], [0, 0, 1, 1], [], []>} : vector<8x12xf32>, vector<12x8xf32>, vector<8x8xf32> -> vector<8x8xf32>
    %431 = arith.addf %427, %430 : vector<8x8xf32>
    %c1_266 = arith.constant 1 : index
    %c36_267 = arith.constant 36 : index
    %c0_268 = arith.constant 0 : index
    %432 = vector.load %arg1[%c1_266, %c36_267, %c0_268] : memref<6x48x8xf32, #tpu.memory_space<vmem>>, vector<1x12x8xf32>
    %433 = vector.shape_cast %432 : vector<1x12x8xf32> to vector<12x8xf32>
    %cst_269 = arith.constant dense<0.000000e+00> : vector<8x8xf32>
    %434 = tpu.matmul %402, %433, %cst_269 {dimension_numbers = #tpu.dot_dimension_numbers<[1], [0], [0], [1], [0, 0, 1, 1], [], []>} : vector<8x12xf32>, vector<12x8xf32>, vector<8x8xf32> -> vector<8x8xf32>
    %435 = arith.addf %431, %434 : vector<8x8xf32>
    %436 = tpu.transpose %435, [1, 0] : vector<8x8xf32> -> vector<8x8xf32>
    %437 = vector.extract_strided_slice %20 {offsets = [8, 0], sizes = [8, 48], strides = [1, 1]} : vector<48x48xf32> to vector<8x48xf32>
    %cst_270 = arith.constant dense<0.000000e+00> : vector<8x48xf32>
    %438 = tpu.matmul %436, %437, %cst_270 {dimension_numbers = #tpu.dot_dimension_numbers<[1], [0], [0], [1], [0, 0, 1, 1], [], []>} : vector<8x8xf32>, vector<8x48xf32>, vector<8x48xf32> -> vector<8x48xf32>
    %439 = arith.addf %420, %438 : vector<8x48xf32>
    %c2_271 = arith.constant 2 : index
    %c0_272 = arith.constant 0 : index
    %c0_273 = arith.constant 0 : index
    %440 = vector.load %arg1[%c2_271, %c0_272, %c0_273] : memref<6x48x8xf32, #tpu.memory_space<vmem>>, vector<1x12x8xf32>
    %441 = vector.shape_cast %440 : vector<1x12x8xf32> to vector<12x8xf32>
    %cst_274 = arith.constant dense<0.000000e+00> : vector<8x8xf32>
    %442 = tpu.matmul %351, %441, %cst_274 {dimension_numbers = #tpu.dot_dimension_numbers<[1], [0], [0], [1], [0, 0, 1, 1], [], []>} : vector<8x12xf32>, vector<12x8xf32>, vector<8x8xf32> -> vector<8x8xf32>
    %c2_275 = arith.constant 2 : index
    %c12_276 = arith.constant 12 : index
    %c0_277 = arith.constant 0 : index
    %443 = vector.load %arg1[%c2_275, %c12_276, %c0_277] : memref<6x48x8xf32, #tpu.memory_space<vmem>>, vector<1x12x8xf32>
    %444 = vector.shape_cast %443 : vector<1x12x8xf32> to vector<12x8xf32>
    %cst_278 = arith.constant dense<0.000000e+00> : vector<8x8xf32>
    %445 = tpu.matmul %368, %444, %cst_278 {dimension_numbers = #tpu.dot_dimension_numbers<[1], [0], [0], [1], [0, 0, 1, 1], [], []>} : vector<8x12xf32>, vector<12x8xf32>, vector<8x8xf32> -> vector<8x8xf32>
    %446 = arith.addf %442, %445 : vector<8x8xf32>
    %c2_279 = arith.constant 2 : index
    %c24_280 = arith.constant 24 : index
    %c0_281 = arith.constant 0 : index
    %447 = vector.load %arg1[%c2_279, %c24_280, %c0_281] : memref<6x48x8xf32, #tpu.memory_space<vmem>>, vector<1x12x8xf32>
    %448 = vector.shape_cast %447 : vector<1x12x8xf32> to vector<12x8xf32>
    %cst_282 = arith.constant dense<0.000000e+00> : vector<8x8xf32>
    %449 = tpu.matmul %385, %448, %cst_282 {dimension_numbers = #tpu.dot_dimension_numbers<[1], [0], [0], [1], [0, 0, 1, 1], [], []>} : vector<8x12xf32>, vector<12x8xf32>, vector<8x8xf32> -> vector<8x8xf32>
    %450 = arith.addf %446, %449 : vector<8x8xf32>
    %c2_283 = arith.constant 2 : index
    %c36_284 = arith.constant 36 : index
    %c0_285 = arith.constant 0 : index
    %451 = vector.load %arg1[%c2_283, %c36_284, %c0_285] : memref<6x48x8xf32, #tpu.memory_space<vmem>>, vector<1x12x8xf32>
    %452 = vector.shape_cast %451 : vector<1x12x8xf32> to vector<12x8xf32>
    %cst_286 = arith.constant dense<0.000000e+00> : vector<8x8xf32>
    %453 = tpu.matmul %402, %452, %cst_286 {dimension_numbers = #tpu.dot_dimension_numbers<[1], [0], [0], [1], [0, 0, 1, 1], [], []>} : vector<8x12xf32>, vector<12x8xf32>, vector<8x8xf32> -> vector<8x8xf32>
    %454 = arith.addf %450, %453 : vector<8x8xf32>
    %455 = tpu.transpose %454, [1, 0] : vector<8x8xf32> -> vector<8x8xf32>
    %456 = vector.extract_strided_slice %20 {offsets = [16, 0], sizes = [8, 48], strides = [1, 1]} : vector<48x48xf32> to vector<8x48xf32>
    %cst_287 = arith.constant dense<0.000000e+00> : vector<8x48xf32>
    %457 = tpu.matmul %455, %456, %cst_287 {dimension_numbers = #tpu.dot_dimension_numbers<[1], [0], [0], [1], [0, 0, 1, 1], [], []>} : vector<8x8xf32>, vector<8x48xf32>, vector<8x48xf32> -> vector<8x48xf32>
    %458 = arith.addf %439, %457 : vector<8x48xf32>
    %c3_288 = arith.constant 3 : index
    %c0_289 = arith.constant 0 : index
    %c0_290 = arith.constant 0 : index
    %459 = vector.load %arg1[%c3_288, %c0_289, %c0_290] : memref<6x48x8xf32, #tpu.memory_space<vmem>>, vector<1x12x8xf32>
    %460 = vector.shape_cast %459 : vector<1x12x8xf32> to vector<12x8xf32>
    %cst_291 = arith.constant dense<0.000000e+00> : vector<8x8xf32>
    %461 = tpu.matmul %351, %460, %cst_291 {dimension_numbers = #tpu.dot_dimension_numbers<[1], [0], [0], [1], [0, 0, 1, 1], [], []>} : vector<8x12xf32>, vector<12x8xf32>, vector<8x8xf32> -> vector<8x8xf32>
    %c3_292 = arith.constant 3 : index
    %c12_293 = arith.constant 12 : index
    %c0_294 = arith.constant 0 : index
    %462 = vector.load %arg1[%c3_292, %c12_293, %c0_294] : memref<6x48x8xf32, #tpu.memory_space<vmem>>, vector<1x12x8xf32>
    %463 = vector.shape_cast %462 : vector<1x12x8xf32> to vector<12x8xf32>
    %cst_295 = arith.constant dense<0.000000e+00> : vector<8x8xf32>
    %464 = tpu.matmul %368, %463, %cst_295 {dimension_numbers = #tpu.dot_dimension_numbers<[1], [0], [0], [1], [0, 0, 1, 1], [], []>} : vector<8x12xf32>, vector<12x8xf32>, vector<8x8xf32> -> vector<8x8xf32>
    %465 = arith.addf %461, %464 : vector<8x8xf32>
    %c3_296 = arith.constant 3 : index
    %c24_297 = arith.constant 24 : index
    %c0_298 = arith.constant 0 : index
    %466 = vector.load %arg1[%c3_296, %c24_297, %c0_298] : memref<6x48x8xf32, #tpu.memory_space<vmem>>, vector<1x12x8xf32>
    %467 = vector.shape_cast %466 : vector<1x12x8xf32> to vector<12x8xf32>
    %cst_299 = arith.constant dense<0.000000e+00> : vector<8x8xf32>
    %468 = tpu.matmul %385, %467, %cst_299 {dimension_numbers = #tpu.dot_dimension_numbers<[1], [0], [0], [1], [0, 0, 1, 1], [], []>} : vector<8x12xf32>, vector<12x8xf32>, vector<8x8xf32> -> vector<8x8xf32>
    %469 = arith.addf %465, %468 : vector<8x8xf32>
    %c3_300 = arith.constant 3 : index
    %c36_301 = arith.constant 36 : index
    %c0_302 = arith.constant 0 : index
    %470 = vector.load %arg1[%c3_300, %c36_301, %c0_302] : memref<6x48x8xf32, #tpu.memory_space<vmem>>, vector<1x12x8xf32>
    %471 = vector.shape_cast %470 : vector<1x12x8xf32> to vector<12x8xf32>
    %cst_303 = arith.constant dense<0.000000e+00> : vector<8x8xf32>
    %472 = tpu.matmul %402, %471, %cst_303 {dimension_numbers = #tpu.dot_dimension_numbers<[1], [0], [0], [1], [0, 0, 1, 1], [], []>} : vector<8x12xf32>, vector<12x8xf32>, vector<8x8xf32> -> vector<8x8xf32>
    %473 = arith.addf %469, %472 : vector<8x8xf32>
    %474 = tpu.transpose %473, [1, 0] : vector<8x8xf32> -> vector<8x8xf32>
    %475 = vector.extract_strided_slice %20 {offsets = [24, 0], sizes = [8, 48], strides = [1, 1]} : vector<48x48xf32> to vector<8x48xf32>
    %cst_304 = arith.constant dense<0.000000e+00> : vector<8x48xf32>
    %476 = tpu.matmul %474, %475, %cst_304 {dimension_numbers = #tpu.dot_dimension_numbers<[1], [0], [0], [1], [0, 0, 1, 1], [], []>} : vector<8x8xf32>, vector<8x48xf32>, vector<8x48xf32> -> vector<8x48xf32>
    %477 = arith.addf %458, %476 : vector<8x48xf32>
    %c4_305 = arith.constant 4 : index
    %c0_306 = arith.constant 0 : index
    %c0_307 = arith.constant 0 : index
    %478 = vector.load %arg1[%c4_305, %c0_306, %c0_307] : memref<6x48x8xf32, #tpu.memory_space<vmem>>, vector<1x12x8xf32>
    %479 = vector.shape_cast %478 : vector<1x12x8xf32> to vector<12x8xf32>
    %cst_308 = arith.constant dense<0.000000e+00> : vector<8x8xf32>
    %480 = tpu.matmul %351, %479, %cst_308 {dimension_numbers = #tpu.dot_dimension_numbers<[1], [0], [0], [1], [0, 0, 1, 1], [], []>} : vector<8x12xf32>, vector<12x8xf32>, vector<8x8xf32> -> vector<8x8xf32>
    %c4_309 = arith.constant 4 : index
    %c12_310 = arith.constant 12 : index
    %c0_311 = arith.constant 0 : index
    %481 = vector.load %arg1[%c4_309, %c12_310, %c0_311] : memref<6x48x8xf32, #tpu.memory_space<vmem>>, vector<1x12x8xf32>
    %482 = vector.shape_cast %481 : vector<1x12x8xf32> to vector<12x8xf32>
    %cst_312 = arith.constant dense<0.000000e+00> : vector<8x8xf32>
    %483 = tpu.matmul %368, %482, %cst_312 {dimension_numbers = #tpu.dot_dimension_numbers<[1], [0], [0], [1], [0, 0, 1, 1], [], []>} : vector<8x12xf32>, vector<12x8xf32>, vector<8x8xf32> -> vector<8x8xf32>
    %484 = arith.addf %480, %483 : vector<8x8xf32>
    %c4_313 = arith.constant 4 : index
    %c24_314 = arith.constant 24 : index
    %c0_315 = arith.constant 0 : index
    %485 = vector.load %arg1[%c4_313, %c24_314, %c0_315] : memref<6x48x8xf32, #tpu.memory_space<vmem>>, vector<1x12x8xf32>
    %486 = vector.shape_cast %485 : vector<1x12x8xf32> to vector<12x8xf32>
    %cst_316 = arith.constant dense<0.000000e+00> : vector<8x8xf32>
    %487 = tpu.matmul %385, %486, %cst_316 {dimension_numbers = #tpu.dot_dimension_numbers<[1], [0], [0], [1], [0, 0, 1, 1], [], []>} : vector<8x12xf32>, vector<12x8xf32>, vector<8x8xf32> -> vector<8x8xf32>
    %488 = arith.addf %484, %487 : vector<8x8xf32>
    %c4_317 = arith.constant 4 : index
    %c36_318 = arith.constant 36 : index
    %c0_319 = arith.constant 0 : index
    %489 = vector.load %arg1[%c4_317, %c36_318, %c0_319] : memref<6x48x8xf32, #tpu.memory_space<vmem>>, vector<1x12x8xf32>
    %490 = vector.shape_cast %489 : vector<1x12x8xf32> to vector<12x8xf32>
    %cst_320 = arith.constant dense<0.000000e+00> : vector<8x8xf32>
    %491 = tpu.matmul %402, %490, %cst_320 {dimension_numbers = #tpu.dot_dimension_numbers<[1], [0], [0], [1], [0, 0, 1, 1], [], []>} : vector<8x12xf32>, vector<12x8xf32>, vector<8x8xf32> -> vector<8x8xf32>
    %492 = arith.addf %488, %491 : vector<8x8xf32>
    %493 = tpu.transpose %492, [1, 0] : vector<8x8xf32> -> vector<8x8xf32>
    %494 = vector.extract_strided_slice %20 {offsets = [32, 0], sizes = [8, 48], strides = [1, 1]} : vector<48x48xf32> to vector<8x48xf32>
    %cst_321 = arith.constant dense<0.000000e+00> : vector<8x48xf32>
    %495 = tpu.matmul %493, %494, %cst_321 {dimension_numbers = #tpu.dot_dimension_numbers<[1], [0], [0], [1], [0, 0, 1, 1], [], []>} : vector<8x8xf32>, vector<8x48xf32>, vector<8x48xf32> -> vector<8x48xf32>
    %496 = arith.addf %477, %495 : vector<8x48xf32>
    %c5_322 = arith.constant 5 : index
    %c0_323 = arith.constant 0 : index
    %c0_324 = arith.constant 0 : index
    %497 = vector.load %arg1[%c5_322, %c0_323, %c0_324] : memref<6x48x8xf32, #tpu.memory_space<vmem>>, vector<1x12x8xf32>
    %498 = vector.shape_cast %497 : vector<1x12x8xf32> to vector<12x8xf32>
    %cst_325 = arith.constant dense<0.000000e+00> : vector<8x8xf32>
    %499 = tpu.matmul %351, %498, %cst_325 {dimension_numbers = #tpu.dot_dimension_numbers<[1], [0], [0], [1], [0, 0, 1, 1], [], []>} : vector<8x12xf32>, vector<12x8xf32>, vector<8x8xf32> -> vector<8x8xf32>
    %c5_326 = arith.constant 5 : index
    %c12_327 = arith.constant 12 : index
    %c0_328 = arith.constant 0 : index
    %500 = vector.load %arg1[%c5_326, %c12_327, %c0_328] : memref<6x48x8xf32, #tpu.memory_space<vmem>>, vector<1x12x8xf32>
    %501 = vector.shape_cast %500 : vector<1x12x8xf32> to vector<12x8xf32>
    %cst_329 = arith.constant dense<0.000000e+00> : vector<8x8xf32>
    %502 = tpu.matmul %368, %501, %cst_329 {dimension_numbers = #tpu.dot_dimension_numbers<[1], [0], [0], [1], [0, 0, 1, 1], [], []>} : vector<8x12xf32>, vector<12x8xf32>, vector<8x8xf32> -> vector<8x8xf32>
    %503 = arith.addf %499, %502 : vector<8x8xf32>
    %c5_330 = arith.constant 5 : index
    %c24_331 = arith.constant 24 : index
    %c0_332 = arith.constant 0 : index
    %504 = vector.load %arg1[%c5_330, %c24_331, %c0_332] : memref<6x48x8xf32, #tpu.memory_space<vmem>>, vector<1x12x8xf32>
    %505 = vector.shape_cast %504 : vector<1x12x8xf32> to vector<12x8xf32>
    %cst_333 = arith.constant dense<0.000000e+00> : vector<8x8xf32>
    %506 = tpu.matmul %385, %505, %cst_333 {dimension_numbers = #tpu.dot_dimension_numbers<[1], [0], [0], [1], [0, 0, 1, 1], [], []>} : vector<8x12xf32>, vector<12x8xf32>, vector<8x8xf32> -> vector<8x8xf32>
    %507 = arith.addf %503, %506 : vector<8x8xf32>
    %c5_334 = arith.constant 5 : index
    %c36_335 = arith.constant 36 : index
    %c0_336 = arith.constant 0 : index
    %508 = vector.load %arg1[%c5_334, %c36_335, %c0_336] : memref<6x48x8xf32, #tpu.memory_space<vmem>>, vector<1x12x8xf32>
    %509 = vector.shape_cast %508 : vector<1x12x8xf32> to vector<12x8xf32>
    %cst_337 = arith.constant dense<0.000000e+00> : vector<8x8xf32>
    %510 = tpu.matmul %402, %509, %cst_337 {dimension_numbers = #tpu.dot_dimension_numbers<[1], [0], [0], [1], [0, 0, 1, 1], [], []>} : vector<8x12xf32>, vector<12x8xf32>, vector<8x8xf32> -> vector<8x8xf32>
    %511 = arith.addf %507, %510 : vector<8x8xf32>
    %512 = tpu.transpose %511, [1, 0] : vector<8x8xf32> -> vector<8x8xf32>
    %513 = vector.extract_strided_slice %20 {offsets = [40, 0], sizes = [8, 48], strides = [1, 1]} : vector<48x48xf32> to vector<8x48xf32>
    %cst_338 = arith.constant dense<0.000000e+00> : vector<8x48xf32>
    %514 = tpu.matmul %512, %513, %cst_338 {dimension_numbers = #tpu.dot_dimension_numbers<[1], [0], [0], [1], [0, 0, 1, 1], [], []>} : vector<8x8xf32>, vector<8x48xf32>, vector<8x48xf32> -> vector<8x48xf32>
    %515 = arith.addf %496, %514 : vector<8x48xf32>
    %516 = arith.addf %515, %331 : vector<8x48xf32>
    %cst_339 = arith.constant dense<0.000000e+00> : vector<8xf32>
    %517 = vector.multi_reduction <add>, %516, %cst_339 [1] : vector<8x48xf32> to vector<8xf32>
    %518 = vector.shape_cast %517 : vector<8xf32> to vector<8x1xf32>
    %cst_340 = arith.constant 4.800000e+01 : f32
    %519 = vector.broadcast %cst_340 : f32 to vector<8x1xf32>
    %520 = arith.divf %518, %519 : vector<8x1xf32>
    %521 = vector.broadcast %520 : vector<8x1xf32> to vector<8x48xf32>
    %522 = arith.subf %516, %521 : vector<8x48xf32>
    %523 = arith.mulf %522, %522 : vector<8x48xf32>
    %cst_341 = arith.constant dense<0.000000e+00> : vector<8xf32>
    %524 = vector.multi_reduction <add>, %523, %cst_341 [1] : vector<8x48xf32> to vector<8xf32>
    %525 = vector.shape_cast %524 : vector<8xf32> to vector<8x1xf32>
    %cst_342 = arith.constant 4.800000e+01 : f32
    %526 = vector.broadcast %cst_342 : f32 to vector<8x1xf32>
    %527 = arith.divf %525, %526 : vector<8x1xf32>
    %528 = vector.broadcast %520 : vector<8x1xf32> to vector<8x48xf32>
    %529 = arith.subf %516, %528 : vector<8x48xf32>
    %cst_343 = arith.constant 9.99999974E-6 : f32
    %530 = vector.broadcast %cst_343 : f32 to vector<8x1xf32>
    %531 = arith.addf %527, %530 : vector<8x1xf32>
    %532 = math.rsqrt %531 : vector<8x1xf32>
    %533 = vector.broadcast %532 : vector<8x1xf32> to vector<8x48xf32>
    %534 = arith.mulf %529, %533 : vector<8x48xf32>
    %535 = vector.broadcast %17 : vector<1x48xf32> to vector<8x48xf32>
    %536 = arith.mulf %534, %535 : vector<8x48xf32>
    %537 = vector.broadcast %16 : vector<1x48xf32> to vector<8x48xf32>
    %538 = arith.addf %536, %537 : vector<8x48xf32>
    %cst_344 = arith.constant dense<0.000000e+00> : vector<8x48xf32>
    %539 = tpu.matmul %538, %15, %cst_344 {dimension_numbers = #tpu.dot_dimension_numbers<[1], [0], [0], [1], [0, 0, 1, 1], [], []>} : vector<8x48xf32>, vector<48x48xf32>, vector<8x48xf32> -> vector<8x48xf32>
    %540 = vector.broadcast %14 : vector<1x48xf32> to vector<8x48xf32>
    %541 = arith.addf %539, %540 : vector<8x48xf32>
    %542 = arith.addf %541, %538 : vector<8x48xf32>
    %cst_345 = arith.constant dense<0.000000e+00> : vector<8xf32>
    %543 = vector.multi_reduction <add>, %542, %cst_345 [1] : vector<8x48xf32> to vector<8xf32>
    %544 = vector.shape_cast %543 : vector<8xf32> to vector<8x1xf32>
    %cst_346 = arith.constant 4.800000e+01 : f32
    %545 = vector.broadcast %cst_346 : f32 to vector<8x1xf32>
    %546 = arith.divf %544, %545 : vector<8x1xf32>
    %547 = vector.broadcast %546 : vector<8x1xf32> to vector<8x48xf32>
    %548 = arith.subf %542, %547 : vector<8x48xf32>
    %549 = arith.mulf %548, %548 : vector<8x48xf32>
    %cst_347 = arith.constant dense<0.000000e+00> : vector<8xf32>
    %550 = vector.multi_reduction <add>, %549, %cst_347 [1] : vector<8x48xf32> to vector<8xf32>
    %551 = vector.shape_cast %550 : vector<8xf32> to vector<8x1xf32>
    %cst_348 = arith.constant 4.800000e+01 : f32
    %552 = vector.broadcast %cst_348 : f32 to vector<8x1xf32>
    %553 = arith.divf %551, %552 : vector<8x1xf32>
    %554 = vector.broadcast %546 : vector<8x1xf32> to vector<8x48xf32>
    %555 = arith.subf %542, %554 : vector<8x48xf32>
    %cst_349 = arith.constant 9.99999974E-6 : f32
    %556 = vector.broadcast %cst_349 : f32 to vector<8x1xf32>
    %557 = arith.addf %553, %556 : vector<8x1xf32>
    %558 = math.rsqrt %557 : vector<8x1xf32>
    %559 = vector.broadcast %558 : vector<8x1xf32> to vector<8x48xf32>
    %560 = arith.mulf %555, %559 : vector<8x48xf32>
    %561 = vector.broadcast %19 : vector<1x48xf32> to vector<8x48xf32>
    %562 = arith.mulf %560, %561 : vector<8x48xf32>
    %563 = vector.broadcast %18 : vector<1x48xf32> to vector<8x48xf32>
    %564 = arith.addf %562, %563 : vector<8x48xf32>
    %cst_350 = arith.constant dense<0.000000e+00> : vector<8x32xf32>
    %565 = tpu.matmul %564, %27, %cst_350 {dimension_numbers = #tpu.dot_dimension_numbers<[1], [0], [0], [1], [0, 0, 1, 1], [], []>} : vector<8x48xf32>, vector<48x32xf32>, vector<8x32xf32> -> vector<8x32xf32>
    %566 = vector.broadcast %26 : vector<1x32xf32> to vector<8x32xf32>
    %567 = arith.addf %565, %566 : vector<8x32xf32>
    %cst_351 = arith.constant dense<0.000000e+00> : vector<8x48xf32>
    %568 = tpu.matmul %567, %29, %cst_351 {dimension_numbers = #tpu.dot_dimension_numbers<[1], [0], [0], [1], [0, 0, 1, 1], [], []>} : vector<8x32xf32>, vector<32x48xf32>, vector<8x48xf32> -> vector<8x48xf32>
    %569 = vector.broadcast %28 : vector<1x48xf32> to vector<8x48xf32>
    %570 = arith.addf %568, %569 : vector<8x48xf32>
    %cst_352 = arith.constant 5.000000e-01 : f32
    %571 = vector.broadcast %cst_352 : f32 to vector<8x48xf32>
    %572 = arith.mulf %570, %571 : vector<8x48xf32>
    %cst_353 = arith.constant 0.707106769 : f32
    %573 = vector.broadcast %cst_353 : f32 to vector<8x48xf32>
    %574 = arith.mulf %570, %573 : vector<8x48xf32>
    %cst_354 = arith.constant 0.000000e+00 : f32
    %575 = vector.broadcast %cst_354 : f32 to vector<8x48xf32>
    %576 = arith.cmpf oge, %574, %575 : vector<8x48xf32>
    %cst_355 = arith.constant 1.000000e+00 : f32
    %cst_356 = arith.constant -1.000000e+00 : f32
    %577 = vector.broadcast %cst_355 : f32 to vector<8x48xf32>
    %578 = vector.broadcast %cst_356 : f32 to vector<8x48xf32>
    %579 = arith.select %576, %577, %578 : vector<8x48xi1>, vector<8x48xf32>
    %580 = math.absf %574 : vector<8x48xf32>
    %cst_357 = arith.constant 0.327591091 : f32
    %581 = vector.broadcast %cst_357 : f32 to vector<8x48xf32>
    %582 = arith.mulf %581, %580 : vector<8x48xf32>
    %cst_358 = arith.constant 1.000000e+00 : f32
    %583 = vector.broadcast %cst_358 : f32 to vector<8x48xf32>
    %584 = arith.addf %583, %582 : vector<8x48xf32>
    %cst_359 = arith.constant 1.000000e+00 : f32
    %585 = vector.broadcast %cst_359 : f32 to vector<8x48xf32>
    %586 = arith.divf %585, %584 : vector<8x48xf32>
    %cst_360 = arith.constant 1.06140542 : f32
    %587 = vector.broadcast %cst_360 : f32 to vector<8x48xf32>
    %588 = arith.mulf %587, %586 : vector<8x48xf32>
    %cst_361 = arith.constant -1.45315206 : f32
    %589 = vector.broadcast %cst_361 : f32 to vector<8x48xf32>
    %590 = arith.addf %588, %589 : vector<8x48xf32>
    %591 = arith.mulf %590, %586 : vector<8x48xf32>
    %cst_362 = arith.constant 1.42141378 : f32
    %592 = vector.broadcast %cst_362 : f32 to vector<8x48xf32>
    %593 = arith.addf %591, %592 : vector<8x48xf32>
    %594 = arith.mulf %593, %586 : vector<8x48xf32>
    %cst_363 = arith.constant -0.284496725 : f32
    %595 = vector.broadcast %cst_363 : f32 to vector<8x48xf32>
    %596 = arith.addf %594, %595 : vector<8x48xf32>
    %597 = arith.mulf %596, %586 : vector<8x48xf32>
    %cst_364 = arith.constant 0.254829586 : f32
    %598 = vector.broadcast %cst_364 : f32 to vector<8x48xf32>
    %599 = arith.addf %597, %598 : vector<8x48xf32>
    %600 = arith.mulf %599, %586 : vector<8x48xf32>
    %cst_365 = arith.constant 0.000000e+00 : f32
    %601 = vector.broadcast %cst_365 : f32 to vector<8x48xf32>
    %602 = arith.subf %601, %580 : vector<8x48xf32>
    %603 = arith.mulf %602, %580 : vector<8x48xf32>
    %604 = math.exp %603 : vector<8x48xf32>
    %605 = arith.mulf %600, %604 : vector<8x48xf32>
    %cst_366 = arith.constant 1.000000e+00 : f32
    %606 = vector.broadcast %cst_366 : f32 to vector<8x48xf32>
    %607 = arith.subf %606, %605 : vector<8x48xf32>
    %608 = arith.mulf %579, %607 : vector<8x48xf32>
    %cst_367 = arith.constant 1.000000e+00 : f32
    %609 = vector.broadcast %cst_367 : f32 to vector<8x48xf32>
    %610 = arith.addf %609, %608 : vector<8x48xf32>
    %611 = arith.mulf %572, %610 : vector<8x48xf32>
    %cst_368 = arith.constant dense<0.000000e+00> : vector<48xf32>
    %612 = vector.multi_reduction <add>, %611, %cst_368 [0] : vector<8x48xf32> to vector<48xf32>
    %613 = vector.shape_cast %612 : vector<48xf32> to vector<1x48xf32>
    %cst_369 = arith.constant 8.000000e+00 : f32
    %614 = vector.broadcast %cst_369 : f32 to vector<1x48xf32>
    %615 = arith.divf %613, %614 : vector<1x48xf32>
    %616 = vector.broadcast %615 : vector<1x48xf32> to vector<8x48xf32>
    %617 = arith.subf %611, %616 : vector<8x48xf32>
    %618 = arith.mulf %617, %617 : vector<8x48xf32>
    %cst_370 = arith.constant dense<0.000000e+00> : vector<48xf32>
    %619 = vector.multi_reduction <add>, %618, %cst_370 [0] : vector<8x48xf32> to vector<48xf32>
    %620 = vector.shape_cast %619 : vector<48xf32> to vector<1x48xf32>
    %cst_371 = arith.constant 8.000000e+00 : f32
    %621 = vector.broadcast %cst_371 : f32 to vector<1x48xf32>
    %622 = arith.divf %620, %621 : vector<1x48xf32>
    %623 = vector.broadcast %615 : vector<1x48xf32> to vector<8x48xf32>
    %624 = arith.subf %611, %623 : vector<8x48xf32>
    %cst_372 = arith.constant 9.99999974E-6 : f32
    %625 = vector.broadcast %cst_372 : f32 to vector<1x48xf32>
    %626 = arith.addf %622, %625 : vector<1x48xf32>
    %627 = math.rsqrt %626 : vector<1x48xf32>
    %628 = vector.broadcast %627 : vector<1x48xf32> to vector<8x48xf32>
    %629 = arith.mulf %624, %628 : vector<8x48xf32>
    %630 = vector.broadcast %3 : vector<1x48xf32> to vector<8x48xf32>
    %631 = arith.mulf %629, %630 : vector<8x48xf32>
    %632 = vector.broadcast %2 : vector<1x48xf32> to vector<8x48xf32>
    %633 = arith.addf %631, %632 : vector<8x48xf32>
    %cst_373 = arith.constant dense<0.000000e+00> : vector<8x64xf32>
    %634 = tpu.matmul %633, %31, %cst_373 {dimension_numbers = #tpu.dot_dimension_numbers<[1], [0], [0], [1], [0, 0, 1, 1], [], []>} : vector<8x48xf32>, vector<48x64xf32>, vector<8x64xf32> -> vector<8x64xf32>
    %635 = vector.broadcast %30 : vector<1x64xf32> to vector<8x64xf32>
    %636 = arith.addf %634, %635 : vector<8x64xf32>
    %c0_374 = arith.constant 0 : index
    %c0_375 = arith.constant 0 : index
    %637 = vector.load %arg34[%c0_374, %c0_375] : memref<8x32xf32, #tpu.memory_space<vmem>>, vector<8x32xf32>
    tpu.vector_store %arg34[%c0_374, %c0_375], %567 {strides = array<i32>} : memref<8x32xf32, #tpu.memory_space<vmem>>, vector<8x32xf32>,
    %c0_376 = arith.constant 0 : index
    %c0_377 = arith.constant 0 : index
    %638 = vector.load %arg35[%c0_376, %c0_377] : memref<8x64xf32, #tpu.memory_space<vmem>>, vector<8x64xf32>
    tpu.vector_store %arg35[%c0_376, %c0_377], %636 {strides = array<i32>} : memref<8x64xf32, #tpu.memory_space<vmem>>, vector<8x64xf32>,
    return
  }
}

</mosaic_0001>

<llo_original>
// kernel: ae1_forward.1
$region0: #{ae1_forward.1}
  #allocation0 [shape = 'u32[]', space=smem, size = 0x4, offset = 0x4, fixed_abs, tag = 'smem constant byte address 0x4 - core index']
  #allocation1 [shape = 'u32[72,128]{1,0:T(1,128)}', space=vmem, size = 0x9000, scoped, tag = 'internal scratch']
  %s0 = inlined_call_operand.smem [shape: u32[36], index: -1, kind: input, shape index: {}]
  %s1 = sld [smem:[%s0]]
  %s2 = scalar_lea.smem %s0, 1
  %s3 = sld [smem:[%s2]]
  %s4 = scalar_lea.smem %s0, 2
  %s5 = sld [smem:[%s4]]
  %s6 = scalar_lea.smem %s0, 3
  %s7 = sld [smem:[%s6]]
  %s8 = scalar_lea.smem %s0, 4
  %s9 = sld [smem:[%s8]]
  %s10 = scalar_lea.smem %s0, 5
  %s11 = sld [smem:[%s10]]
  %s12 = scalar_lea.smem %s0, 6
  %s13 = sld [smem:[%s12]]
  %s14 = scalar_lea.smem %s0, 7
  %s15 = sld [smem:[%s14]]
  %s16 = scalar_lea.smem %s0, 8
  %s17 = sld [smem:[%s16]]
  %s18 = scalar_lea.smem %s0, 9
  %s19 = sld [smem:[%s18]]
  %s20 = scalar_lea.smem %s0, 10
  %s21 = sld [smem:[%s20]]
  %s22 = scalar_lea.smem %s0, 11
  %s23 = sld [smem:[%s22]]
  %s24 = scalar_lea.smem %s0, 12
  %s25 = sld [smem:[%s24]]
  %s26 = scalar_lea.smem %s0, 13
  %s27 = sld [smem:[%s26]]
  %s28 = scalar_lea.smem %s0, 14
  %s29 = sld [smem:[%s28]]
  %s30 = scalar_lea.smem %s0, 15
  %s31 = sld [smem:[%s30]]
  %s32 = scalar_lea.smem %s0, 16
  %s33 = sld [smem:[%s32]]
  %s34 = scalar_lea.smem %s0, 17
  %s35 = sld [smem:[%s34]]
  %s36 = scalar_lea.smem %s0, 18
  %s37 = sld [smem:[%s36]]
  %s38 = scalar_lea.smem %s0, 19
  %s39 = sld [smem:[%s38]]
  %s40 = scalar_lea.smem %s0, 20
  %s41 = sld [smem:[%s40]]
  %s42 = scalar_lea.smem %s0, 21
  %s43 = sld [smem:[%s42]]
  %s44 = scalar_lea.smem %s0, 22
  %s45 = sld [smem:[%s44]]
  %s46 = scalar_lea.smem %s0, 23
  %s47 = sld [smem:[%s46]]
  %s48 = scalar_lea.smem %s0, 24
  %s49 = sld [smem:[%s48]]
  %s50 = scalar_lea.smem %s0, 25
  %s51 = sld [smem:[%s50]]
  %s52 = scalar_lea.smem %s0, 26
  %s53 = sld [smem:[%s52]]
  %s54 = scalar_lea.smem %s0, 27
  %s55 = sld [smem:[%s54]]
  %s56 = scalar_lea.smem %s0, 28
  %s57 = sld [smem:[%s56]]
  %s58 = scalar_lea.smem %s0, 29
  %s59 = sld [smem:[%s58]]
  %s60 = scalar_lea.smem %s0, 30
  %s61 = sld [smem:[%s60]]
  %s62 = scalar_lea.smem %s0, 31
  %s63 = sld [smem:[%s62]]
  %s64 = scalar_lea.smem %s0, 32
  %s65 = sld [smem:[%s64]]
  %s66 = scalar_lea.smem %s0, 33
  %s67 = sld [smem:[%s66]]
  %s68 = scalar_lea.smem %s0, 34
  %s69 = sld [smem:[%s68]]
  %s70 = scalar_lea.smem %s0, 35
  %s71 = sld [smem:[%s70]]
  %72 = xla_tuple %s69, %s71
  %s73 = sld [smem:[#allocation0]]
  $region218: #{ae1_forward.1} parent=0
    _
  %s75 = ssub.s32 1, %s73
  %s76 = scalar_select 0, %s75, %s73
  $region1: #{ae1_forward.1} parent=0
    #allocation2 [shape = 'u8[512]{0}', space=vmem, size = 0x400, scoped, tag = 'input window, operand 6, single buffered']
    #allocation3 [shape = 's32[1]{0}', space=sflag, size = 0x4, scoped, tag = 'scoped memory for ae1_forward.1']
    #allocation4 [shape = 's32[1]{0}', space=sflag, size = 0x4, scoped, tag = 'scoped memory for ae1_forward.1']
    #allocation5 [shape = 'u8[512]{0}', space=vmem, size = 0x400, scoped, tag = 'input window, operand 8, single buffered']
    #allocation6 [shape = 's32[1]{0}', space=sflag, size = 0x4, scoped, tag = 'scoped memory for ae1_forward.1']
    #allocation7 [shape = 'u8[512]{0}', space=vmem, size = 0x400, scoped, tag = 'input window, operand 9, single buffered']
    #allocation8 [shape = 'u8[512]{0}', space=vmem, size = 0x400, scoped, tag = 'input window, operand 10, single buffered']
    #allocation9 [shape = 's32[1]{0}', space=sflag, size = 0x4, scoped, tag = 'scoped memory for ae1_forward.1']
    #allocation10 [shape = 'u8[512]{0}', space=vmem, size = 0x400, scoped, tag = 'input window, operand 11, single buffered']
    #allocation11 [shape = 'u8[512]{0}', space=vmem, size = 0x400, scoped, tag = 'input window, operand 16, single buffered']
    #allocation12 [shape = 's32[1]{0}', space=sflag, size = 0x4, scoped, tag = 'scoped memory for ae1_forward.1']
    #allocation13 [shape = 'u8[512]{0}', space=vmem, size = 0x400, scoped, tag = 'input window, operand 18, single buffered']
    #allocation14 [shape = 'u8[512]{0}', space=vmem, size = 0x400, scoped, tag = 'input window, operand 19, single buffered']
    #allocation15 [shape = 's32[1]{0}', space=sflag, size = 0x4, scoped, tag = 'scoped memory for ae1_forward.1']
    #allocation16 [shape = 'u8[512]{0}', space=vmem, size = 0x400, scoped, tag = 'input window, operand 20, single buffered']
    #allocation17 [shape = 'u8[512]{0}', space=vmem, size = 0x400, scoped, tag = 'input window, operand 21, single buffered']
    #allocation18 [shape = 's32[1]{0}', space=sflag, size = 0x4, scoped, tag = 'scoped memory for ae1_forward.1']
    #allocation19 [shape = 'u8[24576]{0}', space=vmem, size = 0x6000, scoped, tag = 'input window, operand 25, single buffered']
    #allocation20 [shape = 'u8[512]{0}', space=vmem, size = 0x400, scoped, tag = 'input window, operand 26, single buffered']
    #allocation21 [shape = 's32[1]{0}', space=sflag, size = 0x4, scoped, tag = 'scoped memory for ae1_forward.1']
    #allocation22 [shape = 'u8[512]{0}', space=vmem, size = 0x400, scoped, tag = 'input window, operand 28, single buffered']
    #allocation23 [shape = 'u8[16384]{0}', space=vmem, size = 0x4000, scoped, tag = 'input window, operand 31, single buffered']
    #allocation24 [shape = 's32[1]{0}', space=sflag, size = 0x4, scoped, tag = 'scoped memory for ae1_forward.1']
    #allocation25 [shape = 'u8[512]{0}', space=vmem, size = 0x400, scoped, tag = 'input window, operand 32, single buffered']
    #allocation26 [shape = 'u8[24576]{0}', space=vmem, size = 0x6000, scoped, tag = 'input window, operand 33, single buffered']
    #allocation27 [shape = 's32[1]{0}', space=sflag, size = 0x4, scoped, tag = 'scoped memory for ae1_forward.1']
    #allocation28 [shape = 'u8[4096]{0}', space=vmem, size = 0x1000, scoped, tag = 'output window, operand 0, single buffered']
    #allocation29 [shape = 'u8[4096]{0}', space=vmem, size = 0x1000, scoped, tag = 'output window, operand 1, single buffered']
    #allocation30 [shape = 's32[1]{0}', space=sflag, size = 0x4, scoped, tag = 'scoped memory for ae1_forward.1']
    %77 = vsyncpa [#allocation3], 0
    %78 = vsyncpa [#allocation6], 0
    %79 = vsyncpa [#allocation9], 0
    %80 = vsyncpa [#allocation12], 0
    %81 = vsyncpa [#allocation15], 0
    %82 = vsyncpa [#allocation18], 0
    %83 = vsyncpa [#allocation21], 0
    %84 = vsyncpa [#allocation24], 0
    %85 = vsyncpa [#allocation27], 0
    %86 = vsyncpa [#allocation4], 0
    %87 = vsyncpa [#allocation30], 0
    // Predicated region
    $region2: #{ae1_forward.1} parent=1 // pred_check
      _
    $region3: #{ae1_forward.1} parent=1 // pred_check_branch
      %89 = sbr.rel (0) target = $region5
    $region4: #{ae1_forward.1} parent=1 // pred_region
      _
    $region5: #{ae1_forward.1} parent=1 // pred_fallthru
      _
    // Predicated region
    $region6: #{ae1_forward.1} parent=1 // pred_check
      _
    $region7: #{ae1_forward.1} parent=1 // pred_check_branch
      %91 = sbr.rel (0) target = $region9
    $region8: #{ae1_forward.1} parent=1 // pred_region
      _
    $region9: #{ae1_forward.1} parent=1 // pred_fallthru
      _
    // Predicated region
    $region10: #{ae1_forward.1} parent=1 // pred_check
      _
    $region11: #{ae1_forward.1} parent=1 // pred_check_branch
      %93 = sbr.rel (0) target = $region13
    $region12: #{ae1_forward.1} parent=1 // pred_region
      _
    $region13: #{ae1_forward.1} parent=1 // pred_fallthru
      _
    // Predicated region
    $region14: #{ae1_forward.1} parent=1 // pred_check
      _
    $region15: #{ae1_forward.1} parent=1 // pred_check_branch
      %95 = sbr.rel (0) target = $region17
    $region16: #{ae1_forward.1} parent=1 // pred_region
      _
    $region17: #{ae1_forward.1} parent=1 // pred_fallthru
      _
    // Predicated region
    $region18: #{ae1_forward.1} parent=1 // pred_check
      _
    $region19: #{ae1_forward.1} parent=1 // pred_check_branch
      %97 = sbr.rel (0) target = $region21
    $region20: #{ae1_forward.1} parent=1 // pred_region
      _
    $region21: #{ae1_forward.1} parent=1 // pred_fallthru
      _
    // Predicated region
    $region22: #{ae1_forward.1} parent=1 // pred_check
      _
    $region23: #{ae1_forward.1} parent=1 // pred_check_branch
      %99 = sbr.rel (0) target = $region25
    $region24: #{ae1_forward.1} parent=1 // pred_region
      _
    $region25: #{ae1_forward.1} parent=1 // pred_fallthru
      _
    // Predicated region
    $region26: #{ae1_forward.1} parent=1 // pred_check
      _
    $region27: #{ae1_forward.1} parent=1 // pred_check_branch
      %101 = sbr.rel (0) target = $region29
    $region28: #{ae1_forward.1} parent=1 // pred_region
      %103 = vsyncadd [#allocation3], 0
      %s105 = sshll.u32 %s13, 4
      %s106 = int_to_ptr.hbm [resolvable:$true] %s105
      %s107 = sshll.u32 [#allocation2], 4
      %s108 = int_to_ptr.vmem [resolvable:$true] %s107
      %110 = dma.hbm_to_vmem [thread:$0]  %s106, 16, %s108, [#allocation3]
    $region29: #{ae1_forward.1} parent=1 // pred_fallthru
      _
    // Predicated region
    $region30: #{ae1_forward.1} parent=1 // pred_check
      _
    $region31: #{ae1_forward.1} parent=1 // pred_check_branch
      %112 = sbr.rel (0) target = $region33
    $region32: #{ae1_forward.1} parent=1 // pred_region
      _
    $region33: #{ae1_forward.1} parent=1 // pred_fallthru
      _
    // Predicated region
    $region34: #{ae1_forward.1} parent=1 // pred_check
      _
    $region35: #{ae1_forward.1} parent=1 // pred_check_branch
      %114 = sbr.rel (0) target = $region37
    $region36: #{ae1_forward.1} parent=1 // pred_region
      %116 = vsyncadd [#allocation6], 0
      %s118 = sshll.u32 %s17, 4
      %s119 = int_to_ptr.hbm [resolvable:$true] %s118
      %s120 = sshll.u32 [#allocation5], 4
      %s121 = int_to_ptr.vmem [resolvable:$true] %s120
      %123 = dma.hbm_to_vmem [thread:$0]  %s119, 16, %s121, [#allocation6]
    $region37: #{ae1_forward.1} parent=1 // pred_fallthru
      _
    // Predicated region
    $region38: #{ae1_forward.1} parent=1 // pred_check
      _
    $region39: #{ae1_forward.1} parent=1 // pred_check_branch
      %125 = sbr.rel (0) target = $region41
    $region40: #{ae1_forward.1} parent=1 // pred_region
      %127 = vsyncadd [#allocation6], 0
      %s129 = sshll.u32 %s19, 4
      %s130 = int_to_ptr.hbm [resolvable:$true] %s129
      %s131 = sshll.u32 [#allocation7], 4
      %s132 = int_to_ptr.vmem [resolvable:$true] %s131
      %134 = dma.hbm_to_vmem [thread:$0]  %s130, 16, %s132, [#allocation6]
    $region41: #{ae1_forward.1} parent=1 // pred_fallthru
      _
    // Predicated region
    $region42: #{ae1_forward.1} parent=1 // pred_check
      _
    $region43: #{ae1_forward.1} parent=1 // pred_check_branch
      %136 = sbr.rel (0) target = $region45
    $region44: #{ae1_forward.1} parent=1 // pred_region
      %138 = vsyncadd [#allocation9], 0
      %s140 = sshll.u32 %s21, 4
      %s141 = int_to_ptr.hbm [resolvable:$true] %s140
      %s142 = sshll.u32 [#allocation8], 4
      %s143 = int_to_ptr.vmem [resolvable:$true] %s142
      %145 = dma.hbm_to_vmem [thread:$0]  %s141, 16, %s143, [#allocation9]
    $region45: #{ae1_forward.1} parent=1 // pred_fallthru
      _
    // Predicated region
    $region46: #{ae1_forward.1} parent=1 // pred_check
      _
    $region47: #{ae1_forward.1} parent=1 // pred_check_branch
      %147 = sbr.rel (0) target = $region49
    $region48: #{ae1_forward.1} parent=1 // pred_region
      %149 = vsyncadd [#allocation9], 0
      %s151 = sshll.u32 %s23, 4
      %s152 = int_to_ptr.hbm [resolvable:$true] %s151
      %s153 = sshll.u32 [#allocation10], 4
      %s154 = int_to_ptr.vmem [resolvable:$true] %s153
      %156 = dma.hbm_to_vmem [thread:$0]  %s152, 16, %s154, [#allocation9]
    $region49: #{ae1_forward.1} parent=1 // pred_fallthru
      _
    // Predicated region
    $region50: #{ae1_forward.1} parent=1 // pred_check
      _
    $region51: #{ae1_forward.1} parent=1 // pred_check_branch
      %158 = sbr.rel (0) target = $region53
    $region52: #{ae1_forward.1} parent=1 // pred_region
      _
    $region53: #{ae1_forward.1} parent=1 // pred_fallthru
      _
    // Predicated region
    $region54: #{ae1_forward.1} parent=1 // pred_check
      _
    $region55: #{ae1_forward.1} parent=1 // pred_check_branch
      %160 = sbr.rel (0) target = $region57
    $region56: #{ae1_forward.1} parent=1 // pred_region
      _
    $region57: #{ae1_forward.1} parent=1 // pred_fallthru
      _
    // Predicated region
    $region58: #{ae1_forward.1} parent=1 // pred_check
      _
    $region59: #{ae1_forward.1} parent=1 // pred_check_branch
      %162 = sbr.rel (0) target = $region61
    $region60: #{ae1_forward.1} parent=1 // pred_region
      _
    $region61: #{ae1_forward.1} parent=1 // pred_fallthru
      _
    // Predicated region
    $region62: #{ae1_forward.1} parent=1 // pred_check
      _
    $region63: #{ae1_forward.1} parent=1 // pred_check_branch
      %164 = sbr.rel (0) target = $region65
    $region64: #{ae1_forward.1} parent=1 // pred_region
      _
    $region65: #{ae1_forward.1} parent=1 // pred_fallthru
      _
    // Predicated region
    $region66: #{ae1_forward.1} parent=1 // pred_check
      _
    $region67: #{ae1_forward.1} parent=1 // pred_check_branch
      %166 = sbr.rel (0) target = $region69
    $region68: #{ae1_forward.1} parent=1 // pred_region
      %168 = vsyncadd [#allocation12], 0
      %s170 = sshll.u32 %s33, 4
      %s171 = int_to_ptr.hbm [resolvable:$true] %s170
      %s172 = sshll.u32 [#allocation11], 4
      %s173 = int_to_ptr.vmem [resolvable:$true] %s172
      %175 = dma.hbm_to_vmem [thread:$0]  %s171, 16, %s173, [#allocation12]
    $region69: #{ae1_forward.1} parent=1 // pred_fallthru
      _
    // Predicated region
    $region70: #{ae1_forward.1} parent=1 // pred_check
      _
    $region71: #{ae1_forward.1} parent=1 // pred_check_branch
      %177 = sbr.rel (0) target = $region73
    $region72: #{ae1_forward.1} parent=1 // pred_region
      _
    $region73: #{ae1_forward.1} parent=1 // pred_fallthru
      _
    // Predicated region
    $region74: #{ae1_forward.1} parent=1 // pred_check
      _
    $region75: #{ae1_forward.1} parent=1 // pred_check_branch
      %179 = sbr.rel (0) target = $region77
    $region76: #{ae1_forward.1} parent=1 // pred_region
      %181 = vsyncadd [#allocation12], 0
      %s183 = sshll.u32 %s37, 4
      %s184 = int_to_ptr.hbm [resolvable:$true] %s183
      %s185 = sshll.u32 [#allocation13], 4
      %s186 = int_to_ptr.vmem [resolvable:$true] %s185
      %188 = dma.hbm_to_vmem [thread:$0]  %s184, 16, %s186, [#allocation12]
    $region77: #{ae1_forward.1} parent=1 // pred_fallthru
      _
    // Predicated region
    $region78: #{ae1_forward.1} parent=1 // pred_check
      _
    $region79: #{ae1_forward.1} parent=1 // pred_check_branch
      %190 = sbr.rel (0) target = $region81
    $region80: #{ae1_forward.1} parent=1 // pred_region
      %192 = vsyncadd [#allocation15], 0
      %s194 = sshll.u32 %s39, 4
      %s195 = int_to_ptr.hbm [resolvable:$true] %s194
      %s196 = sshll.u32 [#allocation14], 4
      %s197 = int_to_ptr.vmem [resolvable:$true] %s196
      %199 = dma.hbm_to_vmem [thread:$0]  %s195, 16, %s197, [#allocation15]
    $region81: #{ae1_forward.1} parent=1 // pred_fallthru
      _
    // Predicated region
    $region82: #{ae1_forward.1} parent=1 // pred_check
      _
    $region83: #{ae1_forward.1} parent=1 // pred_check_branch
      %201 = sbr.rel (0) target = $region85
    $region84: #{ae1_forward.1} parent=1 // pred_region
      %203 = vsyncadd [#allocation15], 0
      %s205 = sshll.u32 %s41, 4
      %s206 = int_to_ptr.hbm [resolvable:$true] %s205
      %s207 = sshll.u32 [#allocation16], 4
      %s208 = int_to_ptr.vmem [resolvable:$true] %s207
      %210 = dma.hbm_to_vmem [thread:$0]  %s206, 16, %s208, [#allocation15]
    $region85: #{ae1_forward.1} parent=1 // pred_fallthru
      _
    // Predicated region
    $region86: #{ae1_forward.1} parent=1 // pred_check
      _
    $region87: #{ae1_forward.1} parent=1 // pred_check_branch
      %212 = sbr.rel (0) target = $region89
    $region88: #{ae1_forward.1} parent=1 // pred_region
      %214 = vsyncadd [#allocation18], 0
      %s216 = sshll.u32 %s43, 4
      %s217 = int_to_ptr.hbm [resolvable:$true] %s216
      %s218 = sshll.u32 [#allocation17], 4
      %s219 = int_to_ptr.vmem [resolvable:$true] %s218
      %221 = dma.hbm_to_vmem [thread:$0]  %s217, 16, %s219, [#allocation18]
    $region89: #{ae1_forward.1} parent=1 // pred_fallthru
      _
    // Predicated region
    $region90: #{ae1_forward.1} parent=1 // pred_check
      _
    $region91: #{ae1_forward.1} parent=1 // pred_check_branch
      %223 = sbr.rel (0) target = $region93
    $region92: #{ae1_forward.1} parent=1 // pred_region
      _
    $region93: #{ae1_forward.1} parent=1 // pred_fallthru
      _
    // Predicated region
    $region94: #{ae1_forward.1} parent=1 // pred_check
      _
    $region95: #{ae1_forward.1} parent=1 // pred_check_branch
      %225 = sbr.rel (0) target = $region97
    $region96: #{ae1_forward.1} parent=1 // pred_region
      _
    $region97: #{ae1_forward.1} parent=1 // pred_fallthru
      _
    // Predicated region
    $region98: #{ae1_forward.1} parent=1 // pred_check
      _
    $region99: #{ae1_forward.1} parent=1 // pred_check_branch
      %227 = sbr.rel (0) target = $region101
    $region100: #{ae1_forward.1} parent=1 // pred_region
      _
    $region101: #{ae1_forward.1} parent=1 // pred_fallthru
      _
    // Predicated region
    $region102: #{ae1_forward.1} parent=1 // pred_check
      _
    $region103: #{ae1_forward.1} parent=1 // pred_check_branch
      %229 = sbr.rel (0) target = $region105
    $region104: #{ae1_forward.1} parent=1 // pred_region
      %231 = vsyncadd [#allocation18], 0
      %s232 = sshll.u32 %s51, 4
      %s233 = int_to_ptr.hbm [resolvable:$true] %s232
      %s234 = sshll.u32 [#allocation19], 4
      %s235 = int_to_ptr.vmem [resolvable:$true] %s234
      %240 = dma.hbm_to_vmem [thread:$0]  %s233, 768, %s235, [#allocation18], 128, 128, 8
    $region105: #{ae1_forward.1} parent=1 // pred_fallthru
      _
    // Predicated region
    $region106: #{ae1_forward.1} parent=1 // pred_check
      _
    $region107: #{ae1_forward.1} parent=1 // pred_check_branch
      %242 = sbr.rel (0) target = $region109
    $region108: #{ae1_forward.1} parent=1 // pred_region
      %244 = vsyncadd [#allocation21], 0
      %s246 = sshll.u32 %s53, 4
      %s247 = int_to_ptr.hbm [resolvable:$true] %s246
      %s248 = sshll.u32 [#allocation20], 4
      %s249 = int_to_ptr.vmem [resolvable:$true] %s248
      %251 = dma.hbm_to_vmem [thread:$0]  %s247, 16, %s249, [#allocation21]
    $region109: #{ae1_forward.1} parent=1 // pred_fallthru
      _
    // Predicated region
    $region110: #{ae1_forward.1} parent=1 // pred_check
      _
    $region111: #{ae1_forward.1} parent=1 // pred_check_branch
      %253 = sbr.rel (0) target = $region113
    $region112: #{ae1_forward.1} parent=1 // pred_region
      _
    $region113: #{ae1_forward.1} parent=1 // pred_fallthru
      _
    // Predicated region
    $region114: #{ae1_forward.1} parent=1 // pred_check
      _
    $region115: #{ae1_forward.1} parent=1 // pred_check_branch
      %255 = sbr.rel (0) target = $region117
    $region116: #{ae1_forward.1} parent=1 // pred_region
      %257 = vsyncadd [#allocation21], 0
      %s259 = sshll.u32 %s57, 4
      %s260 = int_to_ptr.hbm [resolvable:$true] %s259
      %s261 = sshll.u32 [#allocation22], 4
      %s262 = int_to_ptr.vmem [resolvable:$true] %s261
      %264 = dma.hbm_to_vmem [thread:$0]  %s260, 16, %s262, [#allocation21]
    $region117: #{ae1_forward.1} parent=1 // pred_fallthru
      _
    // Predicated region
    $region118: #{ae1_forward.1} parent=1 // pred_check
      _
    $region119: #{ae1_forward.1} parent=1 // pred_check_branch
      %266 = sbr.rel (0) target = $region121
    $region120: #{ae1_forward.1} parent=1 // pred_region
      _
    $region121: #{ae1_forward.1} parent=1 // pred_fallthru
      _
    // Predicated region
    $region122: #{ae1_forward.1} parent=1 // pred_check
      _
    $region123: #{ae1_forward.1} parent=1 // pred_check_branch
      %268 = sbr.rel (0) target = $region125
    $region124: #{ae1_forward.1} parent=1 // pred_region
      _
    $region125: #{ae1_forward.1} parent=1 // pred_fallthru
      _
    // Predicated region
    $region126: #{ae1_forward.1} parent=1 // pred_check
      _
    $region127: #{ae1_forward.1} parent=1 // pred_check_branch
      %270 = sbr.rel (0) target = $region129
    $region128: #{ae1_forward.1} parent=1 // pred_region
      %272 = vsyncadd [#allocation24], 0
      %s273 = sshll.u32 %s63, 4
      %s274 = int_to_ptr.hbm [resolvable:$true] %s273
      %s275 = sshll.u32 [#allocation23], 4
      %s276 = int_to_ptr.vmem [resolvable:$true] %s275
      %281 = dma.hbm_to_vmem [thread:$0]  %s274, 512, %s276, [#allocation24], 128, 128, 8
    $region129: #{ae1_forward.1} parent=1 // pred_fallthru
      _
    // Predicated region
    $region130: #{ae1_forward.1} parent=1 // pred_check
      _
    $region131: #{ae1_forward.1} parent=1 // pred_check_branch
      %283 = sbr.rel (0) target = $region133
    $region132: #{ae1_forward.1} parent=1 // pred_region
      %285 = vsyncadd [#allocation24], 0
      %s287 = sshll.u32 %s65, 4
      %s288 = int_to_ptr.hbm [resolvable:$true] %s287
      %s289 = sshll.u32 [#allocation25], 4
      %s290 = int_to_ptr.vmem [resolvable:$true] %s289
      %292 = dma.hbm_to_vmem [thread:$0]  %s288, 16, %s290, [#allocation24]
    $region133: #{ae1_forward.1} parent=1 // pred_fallthru
      _
    // Predicated region
    $region134: #{ae1_forward.1} parent=1 // pred_check
      _
    $region135: #{ae1_forward.1} parent=1 // pred_check_branch
      %294 = sbr.rel (0) target = $region137
    $region136: #{ae1_forward.1} parent=1 // pred_region
      %296 = vsyncadd [#allocation27], 0
      %s297 = sshll.u32 %s67, 4
      %s298 = int_to_ptr.hbm [resolvable:$true] %s297
      %s299 = sshll.u32 [#allocation26], 4
      %s300 = int_to_ptr.vmem [resolvable:$true] %s299
      %305 = dma.hbm_to_vmem [thread:$0]  %s298, 768, %s300, [#allocation27], 128, 128, 8
    $region137: #{ae1_forward.1} parent=1 // pred_fallthru
      _
    // Predicated region
    $region138: #{ae1_forward.1} parent=1 // pred_check
      _
    $region139: #{ae1_forward.1} parent=1 // pred_check_branch
      %307 = sbr.rel (0) target = $region141
    $region140: #{ae1_forward.1} parent=1 // pred_region
      %309 = dma.done [#allocation3], 16
    $region141: #{ae1_forward.1} parent=1 // pred_fallthru
      _
    // Predicated region
    $region142: #{ae1_forward.1} parent=1 // pred_check
      _
    $region143: #{ae1_forward.1} parent=1 // pred_check_branch
      %311 = sbr.rel (0) target = $region145
    $region144: #{ae1_forward.1} parent=1 // pred_region
      %313 = dma.done [#allocation6], 16
    $region145: #{ae1_forward.1} parent=1 // pred_fallthru
      _
    // Predicated region
    $region146: #{ae1_forward.1} parent=1 // pred_check
      _
    $region147: #{ae1_forward.1} parent=1 // pred_check_branch
      %315 = sbr.rel (0) target = $region149
    $region148: #{ae1_forward.1} parent=1 // pred_region
      %317 = dma.done [#allocation6], 16
    $region149: #{ae1_forward.1} parent=1 // pred_fallthru
      _
    // Predicated region
    $region150: #{ae1_forward.1} parent=1 // pred_check
      _
    $region151: #{ae1_forward.1} parent=1 // pred_check_branch
      %319 = sbr.rel (0) target = $region153
    $region152: #{ae1_forward.1} parent=1 // pred_region
      %321 = dma.done [#allocation9], 16
    $region153: #{ae1_forward.1} parent=1 // pred_fallthru
      _
    // Predicated region
    $region154: #{ae1_forward.1} parent=1 // pred_check
      _
    $region155: #{ae1_forward.1} parent=1 // pred_check_branch
      %323 = sbr.rel (0) target = $region157
    $region156: #{ae1_forward.1} parent=1 // pred_region
      %325 = dma.done [#allocation9], 16
    $region157: #{ae1_forward.1} parent=1 // pred_fallthru
      _
    // Predicated region
    $region158: #{ae1_forward.1} parent=1 // pred_check
      _
    $region159: #{ae1_forward.1} parent=1 // pred_check_branch
      %327 = sbr.rel (0) target = $region161
    $region160: #{ae1_forward.1} parent=1 // pred_region
      %329 = dma.done [#allocation12], 16
    $region161: #{ae1_forward.1} parent=1 // pred_fallthru
      _
    // Predicated region
    $region162: #{ae1_forward.1} parent=1 // pred_check
      _
    $region163: #{ae1_forward.1} parent=1 // pred_check_branch
      %331 = sbr.rel (0) target = $region165
    $region164: #{ae1_forward.1} parent=1 // pred_region
      %333 = dma.done [#allocation12], 16
    $region165: #{ae1_forward.1} parent=1 // pred_fallthru
      _
    // Predicated region
    $region166: #{ae1_forward.1} parent=1 // pred_check
      _
    $region167: #{ae1_forward.1} parent=1 // pred_check_branch
      %335 = sbr.rel (0) target = $region169
    $region168: #{ae1_forward.1} parent=1 // pred_region
      %337 = dma.done [#allocation15], 16
    $region169: #{ae1_forward.1} parent=1 // pred_fallthru
      _
    // Predicated region
    $region170: #{ae1_forward.1} parent=1 // pred_check
      _
    $region171: #{ae1_forward.1} parent=1 // pred_check_branch
      %339 = sbr.rel (0) target = $region173
    $region172: #{ae1_forward.1} parent=1 // pred_region
      %341 = dma.done [#allocation15], 16
    $region173: #{ae1_forward.1} parent=1 // pred_fallthru
      _
    // Predicated region
    $region174: #{ae1_forward.1} parent=1 // pred_check
      _
    $region175: #{ae1_forward.1} parent=1 // pred_check_branch
      %343 = sbr.rel (0) target = $region177
    $region176: #{ae1_forward.1} parent=1 // pred_region
      %345 = dma.done [#allocation18], 16
    $region177: #{ae1_forward.1} parent=1 // pred_fallthru
      _
    // Predicated region
    $region178: #{ae1_forward.1} parent=1 // pred_check
      _
    $region179: #{ae1_forward.1} parent=1 // pred_check_branch
      %347 = sbr.rel (0) target = $region181
    $region180: #{ae1_forward.1} parent=1 // pred_region
      %349 = dma.done [#allocation18], 768
    $region181: #{ae1_forward.1} parent=1 // pred_fallthru
      _
    // Predicated region
    $region182: #{ae1_forward.1} parent=1 // pred_check
      _
    $region183: #{ae1_forward.1} parent=1 // pred_check_branch
      %351 = sbr.rel (0) target = $region185
    $region184: #{ae1_forward.1} parent=1 // pred_region
      %353 = dma.done [#allocation21], 16
    $region185: #{ae1_forward.1} parent=1 // pred_fallthru
      _
    // Predicated region
    $region186: #{ae1_forward.1} parent=1 // pred_check
      _
    $region187: #{ae1_forward.1} parent=1 // pred_check_branch
      %355 = sbr.rel (0) target = $region189
    $region188: #{ae1_forward.1} parent=1 // pred_region
      %357 = dma.done [#allocation21], 16
    $region189: #{ae1_forward.1} parent=1 // pred_fallthru
      _
    // Predicated region
    $region190: #{ae1_forward.1} parent=1 // pred_check
      _
    $region191: #{ae1_forward.1} parent=1 // pred_check_branch
      %359 = sbr.rel (0) target = $region193
    $region192: #{ae1_forward.1} parent=1 // pred_region
      %361 = dma.done [#allocation24], 512
    $region193: #{ae1_forward.1} parent=1 // pred_fallthru
      _
    // Predicated region
    $region194: #{ae1_forward.1} parent=1 // pred_check
      _
    $region195: #{ae1_forward.1} parent=1 // pred_check_branch
      %363 = sbr.rel (0) target = $region197
    $region196: #{ae1_forward.1} parent=1 // pred_region
      %365 = dma.done [#allocation24], 16
    $region197: #{ae1_forward.1} parent=1 // pred_fallthru
      _
    // Predicated region
    $region198: #{ae1_forward.1} parent=1 // pred_check
      _
    $region199: #{ae1_forward.1} parent=1 // pred_check_branch
      %367 = sbr.rel (0) target = $region201
    $region200: #{ae1_forward.1} parent=1 // pred_region
      %369 = dma.done [#allocation27], 768
    $region201: #{ae1_forward.1} parent=1 // pred_fallthru
      _
    %v370 = vld [vmem:[%s5] sm:$0x1]
    %v371 = vld [vmem:[%s7] sm:$0x1]
    %v372 = vld [vmem:[%s9] sm:$0x1]
    %v373 = vld [vmem:[%s11] sm:$0x1]
    %v374 = vld [vmem:[#allocation2] sm:$0x1]
    %v375 = vld [vmem:[%s15] sm:$0xff]
    %v376 = vld [vmem:[%s15 + $0x8] sm:$0xff]
    %v377 = vld [vmem:[%s15 + $0x10] sm:$0xff]
    %v378 = vld [vmem:[%s15 + $0x18] sm:$0xff]
    %v379 = vld [vmem:[%s15 + $0x20] sm:$0xff]
    %v380 = vld [vmem:[%s15 + $0x28] sm:$0xff]
    %v381 = vld [vmem:[#allocation5] sm:$0x1]
    %v382 = vld [vmem:[#allocation7] sm:$0x1]
    %v383 = vld [vmem:[#allocation8] sm:$0x1]
    %v384 = vld [vmem:[#allocation10] sm:$0x1]
    %v385 = vld [vmem:[%s25] sm:$0xff]
    %v386 = vld [vmem:[%s25 + $0x8] sm:$0xff]
    %v387 = vld [vmem:[%s25 + $0x10] sm:$0xff]
    %v388 = vld [vmem:[%s25 + $0x18] sm:$0xff]
    %v389 = vld [vmem:[%s25 + $0x20] sm:$0xff]
    %v390 = vld [vmem:[%s25 + $0x28] sm:$0xff]
    %v391 = vld [vmem:[%s27] sm:$0xff]
    %v392 = vld [vmem:[%s27 + $0x8] sm:$0xff]
    %v393 = vld [vmem:[%s27 + $0x10] sm:$0xff]
    %v394 = vld [vmem:[%s27 + $0x18] sm:$0xff]
    %v395 = vld [vmem:[%s27 + $0x20] sm:$0xff]
    %v396 = vld [vmem:[%s27 + $0x28] sm:$0xff]
    %v397 = vld [vmem:[%s29] sm:$0xff]
    %v398 = vld [vmem:[%s29 + $0x8] sm:$0xff]
    %v399 = vld [vmem:[%s29 + $0x10] sm:$0xff]
    %v400 = vld [vmem:[%s29 + $0x18] sm:$0xff]
    %v401 = vld [vmem:[%s29 + $0x20] sm:$0xff]
    %v402 = vld [vmem:[%s29 + $0x28] sm:$0xff]
    %v403 = vld [vmem:[%s31] sm:$0xff]
    %v404 = vld [vmem:[%s31 + $0x8] sm:$0xff]
    %v405 = vld [vmem:[%s31 + $0x10] sm:$0xff]
    %v406 = vld [vmem:[%s31 + $0x18] sm:$0xff]
    %v407 = vld [vmem:[%s31 + $0x20] sm:$0xff]
    %v408 = vld [vmem:[%s31 + $0x28] sm:$0xff]
    %v409 = vld [vmem:[#allocation11] sm:$0x1]
    %v410 = vld [vmem:[%s35] sm:$0xff]
    %v411 = vld [vmem:[%s35 + $0x8] sm:$0xff]
    %v412 = vld [vmem:[%s35 + $0x10] sm:$0xff]
    %v413 = vld [vmem:[%s35 + $0x18] sm:$0xff]
    %v414 = vld [vmem:[%s35 + $0x20] sm:$0xff]
    %v415 = vld [vmem:[%s35 + $0x28] sm:$0xff]
    %v416 = vld [vmem:[#allocation13] sm:$0x1]
    %v417 = vld [vmem:[#allocation14] sm:$0x1]
    %v418 = vld [vmem:[#allocation16] sm:$0x1]
    %v419 = vld [vmem:[#allocation17] sm:$0x1]
    %v420 = vld [vmem:[%s45] sm:$0xff]
    %v421 = vld [vmem:[%s45 + $0x8] sm:$0xff]
    %v422 = vld [vmem:[%s45 + $0x10] sm:$0xff]
    %v423 = vld [vmem:[%s45 + $0x18] sm:$0xff]
    %v424 = vld [vmem:[%s45 + $0x20] sm:$0xff]
    %v425 = vld [vmem:[%s45 + $0x28] sm:$0xff]
    %v426 = vld [vmem:[%s47] sm:$0xff]
    %v427 = vld [vmem:[%s47 + $0x8] sm:$0xff]
    %v428 = vld [vmem:[%s47 + $0x10] sm:$0xff]
    %v429 = vld [vmem:[%s47 + $0x18] sm:$0xff]
    %v430 = vld [vmem:[%s47 + $0x20] sm:$0xff]
    %v431 = vld [vmem:[%s47 + $0x28] sm:$0xff]
    %v432 = vld [vmem:[%s49] sm:$0xff]
    %v433 = vld [vmem:[%s49 + $0x8] sm:$0xff]
    %v434 = vld [vmem:[%s49 + $0x10] sm:$0xff]
    %v435 = vld [vmem:[%s49 + $0x18] sm:$0xff]
    %v436 = vld [vmem:[%s49 + $0x20] sm:$0xff]
    %v437 = vld [vmem:[%s49 + $0x28] sm:$0xff]
    %v438 = vld [vmem:[#allocation19] sm:$0xff]
    %v439 = vld [vmem:[#allocation19 + $0x8] sm:$0xff]
    %v440 = vld [vmem:[#allocation19 + $0x10] sm:$0xff]
    %v441 = vld [vmem:[#allocation19 + $0x18] sm:$0xff]
    %v442 = vld [vmem:[#allocation19 + $0x20] sm:$0xff]
    %v443 = vld [vmem:[#allocation19 + $0x28] sm:$0xff]
    %v444 = vld [vmem:[#allocation20] sm:$0x1]
    %v445 = vld [vmem:[%s55] sm:$0xff]
    %v446 = vld [vmem:[%s55 + $0x8] sm:$0xff]
    %v447 = vld [vmem:[%s55 + $0x10] sm:$0xff]
    %v448 = vld [vmem:[%s55 + $0x18] sm:$0xff]
    %v449 = vld [vmem:[%s55 + $0x20] sm:$0xff]
    %v450 = vld [vmem:[%s55 + $0x28] sm:$0xff]
    %v451 = vld [vmem:[%s55 + $0x30] sm:$0xff]
    %v452 = vld [vmem:[%s55 + $0x38] sm:$0xff]
    %v453 = vld [vmem:[#allocation22] sm:$0x1]
    %v454 = vld [vmem:[%s59] sm:$0xff]
    %v455 = vld [vmem:[%s59 + $0x8] sm:$0xff]
    %v456 = vld [vmem:[%s59 + $0x10] sm:$0xff]
    %v457 = vld [vmem:[%s59 + $0x18] sm:$0xff]
    %v458 = vld [vmem:[%s59 + $0x20] sm:$0xff]
    %v459 = vld [vmem:[%s59 + $0x28] sm:$0xff]
    %v460 = vld [vmem:[%s61] sm:$0x1]
    %v461 = vld [vmem:[#allocation23] sm:$0xff]
    %v462 = vld [vmem:[#allocation23 + $0x8] sm:$0xff]
    %v463 = vld [vmem:[#allocation23 + $0x10] sm:$0xff]
    %v464 = vld [vmem:[#allocation23 + $0x18] sm:$0xff]
    %v465 = vld [vmem:[#allocation25] sm:$0x1]
    %v466 = vld [vmem:[#allocation26] sm:$0xff]
    %v467 = vld [vmem:[#allocation26 + $0x8] sm:$0xff]
    %v468 = vld [vmem:[#allocation26 + $0x10] sm:$0xff]
    %v469 = vld [vmem:[#allocation26 + $0x18] sm:$0xff]
    %v470 = vld [vmem:[#allocation26 + $0x20] sm:$0xff]
    %v471 = vld [vmem:[#allocation26 + $0x28] sm:$0xff]
    %v472 = vld [vmem:[%s1] sm:$0xff]
    %v474 = vperm.slane %v444, 0
    %vm476 = vcmask 523264
    %v478 = vsel %vm476, %v472, 0
    %480 = vmatpush.msra.mxu0 0.0
    %481 = vmatpush.msra.mxu0 0.0
    %482 = vmatpush.msra.mxu0 0.0
    %483 = vmatpush.msra.mxu0 0.0
    %484 = vmatpush.msra.mxu0 0.0
    %485 = vmatpush.msra.mxu0 0.0
    %486 = vmatpush.msra.mxu0 0.0
    %487 = vmatpush.msra.mxu0 0.0
    %488 = vmatpush.msra.mxu0 %v452
    %489 = vmatpush.msra.mxu0 %v451
    %490 = vmatpush.msra.mxu0 %v450
    %491 = vmatpush.msra.mxu0 %v449
    %492 = vmatpush.msra.mxu0 %v448
    %493 = vmatpush.msra.mxu0 %v447
    %494 = vmatpush.msra.mxu0 %v446
    %495 = vmatpush.msra.mxu0 %v445
    %496 = vmatmul.f32.gmra.mxu0 %v478
    %v497 = vpop.f32.mrf.mxu0
    %v498 = vadd.f32 %v474, %v497
    %499 = vdwg.mxu0
    %v500 = vmul.f32 %v498, 0.5
    %v501 = vmul.f32 %v498, 0.70710677
    %vm502 = vcmp.ge.f32.partialorder %v501, 0.0
    %v503 = vsel %vm502, 1.0, -1.0
    %v504 = vand.u32 2147483647, %v501
    %v505 = vmul.f32 %v504, 0.3275911
    %v506 = vadd.f32 %v505, 1.0
    %v507 = vrcp.pop %v506
    %v508 = vmul.f32 %v506, %v507
    %v509 = vsub.f32 1.0, %v508
    %v510 = vmul.f32 %v507, %v509
    %v511 = vadd.f32 %v507, %v510
    %vm512 = vweird.f32 %v506
    %vm513 = vweird.f32 %v507
    %vm514 = vmor %vm512, %vm513
    %v515 = vsel %vm514, %v507, %v511
    %v516 = vand.u32 2147483647, %v506
    %vm517 = vcmp.eq.f32.partialorder %v516, 8.507059e+37
    %v518 = vand.u32 %v506, 2147483648
    %v519 = vor.u32 1.1754944e-38, %v518
    %v520 = vsel %vm517, %v519, %v515
    %v521 = vmul.f32 1.0, %v520
    %v522 = vmul.f32 %v521, 1.0614054
    %v523 = vadd.f32 %v522, -1.4531521
    %v524 = vmul.f32 %v523, %v521
    %v525 = vadd.f32 %v524, 1.4214138
    %v526 = vmul.f32 %v525, %v521
    %v527 = vadd.f32 %v526, -0.28449672
    %v528 = vmul.f32 %v527, %v521
    %v529 = vadd.f32 %v528, 0.2548296
    %v530 = vmul.f32 %v529, %v521
    %v531 = vsub.f32 0.0, %v504
    %v532 = vmul.f32 %v531, %v504
    %v533 = vmul.f32 %v532, 1.442695
    %v534 = vpow.pop %v533
    %v535 = vmul.f32 %v530, %v534
    %v536 = vsub.f32 1.0, %v535
    %v537 = vmul.f32 %v503, %v536
    %v538 = vadd.f32 %v537, 1.0
    %v539 = vmul.f32 %v500, %v538
    %vm540 = vcmask 392192
    %v541 = vsel %vm540, %v539, 0.0
    %v542 = vrot.slane %v541, 4
    %v543 = vadd.f32 %v541, %v542
    %v544 = vrot.slane %v543, 2
    %v545 = vadd.f32 %v543, %v544
    %v546 = vrot.slane %v545, 1
    %v547 = vadd.f32 %v545, %v546
    %v548 = vrcp.pop 8.0
    %v549 = vmul.f32 8.0, %v548
    %v550 = vsub.f32 1.0, %v549
    %v551 = vmul.f32 %v548, %v550
    %v552 = vadd.f32 %v548, %v551
    %vm553 = vweird.f32 %v548
    %v554 = vsel %vm553, %v548, %v552
    %v555 = vmul.f32 %v547, %v554
    %v556 = vsub.f32 %v539, %v555
    %v557 = vmul.f32 %v556, %v556
    %v558 = vsel %vm540, %v557, 0.0
    %v559 = vrot.slane %v558, 4
    %v560 = vadd.f32 %v558, %v559
    %v561 = vrot.slane %v560, 2
    %v562 = vadd.f32 %v560, %v561
    %v563 = vrot.slane %v562, 1
    %v564 = vadd.f32 %v562, %v563
    %v565 = vmul.f32 %v564, %v554
    %v566 = vadd.f32 %v565, 1e-05
    %v567 = vrsqrt.pop %v566
    %v568 = vmul.f32 %v567, %v566
    %v569 = vmul.f32 %v568, %v567
    %v570 = vmul.f32 0.5, %v569
    %v571 = vsub.f32 1.5, %v570
    %v572 = vmul.f32 %v567, %v571
    %vm573 = vweird.f32 %v566
    %vm574 = vweird.f32 %v567
    %vm575 = vmor %vm573, %vm574
    %v576 = vsel %vm575, %v567, %v572
    %v577 = vmul.f32 %v556, %v576
    %v579 = vperm.slane %v371, 0
    %v581 = vmul.f32 %v577, %v579
    %v583 = vperm.slane %v370, 0
    %v585 = vadd.f32 %v581, %v583
    %v587 = vsel %vm540, %v585, 0
    %589 = vmatpush.msra.mxu0 0.0
    %590 = vmatpush.msra.mxu0 0.0
    %591 = vmatpush.msra.mxu0 0.0
    %592 = vmatpush.msra.mxu0 0.0
    %593 = vmatpush.msra.mxu0 0.0
    %594 = vmatpush.msra.mxu0 0.0
    %595 = vmatpush.msra.mxu0 0.0
    %596 = vmatpush.msra.mxu0 0.0
    %597 = vmatpush.msra.mxu0 0.0
    %598 = vmatpush.msra.mxu0 0.0
    %599 = vmatpush.msra.mxu0 %v402
    %600 = vmatpush.msra.mxu0 %v401
    %601 = vmatpush.msra.mxu0 %v400
    %602 = vmatpush.msra.mxu0 %v399
    %603 = vmatpush.msra.mxu0 %v398
    %604 = vmatpush.msra.mxu0 %v397
    %605 = vmatmul.f32.gmra.mxu0 %v587
    %v606 = vpop.f32.mrf.mxu0
    %v607 = vadd.f32 0.0, %v606
    %608 = vdwg.mxu0
    %609 = vmatpush.msra.mxu0 0.0
    %610 = vmatpush.msra.mxu0 0.0
    %611 = vmatpush.msra.mxu0 0.0
    %612 = vmatpush.msra.mxu0 0.0
    %613 = vmatpush.msra.mxu0 0.0
    %614 = vmatpush.msra.mxu0 0.0
    %615 = vmatpush.msra.mxu0 0.0
    %616 = vmatpush.msra.mxu0 0.0
    %617 = vmatpush.msra.mxu0 0.0
    %618 = vmatpush.msra.mxu0 0.0
    %619 = vmatpush.msra.mxu0 %v396
    %620 = vmatpush.msra.mxu0 %v395
    %621 = vmatpush.msra.mxu0 %v394
    %622 = vmatpush.msra.mxu0 %v393
    %623 = vmatpush.msra.mxu0 %v392
    %624 = vmatpush.msra.mxu0 %v391
    %625 = vmatmul.f32.gmra.mxu0 %v587
    %v626 = vpop.f32.mrf.mxu0
    %v627 = vadd.f32 0.0, %v626
    %628 = vdwg.mxu0
    %629 = vmatpush.msra.mxu0 0.0
    %630 = vmatpush.msra.mxu0 0.0
    %631 = vmatpush.msra.mxu0 0.0
    %632 = vmatpush.msra.mxu0 0.0
    %633 = vmatpush.msra.mxu0 0.0
    %634 = vmatpush.msra.mxu0 0.0
    %635 = vmatpush.msra.mxu0 0.0
    %636 = vmatpush.msra.mxu0 0.0
    %637 = vmatpush.msra.mxu0 0.0
    %638 = vmatpush.msra.mxu0 0.0
    %639 = vmatpush.msra.mxu0 %v408
    %640 = vmatpush.msra.mxu0 %v407
    %641 = vmatpush.msra.mxu0 %v406
    %642 = vmatpush.msra.mxu0 %v405
    %643 = vmatpush.msra.mxu0 %v404
    %644 = vmatpush.msra.mxu0 %v403
    %645 = vmatmul.f32.gmra.mxu0 %v587
    %v646 = vpop.f32.mrf.mxu0
    %v647 = vadd.f32 0.0, %v646
    %648 = vdwg.mxu0
    %vm649 = vcmask 97280
    %v651 = vsel %vm649, %v607, 0
    %v654 = vsel %vm649, %v627, 0
    %656 = vmatpush.xpose.msra.mxu0 0.0
    %657 = vmatpush.xpose.msra.mxu0 0.0
    %658 = vmatpush.xpose.msra.mxu0 0.0
    %659 = vmatpush.xpose.msra.mxu0 0.0
    %660 = vmatpush.xpose.msra.mxu0 0.0
    %661 = vmatpush.xpose.msra.mxu0 0.0
    %662 = vmatpush.xpose.msra.mxu0 0.0
    %663 = vmatpush.xpose.msra.mxu0 0.0
    %664 = vmatpush.xpose.msra.mxu0 0.0
    %665 = vmatpush.xpose.msra.mxu0 0.0
    %666 = vmatpush.xpose.msra.mxu0 0.0
    %667 = vmatpush.xpose.msra.mxu0 0.0
    %668 = vmatpush.xpose.msra.mxu0 0.0
    %669 = vmatpush.xpose.msra.mxu0 0.0
    %670 = vmatpush.xpose.msra.mxu0 0.0
    %671 = vmatpush.xpose.msra.mxu0 %v654
    %672 = vmatmul.f32.gmra.mxu0 %v651
    %v673 = vpop.f32.mrf.mxu0
    %v674 = vadd.f32 0.0, %v673
    %675 = vdwg.mxu0
    %v676 = vmul.f32 %v674, 0.28867513
    %vm677 = vcmask 64512
    %v678 = vsel %vm677, %v676, -inf
    %679 = vmax.xlane.f32.xlu0 %v678
    %v680 = vpop.xlane.xlu0 %679
    %v681 = vsub.f32 %v676, %v680
    %v682 = vmul.f32 %v681, 1.442695
    %v683 = vpow.pop %v682
    %v684 = vsel %vm677, %v683, 0.0
    %685 = vadd.xlane.f32.xlu0 %v684
    %v686 = vpop.xlane.xlu0 %685
    %v687 = vrcp.pop %v686
    %v688 = vmul.f32 %v683, %v687
    %v690 = vsel %vm677, %v688, 0
    %692 = vmatpush.msra.mxu0 0.0
    %693 = vmatpush.msra.mxu0 0.0
    %694 = vmatpush.msra.mxu0 0.0
    %695 = vmatpush.msra.mxu0 0.0
    %696 = vmatpush.msra.mxu0 0.0
    %697 = vmatpush.msra.mxu0 0.0
    %698 = vmatpush.msra.mxu0 0.0
    %699 = vmatpush.msra.mxu0 0.0
    %700 = vmatpush.msra.mxu0 0.0
    %701 = vmatpush.msra.mxu0 0.0
    %702 = vmatpush.msra.mxu0 0.0
    %703 = vmatpush.msra.mxu0 0.0
    %704 = vmatpush.msra.mxu0 0.0
    %705 = vmatpush.msra.mxu0 0.0
    %706 = vmatpush.msra.mxu0 0.0
    %707 = vmatpush.msra.mxu0 %v647
    %708 = vmatmul.f32.gmra.mxu0 %v690
    %v709 = vpop.f32.mrf.mxu0
    %v710 = vadd.f32 0.0, %v709
    %711 = vdwg.mxu0
    %712 = vrot.lane.b32.xlu0 %v607, 116
    %v713 = vpop.permute.xlu0 %712
    %714 = vrot.lane.b32.xlu0 %v627, 116
    %v715 = vpop.permute.xlu0 %714
    %v716 = vsel %vm649, %v713, 0
    %v718 = vsel %vm649, %v715, 0
    %720 = vmatpush.xpose.msra.mxu0 0.0
    %721 = vmatpush.xpose.msra.mxu0 0.0
    %722 = vmatpush.xpose.msra.mxu0 0.0
    %723 = vmatpush.xpose.msra.mxu0 0.0
    %724 = vmatpush.xpose.msra.mxu0 0.0
    %725 = vmatpush.xpose.msra.mxu0 0.0
    %726 = vmatpush.xpose.msra.mxu0 0.0
    %727 = vmatpush.xpose.msra.mxu0 0.0
    %728 = vmatpush.xpose.msra.mxu0 0.0
    %729 = vmatpush.xpose.msra.mxu0 0.0
    %730 = vmatpush.xpose.msra.mxu0 0.0
    %731 = vmatpush.xpose.msra.mxu0 0.0
    %732 = vmatpush.xpose.msra.mxu0 0.0
    %733 = vmatpush.xpose.msra.mxu0 0.0
    %734 = vmatpush.xpose.msra.mxu0 0.0
    %735 = vmatpush.xpose.msra.mxu0 %v718
    %736 = vmatmul.f32.gmra.mxu0 %v716
    %v737 = vpop.f32.mrf.mxu0
    %v738 = vadd.f32 0.0, %v737
    %739 = vdwg.mxu0
    %v740 = vmul.f32 %v738, 0.28867513
    %v741 = vsel %vm677, %v740, -inf
    %742 = vmax.xlane.f32.xlu0 %v741
    %v743 = vpop.xlane.xlu0 %742
    %v744 = vsub.f32 %v740, %v743
    %v745 = vmul.f32 %v744, 1.442695
    %v746 = vpow.pop %v745
    %v747 = vsel %vm677, %v746, 0.0
    %748 = vadd.xlane.f32.xlu0 %v747
    %v749 = vpop.xlane.xlu0 %748
    %v750 = vrcp.pop %v749
    %v751 = vmul.f32 %v746, %v750
    %753 = vrot.lane.b32.xlu0 %v647, 116
    %v754 = vpop.permute.xlu0 %753
    %v757 = vsel %vm677, %v751, 0
    %759 = vmatpush.msra.mxu0 0.0
    %760 = vmatpush.msra.mxu0 0.0
    %761 = vmatpush.msra.mxu0 0.0
    %762 = vmatpush.msra.mxu0 0.0
    %763 = vmatpush.msra.mxu0 0.0
    %764 = vmatpush.msra.mxu0 0.0
    %765 = vmatpush.msra.mxu0 0.0
    %766 = vmatpush.msra.mxu0 0.0
    %767 = vmatpush.msra.mxu0 0.0
    %768 = vmatpush.msra.mxu0 0.0
    %769 = vmatpush.msra.mxu0 0.0
    %770 = vmatpush.msra.mxu0 0.0
    %771 = vmatpush.msra.mxu0 0.0
    %772 = vmatpush.msra.mxu0 0.0
    %773 = vmatpush.msra.mxu0 0.0
    %774 = vmatpush.msra.mxu0 %v754
    %775 = vmatmul.f32.gmra.mxu0 %v757
    %v776 = vpop.f32.mrf.mxu0
    %v777 = vadd.f32 0.0, %v776
    %778 = vdwg.mxu0
    %779 = vrot.lane.b32.xlu0 %v607, 104
    %v780 = vpop.permute.xlu0 %779
    %781 = vrot.lane.b32.xlu0 %v627, 104
    %v782 = vpop.permute.xlu0 %781
    %v783 = vsel %vm649, %v780, 0
    %v785 = vsel %vm649, %v782, 0
    %787 = vmatpush.xpose.msra.mxu0 0.0
    %788 = vmatpush.xpose.msra.mxu0 0.0
    %789 = vmatpush.xpose.msra.mxu0 0.0
    %790 = vmatpush.xpose.msra.mxu0 0.0
    %791 = vmatpush.xpose.msra.mxu0 0.0
    %792 = vmatpush.xpose.msra.mxu0 0.0
    %793 = vmatpush.xpose.msra.mxu0 0.0
    %794 = vmatpush.xpose.msra.mxu0 0.0
    %795 = vmatpush.xpose.msra.mxu0 0.0
    %796 = vmatpush.xpose.msra.mxu0 0.0
    %797 = vmatpush.xpose.msra.mxu0 0.0
    %798 = vmatpush.xpose.msra.mxu0 0.0
    %799 = vmatpush.xpose.msra.mxu0 0.0
    %800 = vmatpush.xpose.msra.mxu0 0.0
    %801 = vmatpush.xpose.msra.mxu0 0.0
    %802 = vmatpush.xpose.msra.mxu0 %v785
    %803 = vmatmul.f32.gmra.mxu0 %v783
    %v804 = vpop.f32.mrf.mxu0
    %v805 = vadd.f32 0.0, %v804
    %806 = vdwg.mxu0
    %v807 = vmul.f32 %v805, 0.28867513
    %v808 = vsel %vm677, %v807, -inf
    %809 = vmax.xlane.f32.xlu0 %v808
    %v810 = vpop.xlane.xlu0 %809
    %v811 = vsub.f32 %v807, %v810
    %v812 = vmul.f32 %v811, 1.442695
    %v813 = vpow.pop %v812
    %v814 = vsel %vm677, %v813, 0.0
    %815 = vadd.xlane.f32.xlu0 %v814
    %v816 = vpop.xlane.xlu0 %815
    %v817 = vrcp.pop %v816
    %v818 = vmul.f32 %v813, %v817
    %819 = vrot.lane.b32.xlu0 %v647, 104
    %v820 = vpop.permute.xlu0 %819
    %v823 = vsel %vm677, %v818, 0
    %825 = vmatpush.msra.mxu0 0.0
    %826 = vmatpush.msra.mxu0 0.0
    %827 = vmatpush.msra.mxu0 0.0
    %828 = vmatpush.msra.mxu0 0.0
    %829 = vmatpush.msra.mxu0 0.0
    %830 = vmatpush.msra.mxu0 0.0
    %831 = vmatpush.msra.mxu0 0.0
    %832 = vmatpush.msra.mxu0 0.0
    %833 = vmatpush.msra.mxu0 0.0
    %834 = vmatpush.msra.mxu0 0.0
    %835 = vmatpush.msra.mxu0 0.0
    %836 = vmatpush.msra.mxu0 0.0
    %837 = vmatpush.msra.mxu0 0.0
    %838 = vmatpush.msra.mxu0 0.0
    %839 = vmatpush.msra.mxu0 0.0
    %840 = vmatpush.msra.mxu0 %v820
    %841 = vmatmul.f32.gmra.mxu0 %v823
    %v842 = vpop.f32.mrf.mxu0
    %v843 = vadd.f32 0.0, %v842
    %844 = vdwg.mxu0
    %845 = vrot.lane.b32.xlu0 %v607, 92
    %v846 = vpop.permute.xlu0 %845
    %847 = vrot.lane.b32.xlu0 %v627, 92
    %v848 = vpop.permute.xlu0 %847
    %v849 = vsel %vm649, %v846, 0
    %v851 = vsel %vm649, %v848, 0
    %853 = vmatpush.xpose.msra.mxu0 0.0
    %854 = vmatpush.xpose.msra.mxu0 0.0
    %855 = vmatpush.xpose.msra.mxu0 0.0
    %856 = vmatpush.xpose.msra.mxu0 0.0
    %857 = vmatpush.xpose.msra.mxu0 0.0
    %858 = vmatpush.xpose.msra.mxu0 0.0
    %859 = vmatpush.xpose.msra.mxu0 0.0
    %860 = vmatpush.xpose.msra.mxu0 0.0
    %861 = vmatpush.xpose.msra.mxu0 0.0
    %862 = vmatpush.xpose.msra.mxu0 0.0
    %863 = vmatpush.xpose.msra.mxu0 0.0
    %864 = vmatpush.xpose.msra.mxu0 0.0
    %865 = vmatpush.xpose.msra.mxu0 0.0
    %866 = vmatpush.xpose.msra.mxu0 0.0
    %867 = vmatpush.xpose.msra.mxu0 0.0
    %868 = vmatpush.xpose.msra.mxu0 %v851
    %869 = vmatmul.f32.gmra.mxu0 %v849
    %v870 = vpop.f32.mrf.mxu0
    %v871 = vadd.f32 0.0, %v870
    %872 = vdwg.mxu0
    %v873 = vmul.f32 %v871, 0.28867513
    %v874 = vsel %vm677, %v873, -inf
    %875 = vmax.xlane.f32.xlu0 %v874
    %v876 = vpop.xlane.xlu0 %875
    %v877 = vsub.f32 %v873, %v876
    %v878 = vmul.f32 %v877, 1.442695
    %v879 = vpow.pop %v878
    %v880 = vsel %vm677, %v879, 0.0
    %881 = vadd.xlane.f32.xlu0 %v880
    %v882 = vpop.xlane.xlu0 %881
    %v883 = vrcp.pop %v882
    %v884 = vmul.f32 %v879, %v883
    %885 = vrot.lane.b32.xlu0 %v647, 92
    %v886 = vpop.permute.xlu0 %885
    %v889 = vsel %vm677, %v884, 0
    %891 = vmatpush.msra.mxu0 0.0
    %892 = vmatpush.msra.mxu0 0.0
    %893 = vmatpush.msra.mxu0 0.0
    %894 = vmatpush.msra.mxu0 0.0
    %895 = vmatpush.msra.mxu0 0.0
    %896 = vmatpush.msra.mxu0 0.0
    %897 = vmatpush.msra.mxu0 0.0
    %898 = vmatpush.msra.mxu0 0.0
    %899 = vmatpush.msra.mxu0 0.0
    %900 = vmatpush.msra.mxu0 0.0
    %901 = vmatpush.msra.mxu0 0.0
    %902 = vmatpush.msra.mxu0 0.0
    %903 = vmatpush.msra.mxu0 0.0
    %904 = vmatpush.msra.mxu0 0.0
    %905 = vmatpush.msra.mxu0 0.0
    %906 = vmatpush.msra.mxu0 %v886
    %907 = vmatmul.f32.gmra.mxu0 %v889
    %v908 = vpop.f32.mrf.mxu0
    %v909 = vadd.f32 0.0, %v908
    %910 = vdwg.mxu0
    %v911 = vld [vmem:[%s3] sm:$0xff]
    %v912 = vld [vmem:[%s3 + $0x8] sm:$0xf]
    %v913 = vld [vmem:[%s3 + $0xc] sm:$0xff]
    %v914 = vld [vmem:[%s3 + $0x14] sm:$0xf]
    %v916 = vsel %vm649, %v777, 0
    %vm918 = vcmask 1043456
    %v920 = vsel %vm918, %v914, 0
    %922 = vmatpush.msra.mxu0 0.0
    %923 = vmatpush.msra.mxu0 0.0
    %924 = vmatpush.msra.mxu0 0.0
    %925 = vmatpush.msra.mxu0 0.0
    %926 = vmatpush.msra.mxu0 0.0
    %927 = vmatpush.msra.mxu0 0.0
    %928 = vmatpush.msra.mxu0 0.0
    %929 = vmatpush.msra.mxu0 0.0
    %930 = vmatpush.msra.mxu0 0.0
    %931 = vmatpush.msra.mxu0 0.0
    %932 = vmatpush.msra.mxu0 0.0
    %933 = vmatpush.msra.mxu0 0.0
    %934 = vmatpush.msra.mxu0 0.0
    %935 = vmatpush.msra.mxu0 0.0
    %936 = vmatpush.msra.mxu0 %v920
    %937 = vmatpush.msra.mxu0 %v913
    %938 = vmatmul.f32.gmra.mxu0 %v916
    %v939 = vpop.f32.mrf.mxu0
    %v940 = vadd.f32 0.0, %v939
    %941 = vdwg.mxu0
    %v943 = vsel %vm649, %v710, 0
    %v946 = vsel %vm918, %v912, 0
    %948 = vmatpush.msra.mxu0 0.0
    %949 = vmatpush.msra.mxu0 0.0
    %950 = vmatpush.msra.mxu0 0.0
    %951 = vmatpush.msra.mxu0 0.0
    %952 = vmatpush.msra.mxu0 0.0
    %953 = vmatpush.msra.mxu0 0.0
    %954 = vmatpush.msra.mxu0 0.0
    %955 = vmatpush.msra.mxu0 0.0
    %956 = vmatpush.msra.mxu0 0.0
    %957 = vmatpush.msra.mxu0 0.0
    %958 = vmatpush.msra.mxu0 0.0
    %959 = vmatpush.msra.mxu0 0.0
    %960 = vmatpush.msra.mxu0 0.0
    %961 = vmatpush.msra.mxu0 0.0
    %962 = vmatpush.msra.mxu0 %v946
    %963 = vmatpush.msra.mxu0 %v911
    %964 = vmatmul.f32.gmra.mxu0 %v943
    %v965 = vpop.f32.mrf.mxu0
    %v966 = vadd.f32 %v940, %v965
    %967 = vdwg.mxu0
    %v968 = vld [vmem:[%s3 + $0x18] sm:$0xff]
    %v969 = vld [vmem:[%s3 + $0x20] sm:$0xf]
    %v971 = vsel %vm649, %v843, 0
    %v974 = vsel %vm918, %v969, 0
    %976 = vmatpush.msra.mxu0 0.0
    %977 = vmatpush.msra.mxu0 0.0
    %978 = vmatpush.msra.mxu0 0.0
    %979 = vmatpush.msra.mxu0 0.0
    %980 = vmatpush.msra.mxu0 0.0
    %981 = vmatpush.msra.mxu0 0.0
    %982 = vmatpush.msra.mxu0 0.0
    %983 = vmatpush.msra.mxu0 0.0
    %984 = vmatpush.msra.mxu0 0.0
    %985 = vmatpush.msra.mxu0 0.0
    %986 = vmatpush.msra.mxu0 0.0
    %987 = vmatpush.msra.mxu0 0.0
    %988 = vmatpush.msra.mxu0 0.0
    %989 = vmatpush.msra.mxu0 0.0
    %990 = vmatpush.msra.mxu0 %v974
    %991 = vmatpush.msra.mxu0 %v968
    %992 = vmatmul.f32.gmra.mxu0 %v971
    %v993 = vpop.f32.mrf.mxu0
    %v994 = vadd.f32 0.0, %v993
    %995 = vdwg.mxu0
    %v996 = vadd.f32 %v966, %v994
    %v997 = vld [vmem:[%s3 + $0x24] sm:$0xff]
    %v998 = vld [vmem:[%s3 + $0x2c] sm:$0xf]
    %v1000 = vsel %vm649, %v909, 0
    %v1003 = vsel %vm918, %v998, 0
    %1005 = vmatpush.msra.mxu0 0.0
    %1006 = vmatpush.msra.mxu0 0.0
    %1007 = vmatpush.msra.mxu0 0.0
    %1008 = vmatpush.msra.mxu0 0.0
    %1009 = vmatpush.msra.mxu0 0.0
    %1010 = vmatpush.msra.mxu0 0.0
    %1011 = vmatpush.msra.mxu0 0.0
    %1012 = vmatpush.msra.mxu0 0.0
    %1013 = vmatpush.msra.mxu0 0.0
    %1014 = vmatpush.msra.mxu0 0.0
    %1015 = vmatpush.msra.mxu0 0.0
    %1016 = vmatpush.msra.mxu0 0.0
    %1017 = vmatpush.msra.mxu0 0.0
    %1018 = vmatpush.msra.mxu0 0.0
    %1019 = vmatpush.msra.mxu0 %v1003
    %1020 = vmatpush.msra.mxu0 %v997
    %1021 = vmatmul.f32.gmra.mxu0 %v1000
    %v1022 = vpop.f32.mrf.mxu0
    %v1023 = vadd.f32 0.0, %v1022
    %1024 = vdwg.mxu0
    %v1025 = vadd.f32 %v996, %v1023
    %1026 = vxpose.xlu0.b32.start [1/16] %v1025, 128
    %1027 = vxpose.xlu0.b32.cont [2/16] 0.0, 128
    %1028 = vxpose.xlu0.b32.cont [3/16] 0.0, 128
    %1029 = vxpose.xlu0.b32.cont [4/16] 0.0, 128
    %1030 = vxpose.xlu0.b32.cont [5/16] 0.0, 128
    %1031 = vxpose.xlu0.b32.cont [6/16] 0.0, 128
    %1032 = vxpose.xlu0.b32.cont [7/16] 0.0, 128
    %1033 = vxpose.xlu0.b32.cont [8/16] 0.0, 128
    %1034 = vxpose.xlu0.b32.cont [9/16] 0.0, 128
    %1035 = vxpose.xlu0.b32.cont [10/16] 0.0, 128
    %1036 = vxpose.xlu0.b32.cont [11/16] 0.0, 128
    %1037 = vxpose.xlu0.b32.cont [12/16] 0.0, 128
    %1038 = vxpose.xlu0.b32.cont [13/16] 0.0, 128
    %1039 = vxpose.xlu0.b32.cont [14/16] 0.0, 128
    %1040 = vxpose.xlu0.b32.cont [15/16] 0.0, 128
    %1041 = vxpose.xlu0.b32.end [16/16] 0.0, 128
    %v1042 = vpop.trf.xlu0
    %v1043 = vpop.trf.xlu0
    %v1044 = vpop.trf.xlu0
    %v1045 = vpop.trf.xlu0
    %v1046 = vpop.trf.xlu0
    %v1047 = vpop.trf.xlu0
    %v1048 = vpop.trf.xlu0
    %v1049 = vpop.trf.xlu0
    %v1050 = vpop.trf.xlu0
    %v1051 = vpop.trf.xlu0
    %v1052 = vpop.trf.xlu0
    %v1053 = vpop.trf.xlu0
    %v1054 = vpop.trf.xlu0
    %v1055 = vpop.trf.xlu0
    %v1056 = vpop.trf.xlu0
    %v1057 = vpop.trf.xlu0
    %s1058 = scalar_lea.vmem %s3, 48
    %v1059 = vld [vmem:[%s1058] sm:$0xff]
    %v1060 = vld [vmem:[%s1058 + $0x8] sm:$0xf]
    %v1061 = vld [vmem:[%s1058 + $0xc] sm:$0xff]
    %v1062 = vld [vmem:[%s1058 + $0x14] sm:$0xf]
    %v1064 = vsel %vm918, %v1062, 0
    %1066 = vmatpush.msra.mxu0 0.0
    %1067 = vmatpush.msra.mxu0 0.0
    %1068 = vmatpush.msra.mxu0 0.0
    %1069 = vmatpush.msra.mxu0 0.0
    %1070 = vmatpush.msra.mxu0 0.0
    %1071 = vmatpush.msra.mxu0 0.0
    %1072 = vmatpush.msra.mxu0 0.0
    %1073 = vmatpush.msra.mxu0 0.0
    %1074 = vmatpush.msra.mxu0 0.0
    %1075 = vmatpush.msra.mxu0 0.0
    %1076 = vmatpush.msra.mxu0 0.0
    %1077 = vmatpush.msra.mxu0 0.0
    %1078 = vmatpush.msra.mxu0 0.0
    %1079 = vmatpush.msra.mxu0 0.0
    %1080 = vmatpush.msra.mxu0 %v1064
    %1081 = vmatpush.msra.mxu0 %v1061
    %1082 = vmatmul.f32.gmra.mxu0 %v916
    %v1083 = vpop.f32.mrf.mxu0
    %v1084 = vadd.f32 0.0, %v1083
    %1085 = vdwg.mxu0
    %v1087 = vsel %vm918, %v1060, 0
    %1089 = vmatpush.msra.mxu0 0.0
    %1090 = vmatpush.msra.mxu0 0.0
    %1091 = vmatpush.msra.mxu0 0.0
    %1092 = vmatpush.msra.mxu0 0.0
    %1093 = vmatpush.msra.mxu0 0.0
    %1094 = vmatpush.msra.mxu0 0.0
    %1095 = vmatpush.msra.mxu0 0.0
    %1096 = vmatpush.msra.mxu0 0.0
    %1097 = vmatpush.msra.mxu0 0.0
    %1098 = vmatpush.msra.mxu0 0.0
    %1099 = vmatpush.msra.mxu0 0.0
    %1100 = vmatpush.msra.mxu0 0.0
    %1101 = vmatpush.msra.mxu0 0.0
    %1102 = vmatpush.msra.mxu0 0.0
    %1103 = vmatpush.msra.mxu0 %v1087
    %1104 = vmatpush.msra.mxu0 %v1059
    %1105 = vmatmul.f32.gmra.mxu0 %v943
    %v1106 = vpop.f32.mrf.mxu0
    %v1107 = vadd.f32 %v1084, %v1106
    %1108 = vdwg.mxu0
    %v1109 = vld [vmem:[%s1058 + $0x18] sm:$0xff]
    %v1110 = vld [vmem:[%s1058 + $0x20] sm:$0xf]
    %v1112 = vsel %vm918, %v1110, 0
    %1114 = vmatpush.msra.mxu0 0.0
    %1115 = vmatpush.msra.mxu0 0.0
    %1116 = vmatpush.msra.mxu0 0.0
    %1117 = vmatpush.msra.mxu0 0.0
    %1118 = vmatpush.msra.mxu0 0.0
    %1119 = vmatpush.msra.mxu0 0.0
    %1120 = vmatpush.msra.mxu0 0.0
    %1121 = vmatpush.msra.mxu0 0.0
    %1122 = vmatpush.msra.mxu0 0.0
    %1123 = vmatpush.msra.mxu0 0.0
    %1124 = vmatpush.msra.mxu0 0.0
    %1125 = vmatpush.msra.mxu0 0.0
    %1126 = vmatpush.msra.mxu0 0.0
    %1127 = vmatpush.msra.mxu0 0.0
    %1128 = vmatpush.msra.mxu0 %v1112
    %1129 = vmatpush.msra.mxu0 %v1109
    %1130 = vmatmul.f32.gmra.mxu0 %v971
    %v1131 = vpop.f32.mrf.mxu0
    %v1132 = vadd.f32 0.0, %v1131
    %1133 = vdwg.mxu0
    %v1134 = vadd.f32 %v1107, %v1132
    %v1135 = vld [vmem:[%s1058 + $0x24] sm:$0xff]
    %v1136 = vld [vmem:[%s1058 + $0x2c] sm:$0xf]
    %v1138 = vsel %vm918, %v1136, 0
    %1140 = vmatpush.msra.mxu0 0.0
    %1141 = vmatpush.msra.mxu0 0.0
    %1142 = vmatpush.msra.mxu0 0.0
    %1143 = vmatpush.msra.mxu0 0.0
    %1144 = vmatpush.msra.mxu0 0.0
    %1145 = vmatpush.msra.mxu0 0.0
    %1146 = vmatpush.msra.mxu0 0.0
    %1147 = vmatpush.msra.mxu0 0.0
    %1148 = vmatpush.msra.mxu0 0.0
    %1149 = vmatpush.msra.mxu0 0.0
    %1150 = vmatpush.msra.mxu0 0.0
    %1151 = vmatpush.msra.mxu0 0.0
    %1152 = vmatpush.msra.mxu0 0.0
    %1153 = vmatpush.msra.mxu0 0.0
    %1154 = vmatpush.msra.mxu0 %v1138
    %1155 = vmatpush.msra.mxu0 %v1135
    %1156 = vmatmul.f32.gmra.mxu0 %v1000
    %v1157 = vpop.f32.mrf.mxu0
    %v1158 = vadd.f32 0.0, %v1157
    %1159 = vdwg.mxu0
    %v1160 = vadd.f32 %v1134, %v1158
    %1161 = vxpose.xlu0.b32.start [1/16] %v1160, 128
    %1162 = vxpose.xlu0.b32.cont [2/16] 0.0, 128
    %1163 = vxpose.xlu0.b32.cont [3/16] 0.0, 128
    %1164 = vxpose.xlu0.b32.cont [4/16] 0.0, 128
    %1165 = vxpose.xlu0.b32.cont [5/16] 0.0, 128
    %1166 = vxpose.xlu0.b32.cont [6/16] 0.0, 128
    %1167 = vxpose.xlu0.b32.cont [7/16] 0.0, 128
    %1168 = vxpose.xlu0.b32.cont [8/16] 0.0, 128
    %1169 = vxpose.xlu0.b32.cont [9/16] 0.0, 128
    %1170 = vxpose.xlu0.b32.cont [10/16] 0.0, 128
    %1171 = vxpose.xlu0.b32.cont [11/16] 0.0, 128
    %1172 = vxpose.xlu0.b32.cont [12/16] 0.0, 128
    %1173 = vxpose.xlu0.b32.cont [13/16] 0.0, 128
    %1174 = vxpose.xlu0.b32.cont [14/16] 0.0, 128
    %1175 = vxpose.xlu0.b32.cont [15/16] 0.0, 128
    %1176 = vxpose.xlu0.b32.end [16/16] 0.0, 128
    %v1177 = vpop.trf.xlu0
    %v1178 = vpop.trf.xlu0
    %v1179 = vpop.trf.xlu0
    %v1180 = vpop.trf.xlu0
    %v1181 = vpop.trf.xlu0
    %v1182 = vpop.trf.xlu0
    %v1183 = vpop.trf.xlu0
    %v1184 = vpop.trf.xlu0
    %v1185 = vpop.trf.xlu0
    %v1186 = vpop.trf.xlu0
    %v1187 = vpop.trf.xlu0
    %v1188 = vpop.trf.xlu0
    %v1189 = vpop.trf.xlu0
    %v1190 = vpop.trf.xlu0
    %v1191 = vpop.trf.xlu0
    %v1192 = vpop.trf.xlu0
    %v1194 = vsel %vm677, %v1177, 0
    %1196 = vmatpush.msra.mxu0 0.0
    %1197 = vmatpush.msra.mxu0 0.0
    %1198 = vmatpush.msra.mxu0 0.0
    %1199 = vmatpush.msra.mxu0 0.0
    %1200 = vmatpush.msra.mxu0 0.0
    %1201 = vmatpush.msra.mxu0 0.0
    %1202 = vmatpush.msra.mxu0 0.0
    %1203 = vmatpush.msra.mxu0 0.0
    %1204 = vmatpush.msra.mxu0 0.0
    %1205 = vmatpush.msra.mxu0 0.0
    %1206 = vmatpush.msra.mxu0 0.0
    %1207 = vmatpush.msra.mxu0 0.0
    %1208 = vmatpush.msra.mxu0 0.0
    %1209 = vmatpush.msra.mxu0 0.0
    %1210 = vmatpush.msra.mxu0 0.0
    %1211 = vmatpush.msra.mxu0 %v386
    %1212 = vmatmul.f32.gmra.mxu0 %v1194
    %v1213 = vpop.f32.mrf.mxu0
    %v1214 = vadd.f32 0.0, %v1213
    %1215 = vdwg.mxu0
    %v1217 = vsel %vm677, %v1042, 0
    %1219 = vmatpush.msra.mxu0 0.0
    %1220 = vmatpush.msra.mxu0 0.0
    %1221 = vmatpush.msra.mxu0 0.0
    %1222 = vmatpush.msra.mxu0 0.0
    %1223 = vmatpush.msra.mxu0 0.0
    %1224 = vmatpush.msra.mxu0 0.0
    %1225 = vmatpush.msra.mxu0 0.0
    %1226 = vmatpush.msra.mxu0 0.0
    %1227 = vmatpush.msra.mxu0 0.0
    %1228 = vmatpush.msra.mxu0 0.0
    %1229 = vmatpush.msra.mxu0 0.0
    %1230 = vmatpush.msra.mxu0 0.0
    %1231 = vmatpush.msra.mxu0 0.0
    %1232 = vmatpush.msra.mxu0 0.0
    %1233 = vmatpush.msra.mxu0 0.0
    %1234 = vmatpush.msra.mxu0 %v385
    %1235 = vmatmul.f32.gmra.mxu0 %v1217
    %v1236 = vpop.f32.mrf.mxu0
    %v1237 = vadd.f32 %v1214, %v1236
    %1238 = vdwg.mxu0
    %s1239 = scalar_lea.vmem %s3, 96
    %v1240 = vld [vmem:[%s1239] sm:$0xff]
    %v1241 = vld [vmem:[%s1239 + $0x8] sm:$0xf]
    %v1242 = vld [vmem:[%s1239 + $0xc] sm:$0xff]
    %v1243 = vld [vmem:[%s1239 + $0x14] sm:$0xf]
    %v1245 = vsel %vm918, %v1243, 0
    %1247 = vmatpush.msra.mxu0 0.0
    %1248 = vmatpush.msra.mxu0 0.0
    %1249 = vmatpush.msra.mxu0 0.0
    %1250 = vmatpush.msra.mxu0 0.0
    %1251 = vmatpush.msra.mxu0 0.0
    %1252 = vmatpush.msra.mxu0 0.0
    %1253 = vmatpush.msra.mxu0 0.0
    %1254 = vmatpush.msra.mxu0 0.0
    %1255 = vmatpush.msra.mxu0 0.0
    %1256 = vmatpush.msra.mxu0 0.0
    %1257 = vmatpush.msra.mxu0 0.0
    %1258 = vmatpush.msra.mxu0 0.0
    %1259 = vmatpush.msra.mxu0 0.0
    %1260 = vmatpush.msra.mxu0 0.0
    %1261 = vmatpush.msra.mxu0 %v1245
    %1262 = vmatpush.msra.mxu0 %v1242
    %1263 = vmatmul.f32.gmra.mxu0 %v916
    %v1264 = vpop.f32.mrf.mxu0
    %v1265 = vadd.f32 0.0, %v1264
    %1266 = vdwg.mxu0
    %v1268 = vsel %vm918, %v1241, 0
    %1270 = vmatpush.msra.mxu0 0.0
    %1271 = vmatpush.msra.mxu0 0.0
    %1272 = vmatpush.msra.mxu0 0.0
    %1273 = vmatpush.msra.mxu0 0.0
    %1274 = vmatpush.msra.mxu0 0.0
    %1275 = vmatpush.msra.mxu0 0.0
    %1276 = vmatpush.msra.mxu0 0.0
    %1277 = vmatpush.msra.mxu0 0.0
    %1278 = vmatpush.msra.mxu0 0.0
    %1279 = vmatpush.msra.mxu0 0.0
    %1280 = vmatpush.msra.mxu0 0.0
    %1281 = vmatpush.msra.mxu0 0.0
    %1282 = vmatpush.msra.mxu0 0.0
    %1283 = vmatpush.msra.mxu0 0.0
    %1284 = vmatpush.msra.mxu0 %v1268
    %1285 = vmatpush.msra.mxu0 %v1240
    %1286 = vmatmul.f32.gmra.mxu0 %v943
    %v1287 = vpop.f32.mrf.mxu0
    %v1288 = vadd.f32 %v1265, %v1287
    %1289 = vdwg.mxu0
    %v1290 = vld [vmem:[%s1239 + $0x18] sm:$0xff]
    %v1291 = vld [vmem:[%s1239 + $0x20] sm:$0xf]
    %v1293 = vsel %vm918, %v1291, 0
    %1295 = vmatpush.msra.mxu0 0.0
    %1296 = vmatpush.msra.mxu0 0.0
    %1297 = vmatpush.msra.mxu0 0.0
    %1298 = vmatpush.msra.mxu0 0.0
    %1299 = vmatpush.msra.mxu0 0.0
    %1300 = vmatpush.msra.mxu0 0.0
    %1301 = vmatpush.msra.mxu0 0.0
    %1302 = vmatpush.msra.mxu0 0.0
    %1303 = vmatpush.msra.mxu0 0.0
    %1304 = vmatpush.msra.mxu0 0.0
    %1305 = vmatpush.msra.mxu0 0.0
    %1306 = vmatpush.msra.mxu0 0.0
    %1307 = vmatpush.msra.mxu0 0.0
    %1308 = vmatpush.msra.mxu0 0.0
    %1309 = vmatpush.msra.mxu0 %v1293
    %1310 = vmatpush.msra.mxu0 %v1290
    %1311 = vmatmul.f32.gmra.mxu0 %v971
    %v1312 = vpop.f32.mrf.mxu0
    %v1313 = vadd.f32 0.0, %v1312
    %1314 = vdwg.mxu0
    %v1315 = vadd.f32 %v1288, %v1313
    %v1316 = vld [vmem:[%s1239 + $0x24] sm:$0xff]
    %v1317 = vld [vmem:[%s1239 + $0x2c] sm:$0xf]
    %v1319 = vsel %vm918, %v1317, 0
    %1321 = vmatpush.msra.mxu0 0.0
    %1322 = vmatpush.msra.mxu0 0.0
    %1323 = vmatpush.msra.mxu0 0.0
    %1324 = vmatpush.msra.mxu0 0.0
    %1325 = vmatpush.msra.mxu0 0.0
    %1326 = vmatpush.msra.mxu0 0.0
    %1327 = vmatpush.msra.mxu0 0.0
    %1328 = vmatpush.msra.mxu0 0.0
    %1329 = vmatpush.msra.mxu0 0.0
    %1330 = vmatpush.msra.mxu0 0.0
    %1331 = vmatpush.msra.mxu0 0.0
    %1332 = vmatpush.msra.mxu0 0.0
    %1333 = vmatpush.msra.mxu0 0.0
    %1334 = vmatpush.msra.mxu0 0.0
    %1335 = vmatpush.msra.mxu0 %v1319
    %1336 = vmatpush.msra.mxu0 %v1316
    %1337 = vmatmul.f32.gmra.mxu0 %v1000
    %v1338 = vpop.f32.mrf.mxu0
    %v1339 = vadd.f32 0.0, %v1338
    %1340 = vdwg.mxu0
    %v1341 = vadd.f32 %v1315, %v1339
    %1342 = vxpose.xlu0.b32.start [1/16] %v1341, 128
    %1343 = vxpose.xlu0.b32.cont [2/16] 0.0, 128
    %1344 = vxpose.xlu0.b32.cont [3/16] 0.0, 128
    %1345 = vxpose.xlu0.b32.cont [4/16] 0.0, 128
    %1346 = vxpose.xlu0.b32.cont [5/16] 0.0, 128
    %1347 = vxpose.xlu0.b32.cont [6/16] 0.0, 128
    %1348 = vxpose.xlu0.b32.cont [7/16] 0.0, 128
    %1349 = vxpose.xlu0.b32.cont [8/16] 0.0, 128
    %1350 = vxpose.xlu0.b32.cont [9/16] 0.0, 128
    %1351 = vxpose.xlu0.b32.cont [10/16] 0.0, 128
    %1352 = vxpose.xlu0.b32.cont [11/16] 0.0, 128
    %1353 = vxpose.xlu0.b32.cont [12/16] 0.0, 128
    %1354 = vxpose.xlu0.b32.cont [13/16] 0.0, 128
    %1355 = vxpose.xlu0.b32.cont [14/16] 0.0, 128
    %1356 = vxpose.xlu0.b32.cont [15/16] 0.0, 128
    %1357 = vxpose.xlu0.b32.end [16/16] 0.0, 128
    %v1358 = vpop.trf.xlu0
    %v1359 = vpop.trf.xlu0
    %v1360 = vpop.trf.xlu0
    %v1361 = vpop.trf.xlu0
    %v1362 = vpop.trf.xlu0
    %v1363 = vpop.trf.xlu0
    %v1364 = vpop.trf.xlu0
    %v1365 = vpop.trf.xlu0
    %v1366 = vpop.trf.xlu0
    %v1367 = vpop.trf.xlu0
    %v1368 = vpop.trf.xlu0
    %v1369 = vpop.trf.xlu0
    %v1370 = vpop.trf.xlu0
    %v1371 = vpop.trf.xlu0
    %v1372 = vpop.trf.xlu0
    %v1373 = vpop.trf.xlu0
    %v1375 = vsel %vm677, %v1358, 0
    %1377 = vmatpush.msra.mxu0 0.0
    %1378 = vmatpush.msra.mxu0 0.0
    %1379 = vmatpush.msra.mxu0 0.0
    %1380 = vmatpush.msra.mxu0 0.0
    %1381 = vmatpush.msra.mxu0 0.0
    %1382 = vmatpush.msra.mxu0 0.0
    %1383 = vmatpush.msra.mxu0 0.0
    %1384 = vmatpush.msra.mxu0 0.0
    %1385 = vmatpush.msra.mxu0 0.0
    %1386 = vmatpush.msra.mxu0 0.0
    %1387 = vmatpush.msra.mxu0 0.0
    %1388 = vmatpush.msra.mxu0 0.0
    %1389 = vmatpush.msra.mxu0 0.0
    %1390 = vmatpush.msra.mxu0 0.0
    %1391 = vmatpush.msra.mxu0 0.0
    %1392 = vmatpush.msra.mxu0 %v387
    %1393 = vmatmul.f32.gmra.mxu0 %v1375
    %v1394 = vpop.f32.mrf.mxu0
    %v1395 = vadd.f32 0.0, %v1394
    %1396 = vdwg.mxu0
    %v1397 = vadd.f32 %v1237, %v1395
    %s1398 = scalar_lea.vmem %s3, 144
    %v1399 = vld [vmem:[%s1398] sm:$0xff]
    %v1400 = vld [vmem:[%s1398 + $0x8] sm:$0xf]
    %v1401 = vld [vmem:[%s1398 + $0xc] sm:$0xff]
    %v1402 = vld [vmem:[%s1398 + $0x14] sm:$0xf]
    %v1404 = vsel %vm918, %v1402, 0
    %1406 = vmatpush.msra.mxu0 0.0
    %1407 = vmatpush.msra.mxu0 0.0
    %1408 = vmatpush.msra.mxu0 0.0
    %1409 = vmatpush.msra.mxu0 0.0
    %1410 = vmatpush.msra.mxu0 0.0
    %1411 = vmatpush.msra.mxu0 0.0
    %1412 = vmatpush.msra.mxu0 0.0
    %1413 = vmatpush.msra.mxu0 0.0
    %1414 = vmatpush.msra.mxu0 0.0
    %1415 = vmatpush.msra.mxu0 0.0
    %1416 = vmatpush.msra.mxu0 0.0
    %1417 = vmatpush.msra.mxu0 0.0
    %1418 = vmatpush.msra.mxu0 0.0
    %1419 = vmatpush.msra.mxu0 0.0
    %1420 = vmatpush.msra.mxu0 %v1404
    %1421 = vmatpush.msra.mxu0 %v1401
    %1422 = vmatmul.f32.gmra.mxu0 %v916
    %v1423 = vpop.f32.mrf.mxu0
    %v1424 = vadd.f32 0.0, %v1423
    %1425 = vdwg.mxu0
    %v1427 = vsel %vm918, %v1400, 0
    %1429 = vmatpush.msra.mxu0 0.0
    %1430 = vmatpush.msra.mxu0 0.0
    %1431 = vmatpush.msra.mxu0 0.0
    %1432 = vmatpush.msra.mxu0 0.0
    %1433 = vmatpush.msra.mxu0 0.0
    %1434 = vmatpush.msra.mxu0 0.0
    %1435 = vmatpush.msra.mxu0 0.0
    %1436 = vmatpush.msra.mxu0 0.0
    %1437 = vmatpush.msra.mxu0 0.0
    %1438 = vmatpush.msra.mxu0 0.0
    %1439 = vmatpush.msra.mxu0 0.0
    %1440 = vmatpush.msra.mxu0 0.0
    %1441 = vmatpush.msra.mxu0 0.0
    %1442 = vmatpush.msra.mxu0 0.0
    %1443 = vmatpush.msra.mxu0 %v1427
    %1444 = vmatpush.msra.mxu0 %v1399
    %1445 = vmatmul.f32.gmra.mxu0 %v943
    %v1446 = vpop.f32.mrf.mxu0
    %v1447 = vadd.f32 %v1424, %v1446
    %1448 = vdwg.mxu0
    %v1449 = vld [vmem:[%s1398 + $0x18] sm:$0xff]
    %v1450 = vld [vmem:[%s1398 + $0x20] sm:$0xf]
    %v1452 = vsel %vm918, %v1450, 0
    %1454 = vmatpush.msra.mxu0 0.0
    %1455 = vmatpush.msra.mxu0 0.0
    %1456 = vmatpush.msra.mxu0 0.0
    %1457 = vmatpush.msra.mxu0 0.0
    %1458 = vmatpush.msra.mxu0 0.0
    %1459 = vmatpush.msra.mxu0 0.0
    %1460 = vmatpush.msra.mxu0 0.0
    %1461 = vmatpush.msra.mxu0 0.0
    %1462 = vmatpush.msra.mxu0 0.0
    %1463 = vmatpush.msra.mxu0 0.0
    %1464 = vmatpush.msra.mxu0 0.0
    %1465 = vmatpush.msra.mxu0 0.0
    %1466 = vmatpush.msra.mxu0 0.0
    %1467 = vmatpush.msra.mxu0 0.0
    %1468 = vmatpush.msra.mxu0 %v1452
    %1469 = vmatpush.msra.mxu0 %v1449
    %1470 = vmatmul.f32.gmra.mxu0 %v971
    %v1471 = vpop.f32.mrf.mxu0
    %v1472 = vadd.f32 0.0, %v1471
    %1473 = vdwg.mxu0
    %v1474 = vadd.f32 %v1447, %v1472
    %v1475 = vld [vmem:[%s1398 + $0x24] sm:$0xff]
    %v1476 = vld [vmem:[%s1398 + $0x2c] sm:$0xf]
    %v1478 = vsel %vm918, %v1476, 0
    %1480 = vmatpush.msra.mxu0 0.0
    %1481 = vmatpush.msra.mxu0 0.0
    %1482 = vmatpush.msra.mxu0 0.0
    %1483 = vmatpush.msra.mxu0 0.0
    %1484 = vmatpush.msra.mxu0 0.0
    %1485 = vmatpush.msra.mxu0 0.0
    %1486 = vmatpush.msra.mxu0 0.0
    %1487 = vmatpush.msra.mxu0 0.0
    %1488 = vmatpush.msra.mxu0 0.0
    %1489 = vmatpush.msra.mxu0 0.0
    %1490 = vmatpush.msra.mxu0 0.0
    %1491 = vmatpush.msra.mxu0 0.0
    %1492 = vmatpush.msra.mxu0 0.0
    %1493 = vmatpush.msra.mxu0 0.0
    %1494 = vmatpush.msra.mxu0 %v1478
    %1495 = vmatpush.msra.mxu0 %v1475
    %1496 = vmatmul.f32.gmra.mxu0 %v1000
    %v1497 = vpop.f32.mrf.mxu0
    %v1498 = vadd.f32 0.0, %v1497
    %1499 = vdwg.mxu0
    %v1500 = vadd.f32 %v1474, %v1498
    %1501 = vxpose.xlu0.b32.start [1/16] %v1500, 128
    %1502 = vxpose.xlu0.b32.cont [2/16] 0.0, 128
    %1503 = vxpose.xlu0.b32.cont [3/16] 0.0, 128
    %1504 = vxpose.xlu0.b32.cont [4/16] 0.0, 128
    %1505 = vxpose.xlu0.b32.cont [5/16] 0.0, 128
    %1506 = vxpose.xlu0.b32.cont [6/16] 0.0, 128
    %1507 = vxpose.xlu0.b32.cont [7/16] 0.0, 128
    %1508 = vxpose.xlu0.b32.cont [8/16] 0.0, 128
    %1509 = vxpose.xlu0.b32.cont [9/16] 0.0, 128
    %1510 = vxpose.xlu0.b32.cont [10/16] 0.0, 128
    %1511 = vxpose.xlu0.b32.cont [11/16] 0.0, 128
    %1512 = vxpose.xlu0.b32.cont [12/16] 0.0, 128
    %1513 = vxpose.xlu0.b32.cont [13/16] 0.0, 128
    %1514 = vxpose.xlu0.b32.cont [14/16] 0.0, 128
    %1515 = vxpose.xlu0.b32.cont [15/16] 0.0, 128
    %1516 = vxpose.xlu0.b32.end [16/16] 0.0, 128
    %v1517 = vpop.trf.xlu0
    %v1518 = vpop.trf.xlu0
    %v1519 = vpop.trf.xlu0
    %v1520 = vpop.trf.xlu0
    %v1521 = vpop.trf.xlu0
    %v1522 = vpop.trf.xlu0
    %v1523 = vpop.trf.xlu0
    %v1524 = vpop.trf.xlu0
    %v1525 = vpop.trf.xlu0
    %v1526 = vpop.trf.xlu0
    %v1527 = vpop.trf.xlu0
    %v1528 = vpop.trf.xlu0
    %v1529 = vpop.trf.xlu0
    %v1530 = vpop.trf.xlu0
    %v1531 = vpop.trf.xlu0
    %v1532 = vpop.trf.xlu0
    %v1534 = vsel %vm677, %v1517, 0
    %1536 = vmatpush.msra.mxu0 0.0
    %1537 = vmatpush.msra.mxu0 0.0
    %1538 = vmatpush.msra.mxu0 0.0
    %1539 = vmatpush.msra.mxu0 0.0
    %1540 = vmatpush.msra.mxu0 0.0
    %1541 = vmatpush.msra.mxu0 0.0
    %1542 = vmatpush.msra.mxu0 0.0
    %1543 = vmatpush.msra.mxu0 0.0
    %1544 = vmatpush.msra.mxu0 0.0
    %1545 = vmatpush.msra.mxu0 0.0
    %1546 = vmatpush.msra.mxu0 0.0
    %1547 = vmatpush.msra.mxu0 0.0
    %1548 = vmatpush.msra.mxu0 0.0
    %1549 = vmatpush.msra.mxu0 0.0
    %1550 = vmatpush.msra.mxu0 0.0
    %1551 = vmatpush.msra.mxu0 %v388
    %1552 = vmatmul.f32.gmra.mxu0 %v1534
    %v1553 = vpop.f32.mrf.mxu0
    %v1554 = vadd.f32 0.0, %v1553
    %1555 = vdwg.mxu0
    %v1556 = vadd.f32 %v1397, %v1554
    %s1557 = scalar_lea.vmem %s3, 192
    %v1558 = vld [vmem:[%s1557] sm:$0xff]
    %v1559 = vld [vmem:[%s1557 + $0x8] sm:$0xf]
    %v1560 = vld [vmem:[%s1557 + $0xc] sm:$0xff]
    %v1561 = vld [vmem:[%s1557 + $0x14] sm:$0xf]
    %v1563 = vsel %vm918, %v1561, 0
    %1565 = vmatpush.msra.mxu0 0.0
    %1566 = vmatpush.msra.mxu0 0.0
    %1567 = vmatpush.msra.mxu0 0.0
    %1568 = vmatpush.msra.mxu0 0.0
    %1569 = vmatpush.msra.mxu0 0.0
    %1570 = vmatpush.msra.mxu0 0.0
    %1571 = vmatpush.msra.mxu0 0.0
    %1572 = vmatpush.msra.mxu0 0.0
    %1573 = vmatpush.msra.mxu0 0.0
    %1574 = vmatpush.msra.mxu0 0.0
    %1575 = vmatpush.msra.mxu0 0.0
    %1576 = vmatpush.msra.mxu0 0.0
    %1577 = vmatpush.msra.mxu0 0.0
    %1578 = vmatpush.msra.mxu0 0.0
    %1579 = vmatpush.msra.mxu0 %v1563
    %1580 = vmatpush.msra.mxu0 %v1560
    %1581 = vmatmul.f32.gmra.mxu0 %v916
    %v1582 = vpop.f32.mrf.mxu0
    %v1583 = vadd.f32 0.0, %v1582
    %1584 = vdwg.mxu0
    %v1586 = vsel %vm918, %v1559, 0
    %1588 = vmatpush.msra.mxu0 0.0
    %1589 = vmatpush.msra.mxu0 0.0
    %1590 = vmatpush.msra.mxu0 0.0
    %1591 = vmatpush.msra.mxu0 0.0
    %1592 = vmatpush.msra.mxu0 0.0
    %1593 = vmatpush.msra.mxu0 0.0
    %1594 = vmatpush.msra.mxu0 0.0
    %1595 = vmatpush.msra.mxu0 0.0
    %1596 = vmatpush.msra.mxu0 0.0
    %1597 = vmatpush.msra.mxu0 0.0
    %1598 = vmatpush.msra.mxu0 0.0
    %1599 = vmatpush.msra.mxu0 0.0
    %1600 = vmatpush.msra.mxu0 0.0
    %1601 = vmatpush.msra.mxu0 0.0
    %1602 = vmatpush.msra.mxu0 %v1586
    %1603 = vmatpush.msra.mxu0 %v1558
    %1604 = vmatmul.f32.gmra.mxu0 %v943
    %v1605 = vpop.f32.mrf.mxu0
    %v1606 = vadd.f32 %v1583, %v1605
    %1607 = vdwg.mxu0
    %v1608 = vld [vmem:[%s1557 + $0x18] sm:$0xff]
    %v1609 = vld [vmem:[%s1557 + $0x20] sm:$0xf]
    %v1611 = vsel %vm918, %v1609, 0
    %1613 = vmatpush.msra.mxu0 0.0
    %1614 = vmatpush.msra.mxu0 0.0
    %1615 = vmatpush.msra.mxu0 0.0
    %1616 = vmatpush.msra.mxu0 0.0
    %1617 = vmatpush.msra.mxu0 0.0
    %1618 = vmatpush.msra.mxu0 0.0
    %1619 = vmatpush.msra.mxu0 0.0
    %1620 = vmatpush.msra.mxu0 0.0
    %1621 = vmatpush.msra.mxu0 0.0
    %1622 = vmatpush.msra.mxu0 0.0
    %1623 = vmatpush.msra.mxu0 0.0
    %1624 = vmatpush.msra.mxu0 0.0
    %1625 = vmatpush.msra.mxu0 0.0
    %1626 = vmatpush.msra.mxu0 0.0
    %1627 = vmatpush.msra.mxu0 %v1611
    %1628 = vmatpush.msra.mxu0 %v1608
    %1629 = vmatmul.f32.gmra.mxu0 %v971
    %v1630 = vpop.f32.mrf.mxu0
    %v1631 = vadd.f32 0.0, %v1630
    %1632 = vdwg.mxu0
    %v1633 = vadd.f32 %v1606, %v1631
    %v1634 = vld [vmem:[%s1557 + $0x24] sm:$0xff]
    %v1635 = vld [vmem:[%s1557 + $0x2c] sm:$0xf]
    %v1637 = vsel %vm918, %v1635, 0
    %1639 = vmatpush.msra.mxu0 0.0
    %1640 = vmatpush.msra.mxu0 0.0
    %1641 = vmatpush.msra.mxu0 0.0
    %1642 = vmatpush.msra.mxu0 0.0
    %1643 = vmatpush.msra.mxu0 0.0
    %1644 = vmatpush.msra.mxu0 0.0
    %1645 = vmatpush.msra.mxu0 0.0
    %1646 = vmatpush.msra.mxu0 0.0
    %1647 = vmatpush.msra.mxu0 0.0
    %1648 = vmatpush.msra.mxu0 0.0
    %1649 = vmatpush.msra.mxu0 0.0
    %1650 = vmatpush.msra.mxu0 0.0
    %1651 = vmatpush.msra.mxu0 0.0
    %1652 = vmatpush.msra.mxu0 0.0
    %1653 = vmatpush.msra.mxu0 %v1637
    %1654 = vmatpush.msra.mxu0 %v1634
    %1655 = vmatmul.f32.gmra.mxu0 %v1000
    %v1656 = vpop.f32.mrf.mxu0
    %v1657 = vadd.f32 0.0, %v1656
    %1658 = vdwg.mxu0
    %v1659 = vadd.f32 %v1633, %v1657
    %1660 = vxpose.xlu0.b32.start [1/16] %v1659, 128
    %1661 = vxpose.xlu0.b32.cont [2/16] 0.0, 128
    %1662 = vxpose.xlu0.b32.cont [3/16] 0.0, 128
    %1663 = vxpose.xlu0.b32.cont [4/16] 0.0, 128
    %1664 = vxpose.xlu0.b32.cont [5/16] 0.0, 128
    %1665 = vxpose.xlu0.b32.cont [6/16] 0.0, 128
    %1666 = vxpose.xlu0.b32.cont [7/16] 0.0, 128
    %1667 = vxpose.xlu0.b32.cont [8/16] 0.0, 128
    %1668 = vxpose.xlu0.b32.cont [9/16] 0.0, 128
    %1669 = vxpose.xlu0.b32.cont [10/16] 0.0, 128
    %1670 = vxpose.xlu0.b32.cont [11/16] 0.0, 128
    %1671 = vxpose.xlu0.b32.cont [12/16] 0.0, 128
    %1672 = vxpose.xlu0.b32.cont [13/16] 0.0, 128
    %1673 = vxpose.xlu0.b32.cont [14/16] 0.0, 128
    %1674 = vxpose.xlu0.b32.cont [15/16] 0.0, 128
    %1675 = vxpose.xlu0.b32.end [16/16] 0.0, 128
    %v1676 = vpop.trf.xlu0
    %v1677 = vpop.trf.xlu0
    %v1678 = vpop.trf.xlu0
    %v1679 = vpop.trf.xlu0
    %v1680 = vpop.trf.xlu0
    %v1681 = vpop.trf.xlu0
    %v1682 = vpop.trf.xlu0
    %v1683 = vpop.trf.xlu0
    %v1684 = vpop.trf.xlu0
    %v1685 = vpop.trf.xlu0
    %v1686 = vpop.trf.xlu0
    %v1687 = vpop.trf.xlu0
    %v1688 = vpop.trf.xlu0
    %v1689 = vpop.trf.xlu0
    %v1690 = vpop.trf.xlu0
    %v1691 = vpop.trf.xlu0
    %v1693 = vsel %vm677, %v1676, 0
    %1695 = vmatpush.msra.mxu0 0.0
    %1696 = vmatpush.msra.mxu0 0.0
    %1697 = vmatpush.msra.mxu0 0.0
    %1698 = vmatpush.msra.mxu0 0.0
    %1699 = vmatpush.msra.mxu0 0.0
    %1700 = vmatpush.msra.mxu0 0.0
    %1701 = vmatpush.msra.mxu0 0.0
    %1702 = vmatpush.msra.mxu0 0.0
    %1703 = vmatpush.msra.mxu0 0.0
    %1704 = vmatpush.msra.mxu0 0.0
    %1705 = vmatpush.msra.mxu0 0.0
    %1706 = vmatpush.msra.mxu0 0.0
    %1707 = vmatpush.msra.mxu0 0.0
    %1708 = vmatpush.msra.mxu0 0.0
    %1709 = vmatpush.msra.mxu0 0.0
    %1710 = vmatpush.msra.mxu0 %v389
    %1711 = vmatmul.f32.gmra.mxu0 %v1693
    %v1712 = vpop.f32.mrf.mxu0
    %v1713 = vadd.f32 0.0, %v1712
    %1714 = vdwg.mxu0
    %v1715 = vadd.f32 %v1556, %v1713
    %s1716 = scalar_lea.vmem %s3, 240
    %v1717 = vld [vmem:[%s1716] sm:$0xff]
    %v1718 = vld [vmem:[%s1716 + $0x8] sm:$0xf]
    %v1719 = vld [vmem:[%s1716 + $0xc] sm:$0xff]
    %v1720 = vld [vmem:[%s1716 + $0x14] sm:$0xf]
    %v1722 = vsel %vm918, %v1720, 0
    %1724 = vmatpush.msra.mxu0 0.0
    %1725 = vmatpush.msra.mxu0 0.0
    %1726 = vmatpush.msra.mxu0 0.0
    %1727 = vmatpush.msra.mxu0 0.0
    %1728 = vmatpush.msra.mxu0 0.0
    %1729 = vmatpush.msra.mxu0 0.0
    %1730 = vmatpush.msra.mxu0 0.0
    %1731 = vmatpush.msra.mxu0 0.0
    %1732 = vmatpush.msra.mxu0 0.0
    %1733 = vmatpush.msra.mxu0 0.0
    %1734 = vmatpush.msra.mxu0 0.0
    %1735 = vmatpush.msra.mxu0 0.0
    %1736 = vmatpush.msra.mxu0 0.0
    %1737 = vmatpush.msra.mxu0 0.0
    %1738 = vmatpush.msra.mxu0 %v1722
    %1739 = vmatpush.msra.mxu0 %v1719
    %1740 = vmatmul.f32.gmra.mxu0 %v916
    %v1741 = vpop.f32.mrf.mxu0
    %v1742 = vadd.f32 0.0, %v1741
    %1743 = vdwg.mxu0
    %v1745 = vsel %vm918, %v1718, 0
    %1747 = vmatpush.msra.mxu0 0.0
    %1748 = vmatpush.msra.mxu0 0.0
    %1749 = vmatpush.msra.mxu0 0.0
    %1750 = vmatpush.msra.mxu0 0.0
    %1751 = vmatpush.msra.mxu0 0.0
    %1752 = vmatpush.msra.mxu0 0.0
    %1753 = vmatpush.msra.mxu0 0.0
    %1754 = vmatpush.msra.mxu0 0.0
    %1755 = vmatpush.msra.mxu0 0.0
    %1756 = vmatpush.msra.mxu0 0.0
    %1757 = vmatpush.msra.mxu0 0.0
    %1758 = vmatpush.msra.mxu0 0.0
    %1759 = vmatpush.msra.mxu0 0.0
    %1760 = vmatpush.msra.mxu0 0.0
    %1761 = vmatpush.msra.mxu0 %v1745
    %1762 = vmatpush.msra.mxu0 %v1717
    %1763 = vmatmul.f32.gmra.mxu0 %v943
    %v1764 = vpop.f32.mrf.mxu0
    %v1765 = vadd.f32 %v1742, %v1764
    %1766 = vdwg.mxu0
    %v1767 = vld [vmem:[%s1716 + $0x18] sm:$0xff]
    %v1768 = vld [vmem:[%s1716 + $0x20] sm:$0xf]
    %v1770 = vsel %vm918, %v1768, 0
    %1772 = vmatpush.msra.mxu0 0.0
    %1773 = vmatpush.msra.mxu0 0.0
    %1774 = vmatpush.msra.mxu0 0.0
    %1775 = vmatpush.msra.mxu0 0.0
    %1776 = vmatpush.msra.mxu0 0.0
    %1777 = vmatpush.msra.mxu0 0.0
    %1778 = vmatpush.msra.mxu0 0.0
    %1779 = vmatpush.msra.mxu0 0.0
    %1780 = vmatpush.msra.mxu0 0.0
    %1781 = vmatpush.msra.mxu0 0.0
    %1782 = vmatpush.msra.mxu0 0.0
    %1783 = vmatpush.msra.mxu0 0.0
    %1784 = vmatpush.msra.mxu0 0.0
    %1785 = vmatpush.msra.mxu0 0.0
    %1786 = vmatpush.msra.mxu0 %v1770
    %1787 = vmatpush.msra.mxu0 %v1767
    %1788 = vmatmul.f32.gmra.mxu0 %v971
    %v1789 = vpop.f32.mrf.mxu0
    %v1790 = vadd.f32 0.0, %v1789
    %1791 = vdwg.mxu0
    %v1792 = vadd.f32 %v1765, %v1790
    %v1793 = vld [vmem:[%s1716 + $0x24] sm:$0xff]
    %v1794 = vld [vmem:[%s1716 + $0x2c] sm:$0xf]
    %v1796 = vsel %vm918, %v1794, 0
    %1798 = vmatpush.msra.mxu0 0.0
    %1799 = vmatpush.msra.mxu0 0.0
    %1800 = vmatpush.msra.mxu0 0.0
    %1801 = vmatpush.msra.mxu0 0.0
    %1802 = vmatpush.msra.mxu0 0.0
    %1803 = vmatpush.msra.mxu0 0.0
    %1804 = vmatpush.msra.mxu0 0.0
    %1805 = vmatpush.msra.mxu0 0.0
    %1806 = vmatpush.msra.mxu0 0.0
    %1807 = vmatpush.msra.mxu0 0.0
    %1808 = vmatpush.msra.mxu0 0.0
    %1809 = vmatpush.msra.mxu0 0.0
    %1810 = vmatpush.msra.mxu0 0.0
    %1811 = vmatpush.msra.mxu0 0.0
    %1812 = vmatpush.msra.mxu0 %v1796
    %1813 = vmatpush.msra.mxu0 %v1793
    %1814 = vmatmul.f32.gmra.mxu0 %v1000
    %v1815 = vpop.f32.mrf.mxu0
    %v1816 = vadd.f32 0.0, %v1815
    %1817 = vdwg.mxu0
    %v1818 = vadd.f32 %v1792, %v1816
    %1819 = vxpose.xlu0.b32.start [1/16] %v1818, 128
    %1820 = vxpose.xlu0.b32.cont [2/16] 0.0, 128
    %1821 = vxpose.xlu0.b32.cont [3/16] 0.0, 128
    %1822 = vxpose.xlu0.b32.cont [4/16] 0.0, 128
    %1823 = vxpose.xlu0.b32.cont [5/16] 0.0, 128
    %1824 = vxpose.xlu0.b32.cont [6/16] 0.0, 128
    %1825 = vxpose.xlu0.b32.cont [7/16] 0.0, 128
    %1826 = vxpose.xlu0.b32.cont [8/16] 0.0, 128
    %1827 = vxpose.xlu0.b32.cont [9/16] 0.0, 128
    %1828 = vxpose.xlu0.b32.cont [10/16] 0.0, 128
    %1829 = vxpose.xlu0.b32.cont [11/16] 0.0, 128
    %1830 = vxpose.xlu0.b32.cont [12/16] 0.0, 128
    %1831 = vxpose.xlu0.b32.cont [13/16] 0.0, 128
    %1832 = vxpose.xlu0.b32.cont [14/16] 0.0, 128
    %1833 = vxpose.xlu0.b32.cont [15/16] 0.0, 128
    %1834 = vxpose.xlu0.b32.end [16/16] 0.0, 128
    %v1835 = vpop.trf.xlu0
    %v1836 = vpop.trf.xlu0
    %v1837 = vpop.trf.xlu0
    %v1838 = vpop.trf.xlu0
    %v1839 = vpop.trf.xlu0
    %v1840 = vpop.trf.xlu0
    %v1841 = vpop.trf.xlu0
    %v1842 = vpop.trf.xlu0
    %v1843 = vpop.trf.xlu0
    %v1844 = vpop.trf.xlu0
    %v1845 = vpop.trf.xlu0
    %v1846 = vpop.trf.xlu0
    %v1847 = vpop.trf.xlu0
    %v1848 = vpop.trf.xlu0
    %v1849 = vpop.trf.xlu0
    %v1850 = vpop.trf.xlu0
    %v1852 = vsel %vm677, %v1835, 0
    %1854 = vmatpush.msra.mxu0 0.0
    %1855 = vmatpush.msra.mxu0 0.0
    %1856 = vmatpush.msra.mxu0 0.0
    %1857 = vmatpush.msra.mxu0 0.0
    %1858 = vmatpush.msra.mxu0 0.0
    %1859 = vmatpush.msra.mxu0 0.0
    %1860 = vmatpush.msra.mxu0 0.0
    %1861 = vmatpush.msra.mxu0 0.0
    %1862 = vmatpush.msra.mxu0 0.0
    %1863 = vmatpush.msra.mxu0 0.0
    %1864 = vmatpush.msra.mxu0 0.0
    %1865 = vmatpush.msra.mxu0 0.0
    %1866 = vmatpush.msra.mxu0 0.0
    %1867 = vmatpush.msra.mxu0 0.0
    %1868 = vmatpush.msra.mxu0 0.0
    %1869 = vmatpush.msra.mxu0 %v390
    %1870 = vmatmul.f32.gmra.mxu0 %v1852
    %v1871 = vpop.f32.mrf.mxu0
    %v1872 = vadd.f32 0.0, %v1871
    %1873 = vdwg.mxu0
    %v1874 = vadd.f32 %v1715, %v1872
    %v1875 = vadd.f32 %v1874, %v585
    %v1876 = vsel %vm540, %v1875, 0.0
    %1877 = vadd.xlane.f32.xlu0 %v1876
    %v1878 = vpop.xlane.xlu0 %1877
    %v1879 = vrcp.pop 48.0
    %v1880 = vmul.f32 48.0, %v1879
    %v1881 = vsub.f32 1.0, %v1880
    %v1882 = vmul.f32 %v1879, %v1881
    %v1883 = vadd.f32 %v1879, %v1882
    %vm1884 = vweird.f32 %v1879
    %v1885 = vsel %vm1884, %v1879, %v1883
    %v1886 = vmul.f32 %v1878, %v1885
    %v1887 = vsub.f32 %v1875, %v1886
    %v1888 = vmul.f32 %v1887, %v1887
    %v1889 = vsel %vm540, %v1888, 0.0
    %1890 = vadd.xlane.f32.xlu0 %v1889
    %v1891 = vpop.xlane.xlu0 %1890
    %v1892 = vmul.f32 %v1891, %v1885
    %v1893 = vadd.f32 %v1892, 1e-05
    %v1894 = vrsqrt.pop %v1893
    %v1895 = vmul.f32 %v1894, %v1893
    %v1896 = vmul.f32 %v1895, %v1894
    %v1897 = vmul.f32 0.5, %v1896
    %v1898 = vsub.f32 1.5, %v1897
    %v1899 = vmul.f32 %v1894, %v1898
    %vm1900 = vweird.f32 %v1893
    %vm1901 = vweird.f32 %v1894
    %vm1902 = vmor %vm1900, %vm1901
    %v1903 = vsel %vm1902, %v1894, %v1899
    %v1904 = vmul.f32 %v1887, %v1903
    %v1906 = vperm.slane %v382, 0
    %v1908 = vmul.f32 %v1904, %v1906
    %v1910 = vperm.slane %v381, 0
    %v1912 = vadd.f32 %v1908, %v1910
    %v1914 = vperm.slane %v374, 0
    %v1917 = vsel %vm540, %v1912, 0
    %1919 = vmatpush.msra.mxu0 0.0
    %1920 = vmatpush.msra.mxu0 0.0
    %1921 = vmatpush.msra.mxu0 0.0
    %1922 = vmatpush.msra.mxu0 0.0
    %1923 = vmatpush.msra.mxu0 0.0
    %1924 = vmatpush.msra.mxu0 0.0
    %1925 = vmatpush.msra.mxu0 0.0
    %1926 = vmatpush.msra.mxu0 0.0
    %1927 = vmatpush.msra.mxu0 0.0
    %1928 = vmatpush.msra.mxu0 0.0
    %1929 = vmatpush.msra.mxu0 %v380
    %1930 = vmatpush.msra.mxu0 %v379
    %1931 = vmatpush.msra.mxu0 %v378
    %1932 = vmatpush.msra.mxu0 %v377
    %1933 = vmatpush.msra.mxu0 %v376
    %1934 = vmatpush.msra.mxu0 %v375
    %1935 = vmatmul.f32.gmra.mxu0 %v1917
    %v1936 = vpop.f32.mrf.mxu0
    %v1937 = vadd.f32 %v1914, %v1936
    %1938 = vdwg.mxu0
    %v1939 = vadd.f32 %v1937, %v1912
    %v1940 = vsel %vm540, %v1939, 0.0
    %1941 = vadd.xlane.f32.xlu0 %v1940
    %v1942 = vpop.xlane.xlu0 %1941
    %v1943 = vmul.f32 %v1942, %v1885
    %v1944 = vsub.f32 %v1939, %v1943
    %v1945 = vmul.f32 %v1944, %v1944
    %v1946 = vsel %vm540, %v1945, 0.0
    %1947 = vadd.xlane.f32.xlu0 %v1946
    %v1948 = vpop.xlane.xlu0 %1947
    %v1949 = vmul.f32 %v1948, %v1885
    %v1950 = vadd.f32 %v1949, 1e-05
    %v1951 = vrsqrt.pop %v1950
    %v1952 = vmul.f32 %v1951, %v1950
    %v1953 = vmul.f32 %v1952, %v1951
    %v1954 = vmul.f32 0.5, %v1953
    %v1955 = vsub.f32 1.5, %v1954
    %v1956 = vmul.f32 %v1951, %v1955
    %vm1957 = vweird.f32 %v1950
    %vm1958 = vweird.f32 %v1951
    %vm1959 = vmor %vm1957, %vm1958
    %v1960 = vsel %vm1959, %v1951, %v1956
    %v1961 = vmul.f32 %v1944, %v1960
    %v1963 = vperm.slane %v384, 0
    %v1965 = vmul.f32 %v1961, %v1963
    %v1967 = vperm.slane %v383, 0
    %v1969 = vadd.f32 %v1965, %v1967
    %v1971 = vsel %vm540, %v1969, 0
    %1973 = vmatpush.msra.mxu0 0.0
    %1974 = vmatpush.msra.mxu0 0.0
    %1975 = vmatpush.msra.mxu0 0.0
    %1976 = vmatpush.msra.mxu0 0.0
    %1977 = vmatpush.msra.mxu0 0.0
    %1978 = vmatpush.msra.mxu0 0.0
    %1979 = vmatpush.msra.mxu0 0.0
    %1980 = vmatpush.msra.mxu0 0.0
    %1981 = vmatpush.msra.mxu0 0.0
    %1982 = vmatpush.msra.mxu0 0.0
    %1983 = vmatpush.msra.mxu0 %v437
    %1984 = vmatpush.msra.mxu0 %v436
    %1985 = vmatpush.msra.mxu0 %v435
    %1986 = vmatpush.msra.mxu0 %v434
    %1987 = vmatpush.msra.mxu0 %v433
    %1988 = vmatpush.msra.mxu0 %v432
    %1989 = vmatmul.f32.gmra.mxu0 %v1971
    %v1990 = vpop.f32.mrf.mxu0
    %v1991 = vadd.f32 0.0, %v1990
    %1992 = vdwg.mxu0
    %1993 = vmatpush.msra.mxu0 0.0
    %1994 = vmatpush.msra.mxu0 0.0
    %1995 = vmatpush.msra.mxu0 0.0
    %1996 = vmatpush.msra.mxu0 0.0
    %1997 = vmatpush.msra.mxu0 0.0
    %1998 = vmatpush.msra.mxu0 0.0
    %1999 = vmatpush.msra.mxu0 0.0
    %2000 = vmatpush.msra.mxu0 0.0
    %2001 = vmatpush.msra.mxu0 0.0
    %2002 = vmatpush.msra.mxu0 0.0
    %2003 = vmatpush.msra.mxu0 %v431
    %2004 = vmatpush.msra.mxu0 %v430
    %2005 = vmatpush.msra.mxu0 %v429
    %2006 = vmatpush.msra.mxu0 %v428
    %2007 = vmatpush.msra.mxu0 %v427
    %2008 = vmatpush.msra.mxu0 %v426
    %2009 = vmatmul.f32.gmra.mxu0 %v1971
    %v2010 = vpop.f32.mrf.mxu0
    %v2011 = vadd.f32 0.0, %v2010
    %2012 = vdwg.mxu0
    %2013 = vmatpush.msra.mxu0 0.0
    %2014 = vmatpush.msra.mxu0 0.0
    %2015 = vmatpush.msra.mxu0 0.0
    %2016 = vmatpush.msra.mxu0 0.0
    %2017 = vmatpush.msra.mxu0 0.0
    %2018 = vmatpush.msra.mxu0 0.0
    %2019 = vmatpush.msra.mxu0 0.0
    %2020 = vmatpush.msra.mxu0 0.0
    %2021 = vmatpush.msra.mxu0 0.0
    %2022 = vmatpush.msra.mxu0 0.0
    %2023 = vmatpush.msra.mxu0 %v443
    %2024 = vmatpush.msra.mxu0 %v442
    %2025 = vmatpush.msra.mxu0 %v441
    %2026 = vmatpush.msra.mxu0 %v440
    %2027 = vmatpush.msra.mxu0 %v439
    %2028 = vmatpush.msra.mxu0 %v438
    %2029 = vmatmul.f32.gmra.mxu0 %v1971
    %v2030 = vpop.f32.mrf.mxu0
    %v2031 = vadd.f32 0.0, %v2030
    %2032 = vdwg.mxu0
    %v2034 = vsel %vm649, %v1991, 0
    %v2037 = vsel %vm649, %v2011, 0
    %2039 = vmatpush.xpose.msra.mxu0 0.0
    %2040 = vmatpush.xpose.msra.mxu0 0.0
    %2041 = vmatpush.xpose.msra.mxu0 0.0
    %2042 = vmatpush.xpose.msra.mxu0 0.0
    %2043 = vmatpush.xpose.msra.mxu0 0.0
    %2044 = vmatpush.xpose.msra.mxu0 0.0
    %2045 = vmatpush.xpose.msra.mxu0 0.0
    %2046 = vmatpush.xpose.msra.mxu0 0.0
    %2047 = vmatpush.xpose.msra.mxu0 0.0
    %2048 = vmatpush.xpose.msra.mxu0 0.0
    %2049 = vmatpush.xpose.msra.mxu0 0.0
    %2050 = vmatpush.xpose.msra.mxu0 0.0
    %2051 = vmatpush.xpose.msra.mxu0 0.0
    %2052 = vmatpush.xpose.msra.mxu0 0.0
    %2053 = vmatpush.xpose.msra.mxu0 0.0
    %2054 = vmatpush.xpose.msra.mxu0 %v2037
    %2055 = vmatmul.f32.gmra.mxu0 %v2034
    %v2056 = vpop.f32.mrf.mxu0
    %v2057 = vadd.f32 0.0, %v2056
    %2058 = vdwg.mxu0
    %v2059 = vmul.f32 %v2057, 0.28867513
    %v2060 = vsel %vm677, %v2059, -inf
    %2061 = vmax.xlane.f32.xlu0 %v2060
    %v2062 = vpop.xlane.xlu0 %2061
    %v2063 = vsub.f32 %v2059, %v2062
    %v2064 = vmul.f32 %v2063, 1.442695
    %v2065 = vpow.pop %v2064
    %v2066 = vsel %vm677, %v2065, 0.0
    %2067 = vadd.xlane.f32.xlu0 %v2066
    %v2068 = vpop.xlane.xlu0 %2067
    %v2069 = vrcp.pop %v2068
    %v2070 = vmul.f32 %v2065, %v2069
    %v2072 = vsel %vm677, %v2070, 0
    %2074 = vmatpush.msra.mxu0 0.0
    %2075 = vmatpush.msra.mxu0 0.0
    %2076 = vmatpush.msra.mxu0 0.0
    %2077 = vmatpush.msra.mxu0 0.0
    %2078 = vmatpush.msra.mxu0 0.0
    %2079 = vmatpush.msra.mxu0 0.0
    %2080 = vmatpush.msra.mxu0 0.0
    %2081 = vmatpush.msra.mxu0 0.0
    %2082 = vmatpush.msra.mxu0 0.0
    %2083 = vmatpush.msra.mxu0 0.0
    %2084 = vmatpush.msra.mxu0 0.0
    %2085 = vmatpush.msra.mxu0 0.0
    %2086 = vmatpush.msra.mxu0 0.0
    %2087 = vmatpush.msra.mxu0 0.0
    %2088 = vmatpush.msra.mxu0 0.0
    %2089 = vmatpush.msra.mxu0 %v2031
    %2090 = vmatmul.f32.gmra.mxu0 %v2072
    %v2091 = vpop.f32.mrf.mxu0
    %v2092 = vadd.f32 0.0, %v2091
    %2093 = vdwg.mxu0
    %2094 = vrot.lane.b32.xlu0 %v1991, 116
    %v2095 = vpop.permute.xlu0 %2094
    %2096 = vrot.lane.b32.xlu0 %v2011, 116
    %v2097 = vpop.permute.xlu0 %2096
    %v2098 = vsel %vm649, %v2095, 0
    %v2100 = vsel %vm649, %v2097, 0
    %2102 = vmatpush.xpose.msra.mxu0 0.0
    %2103 = vmatpush.xpose.msra.mxu0 0.0
    %2104 = vmatpush.xpose.msra.mxu0 0.0
    %2105 = vmatpush.xpose.msra.mxu0 0.0
    %2106 = vmatpush.xpose.msra.mxu0 0.0
    %2107 = vmatpush.xpose.msra.mxu0 0.0
    %2108 = vmatpush.xpose.msra.mxu0 0.0
    %2109 = vmatpush.xpose.msra.mxu0 0.0
    %2110 = vmatpush.xpose.msra.mxu0 0.0
    %2111 = vmatpush.xpose.msra.mxu0 0.0
    %2112 = vmatpush.xpose.msra.mxu0 0.0
    %2113 = vmatpush.xpose.msra.mxu0 0.0
    %2114 = vmatpush.xpose.msra.mxu0 0.0
    %2115 = vmatpush.xpose.msra.mxu0 0.0
    %2116 = vmatpush.xpose.msra.mxu0 0.0
    %2117 = vmatpush.xpose.msra.mxu0 %v2100
    %2118 = vmatmul.f32.gmra.mxu0 %v2098
    %v2119 = vpop.f32.mrf.mxu0
    %v2120 = vadd.f32 0.0, %v2119
    %2121 = vdwg.mxu0
    %v2122 = vmul.f32 %v2120, 0.28867513
    %v2123 = vsel %vm677, %v2122, -inf
    %2124 = vmax.xlane.f32.xlu0 %v2123
    %v2125 = vpop.xlane.xlu0 %2124
    %v2126 = vsub.f32 %v2122, %v2125
    %v2127 = vmul.f32 %v2126, 1.442695
    %v2128 = vpow.pop %v2127
    %v2129 = vsel %vm677, %v2128, 0.0
    %2130 = vadd.xlane.f32.xlu0 %v2129
    %v2131 = vpop.xlane.xlu0 %2130
    %v2132 = vrcp.pop %v2131
    %v2133 = vmul.f32 %v2128, %v2132
    %2135 = vrot.lane.b32.xlu0 %v2031, 116
    %v2136 = vpop.permute.xlu0 %2135
    %v2139 = vsel %vm677, %v2133, 0
    %2141 = vmatpush.msra.mxu0 0.0
    %2142 = vmatpush.msra.mxu0 0.0
    %2143 = vmatpush.msra.mxu0 0.0
    %2144 = vmatpush.msra.mxu0 0.0
    %2145 = vmatpush.msra.mxu0 0.0
    %2146 = vmatpush.msra.mxu0 0.0
    %2147 = vmatpush.msra.mxu0 0.0
    %2148 = vmatpush.msra.mxu0 0.0
    %2149 = vmatpush.msra.mxu0 0.0
    %2150 = vmatpush.msra.mxu0 0.0
    %2151 = vmatpush.msra.mxu0 0.0
    %2152 = vmatpush.msra.mxu0 0.0
    %2153 = vmatpush.msra.mxu0 0.0
    %2154 = vmatpush.msra.mxu0 0.0
    %2155 = vmatpush.msra.mxu0 0.0
    %2156 = vmatpush.msra.mxu0 %v2136
    %2157 = vmatmul.f32.gmra.mxu0 %v2139
    %v2158 = vpop.f32.mrf.mxu0
    %v2159 = vadd.f32 0.0, %v2158
    %2160 = vdwg.mxu0
    %2161 = vrot.lane.b32.xlu0 %v1991, 104
    %v2162 = vpop.permute.xlu0 %2161
    %2163 = vrot.lane.b32.xlu0 %v2011, 104
    %v2164 = vpop.permute.xlu0 %2163
    %v2165 = vsel %vm649, %v2162, 0
    %v2167 = vsel %vm649, %v2164, 0
    %2169 = vmatpush.xpose.msra.mxu0 0.0
    %2170 = vmatpush.xpose.msra.mxu0 0.0
    %2171 = vmatpush.xpose.msra.mxu0 0.0
    %2172 = vmatpush.xpose.msra.mxu0 0.0
    %2173 = vmatpush.xpose.msra.mxu0 0.0
    %2174 = vmatpush.xpose.msra.mxu0 0.0
    %2175 = vmatpush.xpose.msra.mxu0 0.0
    %2176 = vmatpush.xpose.msra.mxu0 0.0
    %2177 = vmatpush.xpose.msra.mxu0 0.0
    %2178 = vmatpush.xpose.msra.mxu0 0.0
    %2179 = vmatpush.xpose.msra.mxu0 0.0
    %2180 = vmatpush.xpose.msra.mxu0 0.0
    %2181 = vmatpush.xpose.msra.mxu0 0.0
    %2182 = vmatpush.xpose.msra.mxu0 0.0
    %2183 = vmatpush.xpose.msra.mxu0 0.0
    %2184 = vmatpush.xpose.msra.mxu0 %v2167
    %2185 = vmatmul.f32.gmra.mxu0 %v2165
    %v2186 = vpop.f32.mrf.mxu0
    %v2187 = vadd.f32 0.0, %v2186
    %2188 = vdwg.mxu0
    %v2189 = vmul.f32 %v2187, 0.28867513
    %v2190 = vsel %vm677, %v2189, -inf
    %2191 = vmax.xlane.f32.xlu0 %v2190
    %v2192 = vpop.xlane.xlu0 %2191
    %v2193 = vsub.f32 %v2189, %v2192
    %v2194 = vmul.f32 %v2193, 1.442695
    %v2195 = vpow.pop %v2194
    %v2196 = vsel %vm677, %v2195, 0.0
    %2197 = vadd.xlane.f32.xlu0 %v2196
    %v2198 = vpop.xlane.xlu0 %2197
    %v2199 = vrcp.pop %v2198
    %v2200 = vmul.f32 %v2195, %v2199
    %2201 = vrot.lane.b32.xlu0 %v2031, 104
    %v2202 = vpop.permute.xlu0 %2201
    %v2205 = vsel %vm677, %v2200, 0
    %2207 = vmatpush.msra.mxu0 0.0
    %2208 = vmatpush.msra.mxu0 0.0
    %2209 = vmatpush.msra.mxu0 0.0
    %2210 = vmatpush.msra.mxu0 0.0
    %2211 = vmatpush.msra.mxu0 0.0
    %2212 = vmatpush.msra.mxu0 0.0
    %2213 = vmatpush.msra.mxu0 0.0
    %2214 = vmatpush.msra.mxu0 0.0
    %2215 = vmatpush.msra.mxu0 0.0
    %2216 = vmatpush.msra.mxu0 0.0
    %2217 = vmatpush.msra.mxu0 0.0
    %2218 = vmatpush.msra.mxu0 0.0
    %2219 = vmatpush.msra.mxu0 0.0
    %2220 = vmatpush.msra.mxu0 0.0
    %2221 = vmatpush.msra.mxu0 0.0
    %2222 = vmatpush.msra.mxu0 %v2202
    %2223 = vmatmul.f32.gmra.mxu0 %v2205
    %v2224 = vpop.f32.mrf.mxu0
    %v2225 = vadd.f32 0.0, %v2224
    %2226 = vdwg.mxu0
    %2227 = vrot.lane.b32.xlu0 %v1991, 92
    %v2228 = vpop.permute.xlu0 %2227
    %2229 = vrot.lane.b32.xlu0 %v2011, 92
    %v2230 = vpop.permute.xlu0 %2229
    %v2231 = vsel %vm649, %v2228, 0
    %v2233 = vsel %vm649, %v2230, 0
    %2235 = vmatpush.xpose.msra.mxu0 0.0
    %2236 = vmatpush.xpose.msra.mxu0 0.0
    %2237 = vmatpush.xpose.msra.mxu0 0.0
    %2238 = vmatpush.xpose.msra.mxu0 0.0
    %2239 = vmatpush.xpose.msra.mxu0 0.0
    %2240 = vmatpush.xpose.msra.mxu0 0.0
    %2241 = vmatpush.xpose.msra.mxu0 0.0
    %2242 = vmatpush.xpose.msra.mxu0 0.0
    %2243 = vmatpush.xpose.msra.mxu0 0.0
    %2244 = vmatpush.xpose.msra.mxu0 0.0
    %2245 = vmatpush.xpose.msra.mxu0 0.0
    %2246 = vmatpush.xpose.msra.mxu0 0.0
    %2247 = vmatpush.xpose.msra.mxu0 0.0
    %2248 = vmatpush.xpose.msra.mxu0 0.0
    %2249 = vmatpush.xpose.msra.mxu0 0.0
    %2250 = vmatpush.xpose.msra.mxu0 %v2233
    %2251 = vmatmul.f32.gmra.mxu0 %v2231
    %v2252 = vpop.f32.mrf.mxu0
    %v2253 = vadd.f32 0.0, %v2252
    %2254 = vdwg.mxu0
    %v2255 = vmul.f32 %v2253, 0.28867513
    %v2256 = vsel %vm677, %v2255, -inf
    %2257 = vmax.xlane.f32.xlu0 %v2256
    %v2258 = vpop.xlane.xlu0 %2257
    %v2259 = vsub.f32 %v2255, %v2258
    %v2260 = vmul.f32 %v2259, 1.442695
    %v2261 = vpow.pop %v2260
    %v2262 = vsel %vm677, %v2261, 0.0
    %2263 = vadd.xlane.f32.xlu0 %v2262
    %v2264 = vpop.xlane.xlu0 %2263
    %v2265 = vrcp.pop %v2264
    %v2266 = vmul.f32 %v2261, %v2265
    %2267 = vrot.lane.b32.xlu0 %v2031, 92
    %v2268 = vpop.permute.xlu0 %2267
    %v2271 = vsel %vm677, %v2266, 0
    %2273 = vmatpush.msra.mxu0 0.0
    %2274 = vmatpush.msra.mxu0 0.0
    %2275 = vmatpush.msra.mxu0 0.0
    %2276 = vmatpush.msra.mxu0 0.0
    %2277 = vmatpush.msra.mxu0 0.0
    %2278 = vmatpush.msra.mxu0 0.0
    %2279 = vmatpush.msra.mxu0 0.0
    %2280 = vmatpush.msra.mxu0 0.0
    %2281 = vmatpush.msra.mxu0 0.0
    %2282 = vmatpush.msra.mxu0 0.0
    %2283 = vmatpush.msra.mxu0 0.0
    %2284 = vmatpush.msra.mxu0 0.0
    %2285 = vmatpush.msra.mxu0 0.0
    %2286 = vmatpush.msra.mxu0 0.0
    %2287 = vmatpush.msra.mxu0 0.0
    %2288 = vmatpush.msra.mxu0 %v2268
    %2289 = vmatmul.f32.gmra.mxu0 %v2271
    %v2290 = vpop.f32.mrf.mxu0
    %v2291 = vadd.f32 0.0, %v2290
    %2292 = vdwg.mxu0
    %v2294 = vsel %vm649, %v2159, 0
    %2296 = vmatpush.msra.mxu0 0.0
    %2297 = vmatpush.msra.mxu0 0.0
    %2298 = vmatpush.msra.mxu0 0.0
    %2299 = vmatpush.msra.mxu0 0.0
    %2300 = vmatpush.msra.mxu0 0.0
    %2301 = vmatpush.msra.mxu0 0.0
    %2302 = vmatpush.msra.mxu0 0.0
    %2303 = vmatpush.msra.mxu0 0.0
    %2304 = vmatpush.msra.mxu0 0.0
    %2305 = vmatpush.msra.mxu0 0.0
    %2306 = vmatpush.msra.mxu0 0.0
    %2307 = vmatpush.msra.mxu0 0.0
    %2308 = vmatpush.msra.mxu0 0.0
    %2309 = vmatpush.msra.mxu0 0.0
    %2310 = vmatpush.msra.mxu0 %v920
    %2311 = vmatpush.msra.mxu0 %v913
    %2312 = vmatmul.f32.gmra.mxu0 %v2294
    %v2313 = vpop.f32.mrf.mxu0
    %v2314 = vadd.f32 0.0, %v2313
    %2315 = vdwg.mxu0
    %v2317 = vsel %vm649, %v2092, 0
    %2319 = vmatpush.msra.mxu0 0.0
    %2320 = vmatpush.msra.mxu0 0.0
    %2321 = vmatpush.msra.mxu0 0.0
    %2322 = vmatpush.msra.mxu0 0.0
    %2323 = vmatpush.msra.mxu0 0.0
    %2324 = vmatpush.msra.mxu0 0.0
    %2325 = vmatpush.msra.mxu0 0.0
    %2326 = vmatpush.msra.mxu0 0.0
    %2327 = vmatpush.msra.mxu0 0.0
    %2328 = vmatpush.msra.mxu0 0.0
    %2329 = vmatpush.msra.mxu0 0.0
    %2330 = vmatpush.msra.mxu0 0.0
    %2331 = vmatpush.msra.mxu0 0.0
    %2332 = vmatpush.msra.mxu0 0.0
    %2333 = vmatpush.msra.mxu0 %v946
    %2334 = vmatpush.msra.mxu0 %v911
    %2335 = vmatmul.f32.gmra.mxu0 %v2317
    %v2336 = vpop.f32.mrf.mxu0
    %v2337 = vadd.f32 %v2314, %v2336
    %2338 = vdwg.mxu0
    %v2340 = vsel %vm649, %v2225, 0
    %2342 = vmatpush.msra.mxu0 0.0
    %2343 = vmatpush.msra.mxu0 0.0
    %2344 = vmatpush.msra.mxu0 0.0
    %2345 = vmatpush.msra.mxu0 0.0
    %2346 = vmatpush.msra.mxu0 0.0
    %2347 = vmatpush.msra.mxu0 0.0
    %2348 = vmatpush.msra.mxu0 0.0
    %2349 = vmatpush.msra.mxu0 0.0
    %2350 = vmatpush.msra.mxu0 0.0
    %2351 = vmatpush.msra.mxu0 0.0
    %2352 = vmatpush.msra.mxu0 0.0
    %2353 = vmatpush.msra.mxu0 0.0
    %2354 = vmatpush.msra.mxu0 0.0
    %2355 = vmatpush.msra.mxu0 0.0
    %2356 = vmatpush.msra.mxu0 %v974
    %2357 = vmatpush.msra.mxu0 %v968
    %2358 = vmatmul.f32.gmra.mxu0 %v2340
    %v2359 = vpop.f32.mrf.mxu0
    %v2360 = vadd.f32 0.0, %v2359
    %2361 = vdwg.mxu0
    %v2362 = vadd.f32 %v2337, %v2360
    %v2364 = vsel %vm649, %v2291, 0
    %2366 = vmatpush.msra.mxu0 0.0
    %2367 = vmatpush.msra.mxu0 0.0
    %2368 = vmatpush.msra.mxu0 0.0
    %2369 = vmatpush.msra.mxu0 0.0
    %2370 = vmatpush.msra.mxu0 0.0
    %2371 = vmatpush.msra.mxu0 0.0
    %2372 = vmatpush.msra.mxu0 0.0
    %2373 = vmatpush.msra.mxu0 0.0
    %2374 = vmatpush.msra.mxu0 0.0
    %2375 = vmatpush.msra.mxu0 0.0
    %2376 = vmatpush.msra.mxu0 0.0
    %2377 = vmatpush.msra.mxu0 0.0
    %2378 = vmatpush.msra.mxu0 0.0
    %2379 = vmatpush.msra.mxu0 0.0
    %2380 = vmatpush.msra.mxu0 %v1003
    %2381 = vmatpush.msra.mxu0 %v997
    %2382 = vmatmul.f32.gmra.mxu0 %v2364
    %v2383 = vpop.f32.mrf.mxu0
    %v2384 = vadd.f32 0.0, %v2383
    %2385 = vdwg.mxu0
    %v2386 = vadd.f32 %v2362, %v2384
    %2387 = vxpose.xlu0.b32.start [1/16] %v2386, 128
    %2388 = vxpose.xlu0.b32.cont [2/16] 0.0, 128
    %2389 = vxpose.xlu0.b32.cont [3/16] 0.0, 128
    %2390 = vxpose.xlu0.b32.cont [4/16] 0.0, 128
    %2391 = vxpose.xlu0.b32.cont [5/16] 0.0, 128
    %2392 = vxpose.xlu0.b32.cont [6/16] 0.0, 128
    %2393 = vxpose.xlu0.b32.cont [7/16] 0.0, 128
    %2394 = vxpose.xlu0.b32.cont [8/16] 0.0, 128
    %2395 = vxpose.xlu0.b32.cont [9/16] 0.0, 128
    %2396 = vxpose.xlu0.b32.cont [10/16] 0.0, 128
    %2397 = vxpose.xlu0.b32.cont [11/16] 0.0, 128
    %2398 = vxpose.xlu0.b32.cont [12/16] 0.0, 128
    %2399 = vxpose.xlu0.b32.cont [13/16] 0.0, 128
    %2400 = vxpose.xlu0.b32.cont [14/16] 0.0, 128
    %2401 = vxpose.xlu0.b32.cont [15/16] 0.0, 128
    %2402 = vxpose.xlu0.b32.end [16/16] 0.0, 128
    %v2403 = vpop.trf.xlu0
    %v2404 = vpop.trf.xlu0
    %v2405 = vpop.trf.xlu0
    %v2406 = vpop.trf.xlu0
    %v2407 = vpop.trf.xlu0
    %v2408 = vpop.trf.xlu0
    %v2409 = vpop.trf.xlu0
    %v2410 = vpop.trf.xlu0
    %v2411 = vpop.trf.xlu0
    %v2412 = vpop.trf.xlu0
    %v2413 = vpop.trf.xlu0
    %v2414 = vpop.trf.xlu0
    %v2415 = vpop.trf.xlu0
    %v2416 = vpop.trf.xlu0
    %v2417 = vpop.trf.xlu0
    %v2418 = vpop.trf.xlu0
    %2419 = vmatpush.msra.mxu0 0.0
    %2420 = vmatpush.msra.mxu0 0.0
    %2421 = vmatpush.msra.mxu0 0.0
    %2422 = vmatpush.msra.mxu0 0.0
    %2423 = vmatpush.msra.mxu0 0.0
    %2424 = vmatpush.msra.mxu0 0.0
    %2425 = vmatpush.msra.mxu0 0.0
    %2426 = vmatpush.msra.mxu0 0.0
    %2427 = vmatpush.msra.mxu0 0.0
    %2428 = vmatpush.msra.mxu0 0.0
    %2429 = vmatpush.msra.mxu0 0.0
    %2430 = vmatpush.msra.mxu0 0.0
    %2431 = vmatpush.msra.mxu0 0.0
    %2432 = vmatpush.msra.mxu0 0.0
    %2433 = vmatpush.msra.mxu0 %v1064
    %2434 = vmatpush.msra.mxu0 %v1061
    %2435 = vmatmul.f32.gmra.mxu0 %v2294
    %v2436 = vpop.f32.mrf.mxu0
    %v2437 = vadd.f32 0.0, %v2436
    %2438 = vdwg.mxu0
    %2439 = vmatpush.msra.mxu0 0.0
    %2440 = vmatpush.msra.mxu0 0.0
    %2441 = vmatpush.msra.mxu0 0.0
    %2442 = vmatpush.msra.mxu0 0.0
    %2443 = vmatpush.msra.mxu0 0.0
    %2444 = vmatpush.msra.mxu0 0.0
    %2445 = vmatpush.msra.mxu0 0.0
    %2446 = vmatpush.msra.mxu0 0.0
    %2447 = vmatpush.msra.mxu0 0.0
    %2448 = vmatpush.msra.mxu0 0.0
    %2449 = vmatpush.msra.mxu0 0.0
    %2450 = vmatpush.msra.mxu0 0.0
    %2451 = vmatpush.msra.mxu0 0.0
    %2452 = vmatpush.msra.mxu0 0.0
    %2453 = vmatpush.msra.mxu0 %v1087
    %2454 = vmatpush.msra.mxu0 %v1059
    %2455 = vmatmul.f32.gmra.mxu0 %v2317
    %v2456 = vpop.f32.mrf.mxu0
    %v2457 = vadd.f32 %v2437, %v2456
    %2458 = vdwg.mxu0
    %2459 = vmatpush.msra.mxu0 0.0
    %2460 = vmatpush.msra.mxu0 0.0
    %2461 = vmatpush.msra.mxu0 0.0
    %2462 = vmatpush.msra.mxu0 0.0
    %2463 = vmatpush.msra.mxu0 0.0
    %2464 = vmatpush.msra.mxu0 0.0
    %2465 = vmatpush.msra.mxu0 0.0
    %2466 = vmatpush.msra.mxu0 0.0
    %2467 = vmatpush.msra.mxu0 0.0
    %2468 = vmatpush.msra.mxu0 0.0
    %2469 = vmatpush.msra.mxu0 0.0
    %2470 = vmatpush.msra.mxu0 0.0
    %2471 = vmatpush.msra.mxu0 0.0
    %2472 = vmatpush.msra.mxu0 0.0
    %2473 = vmatpush.msra.mxu0 %v1112
    %2474 = vmatpush.msra.mxu0 %v1109
    %2475 = vmatmul.f32.gmra.mxu0 %v2340
    %v2476 = vpop.f32.mrf.mxu0
    %v2477 = vadd.f32 0.0, %v2476
    %2478 = vdwg.mxu0
    %v2479 = vadd.f32 %v2457, %v2477
    %2480 = vmatpush.msra.mxu0 0.0
    %2481 = vmatpush.msra.mxu0 0.0
    %2482 = vmatpush.msra.mxu0 0.0
    %2483 = vmatpush.msra.mxu0 0.0
    %2484 = vmatpush.msra.mxu0 0.0
    %2485 = vmatpush.msra.mxu0 0.0
    %2486 = vmatpush.msra.mxu0 0.0
    %2487 = vmatpush.msra.mxu0 0.0
    %2488 = vmatpush.msra.mxu0 0.0
    %2489 = vmatpush.msra.mxu0 0.0
    %2490 = vmatpush.msra.mxu0 0.0
    %2491 = vmatpush.msra.mxu0 0.0
    %2492 = vmatpush.msra.mxu0 0.0
    %2493 = vmatpush.msra.mxu0 0.0
    %2494 = vmatpush.msra.mxu0 %v1138
    %2495 = vmatpush.msra.mxu0 %v1135
    %2496 = vmatmul.f32.gmra.mxu0 %v2364
    %v2497 = vpop.f32.mrf.mxu0
    %v2498 = vadd.f32 0.0, %v2497
    %2499 = vdwg.mxu0
    %v2500 = vadd.f32 %v2479, %v2498
    %2501 = vxpose.xlu0.b32.start [1/16] %v2500, 128
    %2502 = vxpose.xlu0.b32.cont [2/16] 0.0, 128
    %2503 = vxpose.xlu0.b32.cont [3/16] 0.0, 128
    %2504 = vxpose.xlu0.b32.cont [4/16] 0.0, 128
    %2505 = vxpose.xlu0.b32.cont [5/16] 0.0, 128
    %2506 = vxpose.xlu0.b32.cont [6/16] 0.0, 128
    %2507 = vxpose.xlu0.b32.cont [7/16] 0.0, 128
    %2508 = vxpose.xlu0.b32.cont [8/16] 0.0, 128
    %2509 = vxpose.xlu0.b32.cont [9/16] 0.0, 128
    %2510 = vxpose.xlu0.b32.cont [10/16] 0.0, 128
    %2511 = vxpose.xlu0.b32.cont [11/16] 0.0, 128
    %2512 = vxpose.xlu0.b32.cont [12/16] 0.0, 128
    %2513 = vxpose.xlu0.b32.cont [13/16] 0.0, 128
    %2514 = vxpose.xlu0.b32.cont [14/16] 0.0, 128
    %2515 = vxpose.xlu0.b32.cont [15/16] 0.0, 128
    %2516 = vxpose.xlu0.b32.end [16/16] 0.0, 128
    %v2517 = vpop.trf.xlu0
    %v2518 = vpop.trf.xlu0
    %v2519 = vpop.trf.xlu0
    %v2520 = vpop.trf.xlu0
    %v2521 = vpop.trf.xlu0
    %v2522 = vpop.trf.xlu0
    %v2523 = vpop.trf.xlu0
    %v2524 = vpop.trf.xlu0
    %v2525 = vpop.trf.xlu0
    %v2526 = vpop.trf.xlu0
    %v2527 = vpop.trf.xlu0
    %v2528 = vpop.trf.xlu0
    %v2529 = vpop.trf.xlu0
    %v2530 = vpop.trf.xlu0
    %v2531 = vpop.trf.xlu0
    %v2532 = vpop.trf.xlu0
    %v2534 = vsel %vm677, %v2517, 0
    %2536 = vmatpush.msra.mxu0 0.0
    %2537 = vmatpush.msra.mxu0 0.0
    %2538 = vmatpush.msra.mxu0 0.0
    %2539 = vmatpush.msra.mxu0 0.0
    %2540 = vmatpush.msra.mxu0 0.0
    %2541 = vmatpush.msra.mxu0 0.0
    %2542 = vmatpush.msra.mxu0 0.0
    %2543 = vmatpush.msra.mxu0 0.0
    %2544 = vmatpush.msra.mxu0 0.0
    %2545 = vmatpush.msra.mxu0 0.0
    %2546 = vmatpush.msra.mxu0 0.0
    %2547 = vmatpush.msra.mxu0 0.0
    %2548 = vmatpush.msra.mxu0 0.0
    %2549 = vmatpush.msra.mxu0 0.0
    %2550 = vmatpush.msra.mxu0 0.0
    %2551 = vmatpush.msra.mxu0 %v421
    %2552 = vmatmul.f32.gmra.mxu0 %v2534
    %v2553 = vpop.f32.mrf.mxu0
    %v2554 = vadd.f32 0.0, %v2553
    %2555 = vdwg.mxu0
    %v2557 = vsel %vm677, %v2403, 0
    %2559 = vmatpush.msra.mxu0 0.0
    %2560 = vmatpush.msra.mxu0 0.0
    %2561 = vmatpush.msra.mxu0 0.0
    %2562 = vmatpush.msra.mxu0 0.0
    %2563 = vmatpush.msra.mxu0 0.0
    %2564 = vmatpush.msra.mxu0 0.0
    %2565 = vmatpush.msra.mxu0 0.0
    %2566 = vmatpush.msra.mxu0 0.0
    %2567 = vmatpush.msra.mxu0 0.0
    %2568 = vmatpush.msra.mxu0 0.0
    %2569 = vmatpush.msra.mxu0 0.0
    %2570 = vmatpush.msra.mxu0 0.0
    %2571 = vmatpush.msra.mxu0 0.0
    %2572 = vmatpush.msra.mxu0 0.0
    %2573 = vmatpush.msra.mxu0 0.0
    %2574 = vmatpush.msra.mxu0 %v420
    %2575 = vmatmul.f32.gmra.mxu0 %v2557
    %v2576 = vpop.f32.mrf.mxu0
    %v2577 = vadd.f32 %v2554, %v2576
    %2578 = vdwg.mxu0
    %2579 = vmatpush.msra.mxu0 0.0
    %2580 = vmatpush.msra.mxu0 0.0
    %2581 = vmatpush.msra.mxu0 0.0
    %2582 = vmatpush.msra.mxu0 0.0
    %2583 = vmatpush.msra.mxu0 0.0
    %2584 = vmatpush.msra.mxu0 0.0
    %2585 = vmatpush.msra.mxu0 0.0
    %2586 = vmatpush.msra.mxu0 0.0
    %2587 = vmatpush.msra.mxu0 0.0
    %2588 = vmatpush.msra.mxu0 0.0
    %2589 = vmatpush.msra.mxu0 0.0
    %2590 = vmatpush.msra.mxu0 0.0
    %2591 = vmatpush.msra.mxu0 0.0
    %2592 = vmatpush.msra.mxu0 0.0
    %2593 = vmatpush.msra.mxu0 %v1245
    %2594 = vmatpush.msra.mxu0 %v1242
    %2595 = vmatmul.f32.gmra.mxu0 %v2294
    %v2596 = vpop.f32.mrf.mxu0
    %v2597 = vadd.f32 0.0, %v2596
    %2598 = vdwg.mxu0
    %2599 = vmatpush.msra.mxu0 0.0
    %2600 = vmatpush.msra.mxu0 0.0
    %2601 = vmatpush.msra.mxu0 0.0
    %2602 = vmatpush.msra.mxu0 0.0
    %2603 = vmatpush.msra.mxu0 0.0
    %2604 = vmatpush.msra.mxu0 0.0
    %2605 = vmatpush.msra.mxu0 0.0
    %2606 = vmatpush.msra.mxu0 0.0
    %2607 = vmatpush.msra.mxu0 0.0
    %2608 = vmatpush.msra.mxu0 0.0
    %2609 = vmatpush.msra.mxu0 0.0
    %2610 = vmatpush.msra.mxu0 0.0
    %2611 = vmatpush.msra.mxu0 0.0
    %2612 = vmatpush.msra.mxu0 0.0
    %2613 = vmatpush.msra.mxu0 %v1268
    %2614 = vmatpush.msra.mxu0 %v1240
    %2615 = vmatmul.f32.gmra.mxu0 %v2317
    %v2616 = vpop.f32.mrf.mxu0
    %v2617 = vadd.f32 %v2597, %v2616
    %2618 = vdwg.mxu0
    %2619 = vmatpush.msra.mxu0 0.0
    %2620 = vmatpush.msra.mxu0 0.0
    %2621 = vmatpush.msra.mxu0 0.0
    %2622 = vmatpush.msra.mxu0 0.0
    %2623 = vmatpush.msra.mxu0 0.0
    %2624 = vmatpush.msra.mxu0 0.0
    %2625 = vmatpush.msra.mxu0 0.0
    %2626 = vmatpush.msra.mxu0 0.0
    %2627 = vmatpush.msra.mxu0 0.0
    %2628 = vmatpush.msra.mxu0 0.0
    %2629 = vmatpush.msra.mxu0 0.0
    %2630 = vmatpush.msra.mxu0 0.0
    %2631 = vmatpush.msra.mxu0 0.0
    %2632 = vmatpush.msra.mxu0 0.0
    %2633 = vmatpush.msra.mxu0 %v1293
    %2634 = vmatpush.msra.mxu0 %v1290
    %2635 = vmatmul.f32.gmra.mxu0 %v2340
    %v2636 = vpop.f32.mrf.mxu0
    %v2637 = vadd.f32 0.0, %v2636
    %2638 = vdwg.mxu0
    %v2639 = vadd.f32 %v2617, %v2637
    %2640 = vmatpush.msra.mxu0 0.0
    %2641 = vmatpush.msra.mxu0 0.0
    %2642 = vmatpush.msra.mxu0 0.0
    %2643 = vmatpush.msra.mxu0 0.0
    %2644 = vmatpush.msra.mxu0 0.0
    %2645 = vmatpush.msra.mxu0 0.0
    %2646 = vmatpush.msra.mxu0 0.0
    %2647 = vmatpush.msra.mxu0 0.0
    %2648 = vmatpush.msra.mxu0 0.0
    %2649 = vmatpush.msra.mxu0 0.0
    %2650 = vmatpush.msra.mxu0 0.0
    %2651 = vmatpush.msra.mxu0 0.0
    %2652 = vmatpush.msra.mxu0 0.0
    %2653 = vmatpush.msra.mxu0 0.0
    %2654 = vmatpush.msra.mxu0 %v1319
    %2655 = vmatpush.msra.mxu0 %v1316
    %2656 = vmatmul.f32.gmra.mxu0 %v2364
    %v2657 = vpop.f32.mrf.mxu0
    %v2658 = vadd.f32 0.0, %v2657
    %2659 = vdwg.mxu0
    %v2660 = vadd.f32 %v2639, %v2658
    %2661 = vxpose.xlu0.b32.start [1/16] %v2660, 128
    %2662 = vxpose.xlu0.b32.cont [2/16] 0.0, 128
    %2663 = vxpose.xlu0.b32.cont [3/16] 0.0, 128
    %2664 = vxpose.xlu0.b32.cont [4/16] 0.0, 128
    %2665 = vxpose.xlu0.b32.cont [5/16] 0.0, 128
    %2666 = vxpose.xlu0.b32.cont [6/16] 0.0, 128
    %2667 = vxpose.xlu0.b32.cont [7/16] 0.0, 128
    %2668 = vxpose.xlu0.b32.cont [8/16] 0.0, 128
    %2669 = vxpose.xlu0.b32.cont [9/16] 0.0, 128
    %2670 = vxpose.xlu0.b32.cont [10/16] 0.0, 128
    %2671 = vxpose.xlu0.b32.cont [11/16] 0.0, 128
    %2672 = vxpose.xlu0.b32.cont [12/16] 0.0, 128
    %2673 = vxpose.xlu0.b32.cont [13/16] 0.0, 128
    %2674 = vxpose.xlu0.b32.cont [14/16] 0.0, 128
    %2675 = vxpose.xlu0.b32.cont [15/16] 0.0, 128
    %2676 = vxpose.xlu0.b32.end [16/16] 0.0, 128
    %v2677 = vpop.trf.xlu0
    %v2678 = vpop.trf.xlu0
    %v2679 = vpop.trf.xlu0
    %v2680 = vpop.trf.xlu0
    %v2681 = vpop.trf.xlu0
    %v2682 = vpop.trf.xlu0
    %v2683 = vpop.trf.xlu0
    %v2684 = vpop.trf.xlu0
    %v2685 = vpop.trf.xlu0
    %v2686 = vpop.trf.xlu0
    %v2687 = vpop.trf.xlu0
    %v2688 = vpop.trf.xlu0
    %v2689 = vpop.trf.xlu0
    %v2690 = vpop.trf.xlu0
    %v2691 = vpop.trf.xlu0
    %v2692 = vpop.trf.xlu0
    %v2694 = vsel %vm677, %v2677, 0
    %2696 = vmatpush.msra.mxu0 0.0
    %2697 = vmatpush.msra.mxu0 0.0
    %2698 = vmatpush.msra.mxu0 0.0
    %2699 = vmatpush.msra.mxu0 0.0
    %2700 = vmatpush.msra.mxu0 0.0
    %2701 = vmatpush.msra.mxu0 0.0
    %2702 = vmatpush.msra.mxu0 0.0
    %2703 = vmatpush.msra.mxu0 0.0
    %2704 = vmatpush.msra.mxu0 0.0
    %2705 = vmatpush.msra.mxu0 0.0
    %2706 = vmatpush.msra.mxu0 0.0
    %2707 = vmatpush.msra.mxu0 0.0
    %2708 = vmatpush.msra.mxu0 0.0
    %2709 = vmatpush.msra.mxu0 0.0
    %2710 = vmatpush.msra.mxu0 0.0
    %2711 = vmatpush.msra.mxu0 %v422
    %2712 = vmatmul.f32.gmra.mxu0 %v2694
    %v2713 = vpop.f32.mrf.mxu0
    %v2714 = vadd.f32 0.0, %v2713
    %2715 = vdwg.mxu0
    %v2716 = vadd.f32 %v2577, %v2714
    %2717 = vmatpush.msra.mxu0 0.0
    %2718 = vmatpush.msra.mxu0 0.0
    %2719 = vmatpush.msra.mxu0 0.0
    %2720 = vmatpush.msra.mxu0 0.0
    %2721 = vmatpush.msra.mxu0 0.0
    %2722 = vmatpush.msra.mxu0 0.0
    %2723 = vmatpush.msra.mxu0 0.0
    %2724 = vmatpush.msra.mxu0 0.0
    %2725 = vmatpush.msra.mxu0 0.0
    %2726 = vmatpush.msra.mxu0 0.0
    %2727 = vmatpush.msra.mxu0 0.0
    %2728 = vmatpush.msra.mxu0 0.0
    %2729 = vmatpush.msra.mxu0 0.0
    %2730 = vmatpush.msra.mxu0 0.0
    %2731 = vmatpush.msra.mxu0 %v1404
    %2732 = vmatpush.msra.mxu0 %v1401
    %2733 = vmatmul.f32.gmra.mxu0 %v2294
    %v2734 = vpop.f32.mrf.mxu0
    %v2735 = vadd.f32 0.0, %v2734
    %2736 = vdwg.mxu0
    %2737 = vmatpush.msra.mxu0 0.0
    %2738 = vmatpush.msra.mxu0 0.0
    %2739 = vmatpush.msra.mxu0 0.0
    %2740 = vmatpush.msra.mxu0 0.0
    %2741 = vmatpush.msra.mxu0 0.0
    %2742 = vmatpush.msra.mxu0 0.0
    %2743 = vmatpush.msra.mxu0 0.0
    %2744 = vmatpush.msra.mxu0 0.0
    %2745 = vmatpush.msra.mxu0 0.0
    %2746 = vmatpush.msra.mxu0 0.0
    %2747 = vmatpush.msra.mxu0 0.0
    %2748 = vmatpush.msra.mxu0 0.0
    %2749 = vmatpush.msra.mxu0 0.0
    %2750 = vmatpush.msra.mxu0 0.0
    %2751 = vmatpush.msra.mxu0 %v1427
    %2752 = vmatpush.msra.mxu0 %v1399
    %2753 = vmatmul.f32.gmra.mxu0 %v2317
    %v2754 = vpop.f32.mrf.mxu0
    %v2755 = vadd.f32 %v2735, %v2754
    %2756 = vdwg.mxu0
    %2757 = vmatpush.msra.mxu0 0.0
    %2758 = vmatpush.msra.mxu0 0.0
    %2759 = vmatpush.msra.mxu0 0.0
    %2760 = vmatpush.msra.mxu0 0.0
    %2761 = vmatpush.msra.mxu0 0.0
    %2762 = vmatpush.msra.mxu0 0.0
    %2763 = vmatpush.msra.mxu0 0.0
    %2764 = vmatpush.msra.mxu0 0.0
    %2765 = vmatpush.msra.mxu0 0.0
    %2766 = vmatpush.msra.mxu0 0.0
    %2767 = vmatpush.msra.mxu0 0.0
    %2768 = vmatpush.msra.mxu0 0.0
    %2769 = vmatpush.msra.mxu0 0.0
    %2770 = vmatpush.msra.mxu0 0.0
    %2771 = vmatpush.msra.mxu0 %v1452
    %2772 = vmatpush.msra.mxu0 %v1449
    %2773 = vmatmul.f32.gmra.mxu0 %v2340
    %v2774 = vpop.f32.mrf.mxu0
    %v2775 = vadd.f32 0.0, %v2774
    %2776 = vdwg.mxu0
    %v2777 = vadd.f32 %v2755, %v2775
    %2778 = vmatpush.msra.mxu0 0.0
    %2779 = vmatpush.msra.mxu0 0.0
    %2780 = vmatpush.msra.mxu0 0.0
    %2781 = vmatpush.msra.mxu0 0.0
    %2782 = vmatpush.msra.mxu0 0.0
    %2783 = vmatpush.msra.mxu0 0.0
    %2784 = vmatpush.msra.mxu0 0.0
    %2785 = vmatpush.msra.mxu0 0.0
    %2786 = vmatpush.msra.mxu0 0.0
    %2787 = vmatpush.msra.mxu0 0.0
    %2788 = vmatpush.msra.mxu0 0.0
    %2789 = vmatpush.msra.mxu0 0.0
    %2790 = vmatpush.msra.mxu0 0.0
    %2791 = vmatpush.msra.mxu0 0.0
    %2792 = vmatpush.msra.mxu0 %v1478
    %2793 = vmatpush.msra.mxu0 %v1475
    %2794 = vmatmul.f32.gmra.mxu0 %v2364
    %v2795 = vpop.f32.mrf.mxu0
    %v2796 = vadd.f32 0.0, %v2795
    %2797 = vdwg.mxu0
    %v2798 = vadd.f32 %v2777, %v2796
    %2799 = vxpose.xlu0.b32.start [1/16] %v2798, 128
    %2800 = vxpose.xlu0.b32.cont [2/16] 0.0, 128
    %2801 = vxpose.xlu0.b32.cont [3/16] 0.0, 128
    %2802 = vxpose.xlu0.b32.cont [4/16] 0.0, 128
    %2803 = vxpose.xlu0.b32.cont [5/16] 0.0, 128
    %2804 = vxpose.xlu0.b32.cont [6/16] 0.0, 128
    %2805 = vxpose.xlu0.b32.cont [7/16] 0.0, 128
    %2806 = vxpose.xlu0.b32.cont [8/16] 0.0, 128
    %2807 = vxpose.xlu0.b32.cont [9/16] 0.0, 128
    %2808 = vxpose.xlu0.b32.cont [10/16] 0.0, 128
    %2809 = vxpose.xlu0.b32.cont [11/16] 0.0, 128
    %2810 = vxpose.xlu0.b32.cont [12/16] 0.0, 128
    %2811 = vxpose.xlu0.b32.cont [13/16] 0.0, 128
    %2812 = vxpose.xlu0.b32.cont [14/16] 0.0, 128
    %2813 = vxpose.xlu0.b32.cont [15/16] 0.0, 128
    %2814 = vxpose.xlu0.b32.end [16/16] 0.0, 128
    %v2815 = vpop.trf.xlu0
    %v2816 = vpop.trf.xlu0
    %v2817 = vpop.trf.xlu0
    %v2818 = vpop.trf.xlu0
    %v2819 = vpop.trf.xlu0
    %v2820 = vpop.trf.xlu0
    %v2821 = vpop.trf.xlu0
    %v2822 = vpop.trf.xlu0
    %v2823 = vpop.trf.xlu0
    %v2824 = vpop.trf.xlu0
    %v2825 = vpop.trf.xlu0
    %v2826 = vpop.trf.xlu0
    %v2827 = vpop.trf.xlu0
    %v2828 = vpop.trf.xlu0
    %v2829 = vpop.trf.xlu0
    %v2830 = vpop.trf.xlu0
    %v2832 = vsel %vm677, %v2815, 0
    %2834 = vmatpush.msra.mxu0 0.0
    %2835 = vmatpush.msra.mxu0 0.0
    %2836 = vmatpush.msra.mxu0 0.0
    %2837 = vmatpush.msra.mxu0 0.0
    %2838 = vmatpush.msra.mxu0 0.0
    %2839 = vmatpush.msra.mxu0 0.0
    %2840 = vmatpush.msra.mxu0 0.0
    %2841 = vmatpush.msra.mxu0 0.0
    %2842 = vmatpush.msra.mxu0 0.0
    %2843 = vmatpush.msra.mxu0 0.0
    %2844 = vmatpush.msra.mxu0 0.0
    %2845 = vmatpush.msra.mxu0 0.0
    %2846 = vmatpush.msra.mxu0 0.0
    %2847 = vmatpush.msra.mxu0 0.0
    %2848 = vmatpush.msra.mxu0 0.0
    %2849 = vmatpush.msra.mxu0 %v423
    %2850 = vmatmul.f32.gmra.mxu0 %v2832
    %v2851 = vpop.f32.mrf.mxu0
    %v2852 = vadd.f32 0.0, %v2851
    %2853 = vdwg.mxu0
    %v2854 = vadd.f32 %v2716, %v2852
    %2855 = vmatpush.msra.mxu0 0.0
    %2856 = vmatpush.msra.mxu0 0.0
    %2857 = vmatpush.msra.mxu0 0.0
    %2858 = vmatpush.msra.mxu0 0.0
    %2859 = vmatpush.msra.mxu0 0.0
    %2860 = vmatpush.msra.mxu0 0.0
    %2861 = vmatpush.msra.mxu0 0.0
    %2862 = vmatpush.msra.mxu0 0.0
    %2863 = vmatpush.msra.mxu0 0.0
    %2864 = vmatpush.msra.mxu0 0.0
    %2865 = vmatpush.msra.mxu0 0.0
    %2866 = vmatpush.msra.mxu0 0.0
    %2867 = vmatpush.msra.mxu0 0.0
    %2868 = vmatpush.msra.mxu0 0.0
    %2869 = vmatpush.msra.mxu0 %v1563
    %2870 = vmatpush.msra.mxu0 %v1560
    %2871 = vmatmul.f32.gmra.mxu0 %v2294
    %v2872 = vpop.f32.mrf.mxu0
    %v2873 = vadd.f32 0.0, %v2872
    %2874 = vdwg.mxu0
    %2875 = vmatpush.msra.mxu0 0.0
    %2876 = vmatpush.msra.mxu0 0.0
    %2877 = vmatpush.msra.mxu0 0.0
    %2878 = vmatpush.msra.mxu0 0.0
    %2879 = vmatpush.msra.mxu0 0.0
    %2880 = vmatpush.msra.mxu0 0.0
    %2881 = vmatpush.msra.mxu0 0.0
    %2882 = vmatpush.msra.mxu0 0.0
    %2883 = vmatpush.msra.mxu0 0.0
    %2884 = vmatpush.msra.mxu0 0.0
    %2885 = vmatpush.msra.mxu0 0.0
    %2886 = vmatpush.msra.mxu0 0.0
    %2887 = vmatpush.msra.mxu0 0.0
    %2888 = vmatpush.msra.mxu0 0.0
    %2889 = vmatpush.msra.mxu0 %v1586
    %2890 = vmatpush.msra.mxu0 %v1558
    %2891 = vmatmul.f32.gmra.mxu0 %v2317
    %v2892 = vpop.f32.mrf.mxu0
    %v2893 = vadd.f32 %v2873, %v2892
    %2894 = vdwg.mxu0
    %2895 = vmatpush.msra.mxu0 0.0
    %2896 = vmatpush.msra.mxu0 0.0
    %2897 = vmatpush.msra.mxu0 0.0
    %2898 = vmatpush.msra.mxu0 0.0
    %2899 = vmatpush.msra.mxu0 0.0
    %2900 = vmatpush.msra.mxu0 0.0
    %2901 = vmatpush.msra.mxu0 0.0
    %2902 = vmatpush.msra.mxu0 0.0
    %2903 = vmatpush.msra.mxu0 0.0
    %2904 = vmatpush.msra.mxu0 0.0
    %2905 = vmatpush.msra.mxu0 0.0
    %2906 = vmatpush.msra.mxu0 0.0
    %2907 = vmatpush.msra.mxu0 0.0
    %2908 = vmatpush.msra.mxu0 0.0
    %2909 = vmatpush.msra.mxu0 %v1611
    %2910 = vmatpush.msra.mxu0 %v1608
    %2911 = vmatmul.f32.gmra.mxu0 %v2340
    %v2912 = vpop.f32.mrf.mxu0
    %v2913 = vadd.f32 0.0, %v2912
    %2914 = vdwg.mxu0
    %v2915 = vadd.f32 %v2893, %v2913
    %2916 = vmatpush.msra.mxu0 0.0
    %2917 = vmatpush.msra.mxu0 0.0
    %2918 = vmatpush.msra.mxu0 0.0
    %2919 = vmatpush.msra.mxu0 0.0
    %2920 = vmatpush.msra.mxu0 0.0
    %2921 = vmatpush.msra.mxu0 0.0
    %2922 = vmatpush.msra.mxu0 0.0
    %2923 = vmatpush.msra.mxu0 0.0
    %2924 = vmatpush.msra.mxu0 0.0
    %2925 = vmatpush.msra.mxu0 0.0
    %2926 = vmatpush.msra.mxu0 0.0
    %2927 = vmatpush.msra.mxu0 0.0
    %2928 = vmatpush.msra.mxu0 0.0
    %2929 = vmatpush.msra.mxu0 0.0
    %2930 = vmatpush.msra.mxu0 %v1637
    %2931 = vmatpush.msra.mxu0 %v1634
    %2932 = vmatmul.f32.gmra.mxu0 %v2364
    %v2933 = vpop.f32.mrf.mxu0
    %v2934 = vadd.f32 0.0, %v2933
    %2935 = vdwg.mxu0
    %v2936 = vadd.f32 %v2915, %v2934
    %2937 = vxpose.xlu0.b32.start [1/16] %v2936, 128
    %2938 = vxpose.xlu0.b32.cont [2/16] 0.0, 128
    %2939 = vxpose.xlu0.b32.cont [3/16] 0.0, 128
    %2940 = vxpose.xlu0.b32.cont [4/16] 0.0, 128
    %2941 = vxpose.xlu0.b32.cont [5/16] 0.0, 128
    %2942 = vxpose.xlu0.b32.cont [6/16] 0.0, 128
    %2943 = vxpose.xlu0.b32.cont [7/16] 0.0, 128
    %2944 = vxpose.xlu0.b32.cont [8/16] 0.0, 128
    %2945 = vxpose.xlu0.b32.cont [9/16] 0.0, 128
    %2946 = vxpose.xlu0.b32.cont [10/16] 0.0, 128
    %2947 = vxpose.xlu0.b32.cont [11/16] 0.0, 128
    %2948 = vxpose.xlu0.b32.cont [12/16] 0.0, 128
    %2949 = vxpose.xlu0.b32.cont [13/16] 0.0, 128
    %2950 = vxpose.xlu0.b32.cont [14/16] 0.0, 128
    %2951 = vxpose.xlu0.b32.cont [15/16] 0.0, 128
    %2952 = vxpose.xlu0.b32.end [16/16] 0.0, 128
    %v2953 = vpop.trf.xlu0
    %v2954 = vpop.trf.xlu0
    %v2955 = vpop.trf.xlu0
    %v2956 = vpop.trf.xlu0
    %v2957 = vpop.trf.xlu0
    %v2958 = vpop.trf.xlu0
    %v2959 = vpop.trf.xlu0
    %v2960 = vpop.trf.xlu0
    %v2961 = vpop.trf.xlu0
    %v2962 = vpop.trf.xlu0
    %v2963 = vpop.trf.xlu0
    %v2964 = vpop.trf.xlu0
    %v2965 = vpop.trf.xlu0
    %v2966 = vpop.trf.xlu0
    %v2967 = vpop.trf.xlu0
    %v2968 = vpop.trf.xlu0
    %v2970 = vsel %vm677, %v2953, 0
    %2972 = vmatpush.msra.mxu0 0.0
    %2973 = vmatpush.msra.mxu0 0.0
    %2974 = vmatpush.msra.mxu0 0.0
    %2975 = vmatpush.msra.mxu0 0.0
    %2976 = vmatpush.msra.mxu0 0.0
    %2977 = vmatpush.msra.mxu0 0.0
    %2978 = vmatpush.msra.mxu0 0.0
    %2979 = vmatpush.msra.mxu0 0.0
    %2980 = vmatpush.msra.mxu0 0.0
    %2981 = vmatpush.msra.mxu0 0.0
    %2982 = vmatpush.msra.mxu0 0.0
    %2983 = vmatpush.msra.mxu0 0.0
    %2984 = vmatpush.msra.mxu0 0.0
    %2985 = vmatpush.msra.mxu0 0.0
    %2986 = vmatpush.msra.mxu0 0.0
    %2987 = vmatpush.msra.mxu0 %v424
    %2988 = vmatmul.f32.gmra.mxu0 %v2970
    %v2989 = vpop.f32.mrf.mxu0
    %v2990 = vadd.f32 0.0, %v2989
    %2991 = vdwg.mxu0
    %v2992 = vadd.f32 %v2854, %v2990
    %2993 = vmatpush.msra.mxu0 0.0
    %2994 = vmatpush.msra.mxu0 0.0
    %2995 = vmatpush.msra.mxu0 0.0
    %2996 = vmatpush.msra.mxu0 0.0
    %2997 = vmatpush.msra.mxu0 0.0
    %2998 = vmatpush.msra.mxu0 0.0
    %2999 = vmatpush.msra.mxu0 0.0
    %3000 = vmatpush.msra.mxu0 0.0
    %3001 = vmatpush.msra.mxu0 0.0
    %3002 = vmatpush.msra.mxu0 0.0
    %3003 = vmatpush.msra.mxu0 0.0
    %3004 = vmatpush.msra.mxu0 0.0
    %3005 = vmatpush.msra.mxu0 0.0
    %3006 = vmatpush.msra.mxu0 0.0
    %3007 = vmatpush.msra.mxu0 %v1722
    %3008 = vmatpush.msra.mxu0 %v1719
    %3009 = vmatmul.f32.gmra.mxu0 %v2294
    %v3010 = vpop.f32.mrf.mxu0
    %v3011 = vadd.f32 0.0, %v3010
    %3012 = vdwg.mxu0
    %3013 = vmatpush.msra.mxu0 0.0
    %3014 = vmatpush.msra.mxu0 0.0
    %3015 = vmatpush.msra.mxu0 0.0
    %3016 = vmatpush.msra.mxu0 0.0
    %3017 = vmatpush.msra.mxu0 0.0
    %3018 = vmatpush.msra.mxu0 0.0
    %3019 = vmatpush.msra.mxu0 0.0
    %3020 = vmatpush.msra.mxu0 0.0
    %3021 = vmatpush.msra.mxu0 0.0
    %3022 = vmatpush.msra.mxu0 0.0
    %3023 = vmatpush.msra.mxu0 0.0
    %3024 = vmatpush.msra.mxu0 0.0
    %3025 = vmatpush.msra.mxu0 0.0
    %3026 = vmatpush.msra.mxu0 0.0
    %3027 = vmatpush.msra.mxu0 %v1745
    %3028 = vmatpush.msra.mxu0 %v1717
    %3029 = vmatmul.f32.gmra.mxu0 %v2317
    %v3030 = vpop.f32.mrf.mxu0
    %v3031 = vadd.f32 %v3011, %v3030
    %3032 = vdwg.mxu0
    %3033 = vmatpush.msra.mxu0 0.0
    %3034 = vmatpush.msra.mxu0 0.0
    %3035 = vmatpush.msra.mxu0 0.0
    %3036 = vmatpush.msra.mxu0 0.0
    %3037 = vmatpush.msra.mxu0 0.0
    %3038 = vmatpush.msra.mxu0 0.0
    %3039 = vmatpush.msra.mxu0 0.0
    %3040 = vmatpush.msra.mxu0 0.0
    %3041 = vmatpush.msra.mxu0 0.0
    %3042 = vmatpush.msra.mxu0 0.0
    %3043 = vmatpush.msra.mxu0 0.0
    %3044 = vmatpush.msra.mxu0 0.0
    %3045 = vmatpush.msra.mxu0 0.0
    %3046 = vmatpush.msra.mxu0 0.0
    %3047 = vmatpush.msra.mxu0 %v1770
    %3048 = vmatpush.msra.mxu0 %v1767
    %3049 = vmatmul.f32.gmra.mxu0 %v2340
    %v3050 = vpop.f32.mrf.mxu0
    %v3051 = vadd.f32 0.0, %v3050
    %3052 = vdwg.mxu0
    %v3053 = vadd.f32 %v3031, %v3051
    %3054 = vmatpush.msra.mxu0 0.0
    %3055 = vmatpush.msra.mxu0 0.0
    %3056 = vmatpush.msra.mxu0 0.0
    %3057 = vmatpush.msra.mxu0 0.0
    %3058 = vmatpush.msra.mxu0 0.0
    %3059 = vmatpush.msra.mxu0 0.0
    %3060 = vmatpush.msra.mxu0 0.0
    %3061 = vmatpush.msra.mxu0 0.0
    %3062 = vmatpush.msra.mxu0 0.0
    %3063 = vmatpush.msra.mxu0 0.0
    %3064 = vmatpush.msra.mxu0 0.0
    %3065 = vmatpush.msra.mxu0 0.0
    %3066 = vmatpush.msra.mxu0 0.0
    %3067 = vmatpush.msra.mxu0 0.0
    %3068 = vmatpush.msra.mxu0 %v1796
    %3069 = vmatpush.msra.mxu0 %v1793
    %3070 = vmatmul.f32.gmra.mxu0 %v2364
    %v3071 = vpop.f32.mrf.mxu0
    %v3072 = vadd.f32 0.0, %v3071
    %3073 = vdwg.mxu0
    %v3074 = vadd.f32 %v3053, %v3072
    %3075 = vxpose.xlu0.b32.start [1/16] %v3074, 128
    %3076 = vxpose.xlu0.b32.cont [2/16] 0.0, 128
    %3077 = vxpose.xlu0.b32.cont [3/16] 0.0, 128
    %3078 = vxpose.xlu0.b32.cont [4/16] 0.0, 128
    %3079 = vxpose.xlu0.b32.cont [5/16] 0.0, 128
    %3080 = vxpose.xlu0.b32.cont [6/16] 0.0, 128
    %3081 = vxpose.xlu0.b32.cont [7/16] 0.0, 128
    %3082 = vxpose.xlu0.b32.cont [8/16] 0.0, 128
    %3083 = vxpose.xlu0.b32.cont [9/16] 0.0, 128
    %3084 = vxpose.xlu0.b32.cont [10/16] 0.0, 128
    %3085 = vxpose.xlu0.b32.cont [11/16] 0.0, 128
    %3086 = vxpose.xlu0.b32.cont [12/16] 0.0, 128
    %3087 = vxpose.xlu0.b32.cont [13/16] 0.0, 128
    %3088 = vxpose.xlu0.b32.cont [14/16] 0.0, 128
    %3089 = vxpose.xlu0.b32.cont [15/16] 0.0, 128
    %3090 = vxpose.xlu0.b32.end [16/16] 0.0, 128
    %v3091 = vpop.trf.xlu0
    %v3092 = vpop.trf.xlu0
    %v3093 = vpop.trf.xlu0
    %v3094 = vpop.trf.xlu0
    %v3095 = vpop.trf.xlu0
    %v3096 = vpop.trf.xlu0
    %v3097 = vpop.trf.xlu0
    %v3098 = vpop.trf.xlu0
    %v3099 = vpop.trf.xlu0
    %v3100 = vpop.trf.xlu0
    %v3101 = vpop.trf.xlu0
    %v3102 = vpop.trf.xlu0
    %v3103 = vpop.trf.xlu0
    %v3104 = vpop.trf.xlu0
    %v3105 = vpop.trf.xlu0
    %v3106 = vpop.trf.xlu0
    %v3108 = vsel %vm677, %v3091, 0
    %3110 = vmatpush.msra.mxu0 0.0
    %3111 = vmatpush.msra.mxu0 0.0
    %3112 = vmatpush.msra.mxu0 0.0
    %3113 = vmatpush.msra.mxu0 0.0
    %3114 = vmatpush.msra.mxu0 0.0
    %3115 = vmatpush.msra.mxu0 0.0
    %3116 = vmatpush.msra.mxu0 0.0
    %3117 = vmatpush.msra.mxu0 0.0
    %3118 = vmatpush.msra.mxu0 0.0
    %3119 = vmatpush.msra.mxu0 0.0
    %3120 = vmatpush.msra.mxu0 0.0
    %3121 = vmatpush.msra.mxu0 0.0
    %3122 = vmatpush.msra.mxu0 0.0
    %3123 = vmatpush.msra.mxu0 0.0
    %3124 = vmatpush.msra.mxu0 0.0
    %3125 = vmatpush.msra.mxu0 %v425
    %3126 = vmatmul.f32.gmra.mxu0 %v3108
    %v3127 = vpop.f32.mrf.mxu0
    %v3128 = vadd.f32 0.0, %v3127
    %3129 = vdwg.mxu0
    %v3130 = vadd.f32 %v2992, %v3128
    %v3131 = vadd.f32 %v3130, %v1969
    %v3132 = vsel %vm540, %v3131, 0.0
    %3133 = vadd.xlane.f32.xlu0 %v3132
    %v3134 = vpop.xlane.xlu0 %3133
    %v3135 = vmul.f32 %v3134, %v1885
    %v3136 = vsub.f32 %v3131, %v3135
    %v3137 = vmul.f32 %v3136, %v3136
    %v3138 = vsel %vm540, %v3137, 0.0
    %3139 = vadd.xlane.f32.xlu0 %v3138
    %v3140 = vpop.xlane.xlu0 %3139
    %v3141 = vmul.f32 %v3140, %v1885
    %v3142 = vadd.f32 %v3141, 1e-05
    %v3143 = vrsqrt.pop %v3142
    %v3144 = vmul.f32 %v3143, %v3142
    %v3145 = vmul.f32 %v3144, %v3143
    %v3146 = vmul.f32 0.5, %v3145
    %v3147 = vsub.f32 1.5, %v3146
    %v3148 = vmul.f32 %v3143, %v3147
    %vm3149 = vweird.f32 %v3142
    %vm3150 = vweird.f32 %v3143
    %vm3151 = vmor %vm3149, %vm3150
    %v3152 = vsel %vm3151, %v3143, %v3148
    %v3153 = vmul.f32 %v3136, %v3152
    %v3155 = vperm.slane %v417, 0
    %v3157 = vmul.f32 %v3153, %v3155
    %v3159 = vperm.slane %v416, 0
    %v3161 = vadd.f32 %v3157, %v3159
    %v3163 = vperm.slane %v409, 0
    %v3166 = vsel %vm540, %v3161, 0
    %3168 = vmatpush.msra.mxu0 0.0
    %3169 = vmatpush.msra.mxu0 0.0
    %3170 = vmatpush.msra.mxu0 0.0
    %3171 = vmatpush.msra.mxu0 0.0
    %3172 = vmatpush.msra.mxu0 0.0
    %3173 = vmatpush.msra.mxu0 0.0
    %3174 = vmatpush.msra.mxu0 0.0
    %3175 = vmatpush.msra.mxu0 0.0
    %3176 = vmatpush.msra.mxu0 0.0
    %3177 = vmatpush.msra.mxu0 0.0
    %3178 = vmatpush.msra.mxu0 %v415
    %3179 = vmatpush.msra.mxu0 %v414
    %3180 = vmatpush.msra.mxu0 %v413
    %3181 = vmatpush.msra.mxu0 %v412
    %3182 = vmatpush.msra.mxu0 %v411
    %3183 = vmatpush.msra.mxu0 %v410
    %3184 = vmatmul.f32.gmra.mxu0 %v3166
    %v3185 = vpop.f32.mrf.mxu0
    %v3186 = vadd.f32 %v3163, %v3185
    %3187 = vdwg.mxu0
    %v3188 = vadd.f32 %v3186, %v3161
    %v3189 = vsel %vm540, %v3188, 0.0
    %3190 = vadd.xlane.f32.xlu0 %v3189
    %v3191 = vpop.xlane.xlu0 %3190
    %v3192 = vmul.f32 %v3191, %v1885
    %v3193 = vsub.f32 %v3188, %v3192
    %v3194 = vmul.f32 %v3193, %v3193
    %v3195 = vsel %vm540, %v3194, 0.0
    %3196 = vadd.xlane.f32.xlu0 %v3195
    %v3197 = vpop.xlane.xlu0 %3196
    %v3198 = vmul.f32 %v3197, %v1885
    %v3199 = vadd.f32 %v3198, 1e-05
    %v3200 = vrsqrt.pop %v3199
    %v3201 = vmul.f32 %v3200, %v3199
    %v3202 = vmul.f32 %v3201, %v3200
    %v3203 = vmul.f32 0.5, %v3202
    %v3204 = vsub.f32 1.5, %v3203
    %v3205 = vmul.f32 %v3200, %v3204
    %vm3206 = vweird.f32 %v3199
    %vm3207 = vweird.f32 %v3200
    %vm3208 = vmor %vm3206, %vm3207
    %v3209 = vsel %vm3208, %v3200, %v3205
    %v3210 = vmul.f32 %v3193, %v3209
    %v3212 = vperm.slane %v419, 0
    %v3214 = vmul.f32 %v3210, %v3212
    %v3216 = vperm.slane %v418, 0
    %v3218 = vadd.f32 %v3214, %v3216
    %v3220 = vperm.slane %v453, 0
    %v3223 = vsel %vm540, %v3218, 0
    %3225 = vmatpush.msra.mxu0 0.0
    %3226 = vmatpush.msra.mxu0 0.0
    %3227 = vmatpush.msra.mxu0 0.0
    %3228 = vmatpush.msra.mxu0 0.0
    %3229 = vmatpush.msra.mxu0 0.0
    %3230 = vmatpush.msra.mxu0 0.0
    %3231 = vmatpush.msra.mxu0 0.0
    %3232 = vmatpush.msra.mxu0 0.0
    %3233 = vmatpush.msra.mxu0 0.0
    %3234 = vmatpush.msra.mxu0 0.0
    %3235 = vmatpush.msra.mxu0 %v459
    %3236 = vmatpush.msra.mxu0 %v458
    %3237 = vmatpush.msra.mxu0 %v457
    %3238 = vmatpush.msra.mxu0 %v456
    %3239 = vmatpush.msra.mxu0 %v455
    %3240 = vmatpush.msra.mxu0 %v454
    %3241 = vmatmul.f32.gmra.mxu0 %v3223
    %v3242 = vpop.f32.mrf.mxu0
    %v3243 = vadd.f32 %v3220, %v3242
    %3244 = vdwg.mxu0
    %v3246 = vperm.slane %v460, 0
    %vm3248 = vcmask 261120
    %v3250 = vsel %vm3248, %v3243, 0
    %3252 = vmatpush.msra.mxu0 0.0
    %3253 = vmatpush.msra.mxu0 0.0
    %3254 = vmatpush.msra.mxu0 0.0
    %3255 = vmatpush.msra.mxu0 0.0
    %3256 = vmatpush.msra.mxu0 0.0
    %3257 = vmatpush.msra.mxu0 0.0
    %3258 = vmatpush.msra.mxu0 0.0
    %3259 = vmatpush.msra.mxu0 0.0
    %3260 = vmatpush.msra.mxu0 0.0
    %3261 = vmatpush.msra.mxu0 0.0
    %3262 = vmatpush.msra.mxu0 0.0
    %3263 = vmatpush.msra.mxu0 0.0
    %3264 = vmatpush.msra.mxu0 %v464
    %3265 = vmatpush.msra.mxu0 %v463
    %3266 = vmatpush.msra.mxu0 %v462
    %3267 = vmatpush.msra.mxu0 %v461
    %3268 = vmatmul.f32.gmra.mxu0 %v3250
    %v3269 = vpop.f32.mrf.mxu0
    %v3270 = vadd.f32 %v3246, %v3269
    %3271 = vdwg.mxu0
    %v3272 = vmul.f32 %v3270, 0.5
    %v3273 = vmul.f32 %v3270, 0.70710677
    %vm3274 = vcmp.ge.f32.partialorder %v3273, 0.0
    %v3275 = vsel %vm3274, 1.0, -1.0
    %v3276 = vand.u32 2147483647, %v3273
    %v3277 = vmul.f32 %v3276, 0.3275911
    %v3278 = vadd.f32 %v3277, 1.0
    %v3279 = vrcp.pop %v3278
    %v3280 = vmul.f32 %v3278, %v3279
    %v3281 = vsub.f32 1.0, %v3280
    %v3282 = vmul.f32 %v3279, %v3281
    %v3283 = vadd.f32 %v3279, %v3282
    %vm3284 = vweird.f32 %v3278
    %vm3285 = vweird.f32 %v3279
    %vm3286 = vmor %vm3284, %vm3285
    %v3287 = vsel %vm3286, %v3279, %v3283
    %v3288 = vand.u32 2147483647, %v3278
    %vm3289 = vcmp.eq.f32.partialorder %v3288, 8.507059e+37
    %v3290 = vand.u32 %v3278, 2147483648
    %v3291 = vor.u32 1.1754944e-38, %v3290
    %v3292 = vsel %vm3289, %v3291, %v3287
    %v3293 = vmul.f32 1.0, %v3292
    %v3294 = vmul.f32 %v3293, 1.0614054
    %v3295 = vadd.f32 %v3294, -1.4531521
    %v3296 = vmul.f32 %v3295, %v3293
    %v3297 = vadd.f32 %v3296, 1.4214138
    %v3298 = vmul.f32 %v3297, %v3293
    %v3299 = vadd.f32 %v3298, -0.28449672
    %v3300 = vmul.f32 %v3299, %v3293
    %v3301 = vadd.f32 %v3300, 0.2548296
    %v3302 = vmul.f32 %v3301, %v3293
    %v3303 = vsub.f32 0.0, %v3276
    %v3304 = vmul.f32 %v3303, %v3276
    %v3305 = vmul.f32 %v3304, 1.442695
    %v3306 = vpow.pop %v3305
    %v3307 = vmul.f32 %v3302, %v3306
    %v3308 = vsub.f32 1.0, %v3307
    %v3309 = vmul.f32 %v3275, %v3308
    %v3310 = vadd.f32 %v3309, 1.0
    %v3311 = vmul.f32 %v3272, %v3310
    %v3312 = vsel %vm540, %v3311, 0.0
    %v3313 = vrot.slane %v3312, 4
    %v3314 = vadd.f32 %v3312, %v3313
    %v3315 = vrot.slane %v3314, 2
    %v3316 = vadd.f32 %v3314, %v3315
    %v3317 = vrot.slane %v3316, 1
    %v3318 = vadd.f32 %v3316, %v3317
    %v3319 = vmul.f32 %v3318, %v554
    %v3320 = vsub.f32 %v3311, %v3319
    %v3321 = vmul.f32 %v3320, %v3320
    %v3322 = vsel %vm540, %v3321, 0.0
    %v3323 = vrot.slane %v3322, 4
    %v3324 = vadd.f32 %v3322, %v3323
    %v3325 = vrot.slane %v3324, 2
    %v3326 = vadd.f32 %v3324, %v3325
    %v3327 = vrot.slane %v3326, 1
    %v3328 = vadd.f32 %v3326, %v3327
    %v3329 = vmul.f32 %v3328, %v554
    %v3330 = vadd.f32 %v3329, 1e-05
    %v3331 = vrsqrt.pop %v3330
    %v3332 = vmul.f32 %v3331, %v3330
    %v3333 = vmul.f32 %v3332, %v3331
    %v3334 = vmul.f32 0.5, %v3333
    %v3335 = vsub.f32 1.5, %v3334
    %v3336 = vmul.f32 %v3331, %v3335
    %vm3337 = vweird.f32 %v3330
    %vm3338 = vweird.f32 %v3331
    %vm3339 = vmor %vm3337, %vm3338
    %v3340 = vsel %vm3339, %v3331, %v3336
    %v3341 = vmul.f32 %v3320, %v3340
    %v3343 = vperm.slane %v373, 0
    %v3345 = vmul.f32 %v3341, %v3343
    %v3347 = vperm.slane %v372, 0
    %v3349 = vadd.f32 %v3345, %v3347
    %v3351 = vperm.slane %v465, 0
    %v3354 = vsel %vm540, %v3349, 0
    %3356 = vmatpush.msra.mxu0 0.0
    %3357 = vmatpush.msra.mxu0 0.0
    %3358 = vmatpush.msra.mxu0 0.0
    %3359 = vmatpush.msra.mxu0 0.0
    %3360 = vmatpush.msra.mxu0 0.0
    %3361 = vmatpush.msra.mxu0 0.0
    %3362 = vmatpush.msra.mxu0 0.0
    %3363 = vmatpush.msra.mxu0 0.0
    %3364 = vmatpush.msra.mxu0 0.0
    %3365 = vmatpush.msra.mxu0 0.0
    %3366 = vmatpush.msra.mxu0 %v471
    %3367 = vmatpush.msra.mxu0 %v470
    %3368 = vmatpush.msra.mxu0 %v469
    %3369 = vmatpush.msra.mxu0 %v468
    %3370 = vmatpush.msra.mxu0 %v467
    %3371 = vmatpush.msra.mxu0 %v466
    %3372 = vmatmul.f32.gmra.mxu0 %v3354
    %v3373 = vpop.f32.mrf.mxu0
    %v3374 = vadd.f32 %v3351, %v3373
    %3375 = vdwg.mxu0
    %3376 = vst.msk [vmem:[#allocation28] sm:$0xff] %vm3248, %v3243
    %3377 = vst.msk [vmem:[#allocation29] sm:$0xff] %vm476, %v3374
    // Predicated region
    $region202: #{ae1_forward.1} parent=1 // pred_check
      _
    $region203: #{ae1_forward.1} parent=1 // pred_check_branch
      %3379 = sbr.rel (0) target = $region205
    $region204: #{ae1_forward.1} parent=1 // pred_region
      %3381 = vsyncadd [#allocation4], 0
      %s3383 = sshll.u32 [#allocation28], 4
      %s3384 = int_to_ptr.vmem [resolvable:$true] %s3383
      %s3385 = sshll.u32 %s69, 4
      %s3386 = int_to_ptr.hbm [resolvable:$true] %s3385
      %3388 = dma.vmem_to_hbm [thread:$0]  %s3384, 128, %s3386, [#allocation4]
    $region205: #{ae1_forward.1} parent=1 // pred_fallthru
      _
    // Predicated region
    $region206: #{ae1_forward.1} parent=1 // pred_check
      _
    $region207: #{ae1_forward.1} parent=1 // pred_check_branch
      %3390 = sbr.rel (0) target = $region209
    $region208: #{ae1_forward.1} parent=1 // pred_region
      %3392 = vsyncadd [#allocation30], 0
      %s3394 = sshll.u32 [#allocation29], 4
      %s3395 = int_to_ptr.vmem [resolvable:$true] %s3394
      %s3396 = sshll.u32 %s71, 4
      %s3397 = int_to_ptr.hbm [resolvable:$true] %s3396
      %3399 = dma.vmem_to_hbm [thread:$0]  %s3395, 128, %s3397, [#allocation30]
    $region209: #{ae1_forward.1} parent=1 // pred_fallthru
      _
    // Predicated region
    $region210: #{ae1_forward.1} parent=1 // pred_check
      _
    $region211: #{ae1_forward.1} parent=1 // pred_check_branch
      %3401 = sbr.rel (0) target = $region213
    $region212: #{ae1_forward.1} parent=1 // pred_region
      %3403 = dma.done [#allocation4], 128
    $region213: #{ae1_forward.1} parent=1 // pred_fallthru
      _
    // Predicated region
    $region214: #{ae1_forward.1} parent=1 // pred_check
      _
    $region215: #{ae1_forward.1} parent=1 // pred_check_branch
      %3405 = sbr.rel (0) target = $region217
    $region216: #{ae1_forward.1} parent=1 // pred_region
      %3407 = dma.done [#allocation30], 128
    $region217: #{ae1_forward.1} parent=1 // pred_fallthru
      _
    %3408 = vsyncpa [#allocation3], 1
    %3409 = vsyncpa [#allocation6], 1
    %3410 = vsyncpa [#allocation9], 1
    %3411 = vsyncpa [#allocation12], 1
    %3412 = vsyncpa [#allocation15], 1
    %3413 = vsyncpa [#allocation18], 1
    %3414 = vsyncpa [#allocation21], 1
    %3415 = vsyncpa [#allocation24], 1
    %3416 = vsyncpa [#allocation27], 1
    %3417 = vsyncpa [#allocation4], 1
    %3418 = vsyncpa [#allocation30], 1

</llo_original>
